<compile_context>
chip_gen: v6e
topology: v6e:2x2x1
jax: 0.10.0
libtpu: 0.0.40
codegen_flags: <defaults>
</compile_context>

<pallas_src>
import functools

import jax
import jax.numpy as jnp
from jax.experimental import pallas as pl
from jax.experimental.pallas import tpu as pltpu

# --- model hyper-parameters (small, consistent with the module) ---
D_MODEL = 32
N_HEAD = 4
DIM_FF = 64
NUM_LAYERS = 2
SEQ = 8
BATCH = 2
EPS = 1e-5  # PyTorch LayerNorm default


def _layer_norm(x, w, b):
    """PyTorch LayerNorm over the last dim (biased variance, eps inside rsqrt)."""
    mu = jnp.mean(x, axis=-1, keepdims=True)
    var = jnp.mean(jnp.square(x - mu), axis=-1, keepdims=True)
    return (x - mu) * jax.lax.rsqrt(var + EPS) * w + b


# -----------------------------------------------------------------------------
# Fused whole-network kernel
# -----------------------------------------------------------------------------
def make_encoder_kernel(num_layers, n_head, batch, has_norm):
    """Builds a kernel running `num_layers` encoder layers (+ optional final norm)."""

    def kernel(x_ref, wqkv_ref, bqkv_ref, wo_ref, w1_ref, b1_ref, w2_ref,
               vec_ref, o_ref):
        x = x_ref[...]                               # (N, D), N = S*B, row = s*B + b
        N, D = x.shape
        hd = D // n_head

        # Additive mask removing attention across different batch elements
        # (token rows are s-major, so batch id of row i is i % batch).
        # Computed once per kernel invocation (hoisted out of the layer loop).
        row = jax.lax.broadcasted_iota(jnp.int32, (N, N), 0)
        col = jax.lax.broadcasted_iota(jnp.int32, (N, N), 1)
        neg = jnp.where((row % batch) == (col % batch),
                        jnp.float32(0.0), jnp.float32(-1e30))   # (N, N)

        for li in range(num_layers):                 # static unrolled layer loop
            wqkv = wqkv_ref[li]                      # (D, 3D)  pre-transposed, Q pre-scaled
            bqkv = bqkv_ref[li]                      # (1, 3D)  Q part pre-scaled
            wo = wo_ref[li]                          # (D, D)
            w1 = w1_ref[li]                          # (D, FF)
            b1 = b1_ref[li]                          # (1, FF)
            w2 = w2_ref[li]                          # (FF, D)
            base = li * 6
            bo = vec_ref[base + 0:base + 1, :]       # (1, D)
            b2 = vec_ref[base + 1:base + 2, :]
            ln1w = vec_ref[base + 2:base + 3, :]
            ln1b = vec_ref[base + 3:base + 4, :]
            ln2w = vec_ref[base + 4:base + 5, :]
            ln2b = vec_ref[base + 5:base + 6, :]

            # --- fused QKV projection: one MXU matmul ---
            qkv = jnp.dot(x, wqkv, preferred_element_type=jnp.float32) + bqkv  # (N, 3D)

            # --- gather heads into a leading batch dim: (H, N, hd) (static slices) ---
            q3 = jnp.stack([qkv[:, h * hd:(h + 1) * hd]
                            for h in range(n_head)], axis=0)
            k3 = jnp.stack([qkv[:, D + h * hd:D + (h + 1) * hd]
                            for h in range(n_head)], axis=0)
            v3 = jnp.stack([qkv[:, 2 * D + h * hd:2 * D + (h + 1) * hd]
                            for h in range(n_head)], axis=0)

            # --- all (batch, head) attention in two head-batched matmuls ---
            # (1/sqrt(hd) already folded into wq/bq at pack time)
            s = jnp.einsum('hqd,hkd->hqk', q3, k3,
                           preferred_element_type=jnp.float32) + neg
            s = s - jnp.max(s, axis=-1, keepdims=True)
            p = jnp.exp(s)
            p = p * pl.reciprocal(jnp.sum(p, axis=-1, keepdims=True), approx=True)
            ctx3 = jnp.einsum('hqk,hkd->hqd', p, v3,
                              preferred_element_type=jnp.float32)   # (H, N, hd)
            ctx = jnp.concatenate([ctx3[h] for h in range(n_head)], axis=-1)  # (N, D)

            # --- out-proj + residual + LayerNorm 1 (dropout = identity) ---
            attn = jnp.dot(ctx, wo, preferred_element_type=jnp.float32) + bo
            x1 = _layer_norm(x + attn, ln1w, ln1b)

            # --- FFN: Linear -> ReLU -> Linear, residual + LayerNorm 2 ---
            h1 = jnp.maximum(
                jnp.dot(x1, w1, preferred_element_type=jnp.float32) + b1, 0.0)
            ff = jnp.dot(h1, w2, preferred_element_type=jnp.float32) + b2
            x = _layer_norm(x1 + ff, ln2w, ln2b)

        if has_norm:
            fb = num_layers * 6
            x = _layer_norm(x, vec_ref[fb:fb + 1, :], vec_ref[fb + 1:fb + 2, :])

        o_ref[...] = x

    return kernel


def _vmem():
    return pl.BlockSpec(memory_space=pltpu.MemorySpace.VMEM)


@functools.partial(jax.jit, static_argnames=('n_head', 'has_norm'))
def transformer_encoder(src_sbd, packed, *, n_head=N_HEAD, has_norm=True):
    """src_sbd: (S, B, D) like PyTorch TransformerEncoder. Returns (S, B, D)."""
    S, B, D = src_sbd.shape
    num_layers = packed['wqkv'].shape[0]
    x2 = src_sbd.reshape(S * B, D)                  # free: row = s*B + b
    kernel = make_encoder_kernel(num_layers, n_head, B, has_norm)
    out = pl.pallas_call(
        kernel,
        out_shape=jax.ShapeDtypeStruct((S * B, D), src_sbd.dtype),
        in_specs=[_vmem()] * 8,
        out_specs=_vmem(),
    )(x2, packed['wqkv'], packed['bqkv'], packed['wo'],
      packed['w1'], packed['b1'], packed['w2'], packed['vecs'])
    return out.reshape(S, B, D)


# -----------------------------------------------------------------------------
# Parameters: PyTorch-shaped init + packing into kernel slabs
# -----------------------------------------------------------------------------
def init_params(key):
    """Deterministic synthetic params with PyTorch TransformerEncoderLayer shapes."""
    def xav(k, shape):
        fan_out, fan_in = shape
        lim = jnp.sqrt(6.0 / (fan_in + fan_out))
        return jax.random.uniform(k, shape, jnp.float32, -lim, lim)

    def small(k, shape):
        return 0.02 * jax.random.normal(k, shape, jnp.float32)

    layers = []
    for li in range(NUM_LAYERS):
        ks = jax.random.split(jax.random.fold_in(key, li), 10)
        layers.append({
            # MultiheadAttention packed in_proj: rows ordered [Wq; Wk; Wv]
            'in_proj_weight': xav(ks[0], (3 * D_MODEL, D_MODEL)),
            'in_proj_bias': small(ks[1], (3 * D_MODEL,)),
            'out_proj_weight': xav(ks[2], (D_MODEL, D_MODEL)),
            'out_proj_bias': small(ks[3], (D_MODEL,)),
            'linear1_weight': xav(ks[4], (DIM_FF, D_MODEL)),
            'linear1_bias': small(ks[5], (DIM_FF,)),
            'linear2_weight': xav(ks[6], (D_MODEL, DIM_FF)),
            'linear2_bias': small(ks[7], (D_MODEL,)),
            'ln1_weight': jnp.ones((D_MODEL,), jnp.float32),
            'ln1_bias': jnp.zeros((D_MODEL,), jnp.float32),
            'ln2_weight': jnp.ones((D_MODEL,), jnp.float32),
            'ln2_bias': jnp.zeros((D_MODEL,), jnp.float32),
        })
    norm = {'weight': jnp.ones((D_MODEL,), jnp.float32),
            'bias': jnp.zeros((D_MODEL,), jnp.float32)}
    return layers, norm


def pack_params(layers, norm, n_head=N_HEAD):
    """Stack per-layer weights (pre-transposed so the kernel does x @ W), fold the
    1/sqrt(head_dim) attention scale into the Q projection, and pack all width-D
    vector params into one slab."""
    D = layers[0]['in_proj_weight'].shape[1]
    scale = jnp.float32(1.0 / ((D // n_head) ** 0.5))

    wqkv_list, bqkv_list = [], []
    for l in layers:
        w = l['in_proj_weight'].T          # (D, 3D): columns [Q | K | V]
        b = l['in_proj_bias'][None, :]     # (1, 3D)
        w = w.at[:, :D].multiply(scale)    # fold attention scale into Q (done once)
        b = b.at[:, :D].multiply(scale)
        wqkv_list.append(w)
        bqkv_list.append(b)
    wqkv = jnp.stack(wqkv_list)                                      # (L, D, 3D)
    bqkv = jnp.stack(bqkv_list)                                      # (L, 1, 3D)
    wo = jnp.stack([l['out_proj_weight'].T for l in layers])         # (L, D, D)
    w1 = jnp.stack([l['linear1_weight'].T for l in layers])          # (L, D, FF)
    b1 = jnp.stack([l['linear1_bias'][None, :] for l in layers])     # (L, 1, FF)
    w2 = jnp.stack([l['linear2_weight'].T for l in layers])          # (L, FF, D)
    rows = []
    for l in layers:
        rows += [l['out_proj_bias'], l['linear2_bias'],
                 l['ln1_weight'], l['ln1_bias'], l['ln2_weight'], l['ln2_bias']]
    if norm is not None:
        rows += [norm['weight'], norm['bias']]
    vecs = jnp.stack(rows)                                           # (L*6 + 2, D)
    return dict(wqkv=wqkv, bqkv=bqkv, wo=wo, w1=w1, b1=b1, w2=w2, vecs=vecs)


# -----------------------------------------------------------------------------
# Pure-JAX reference (PyTorch eval semantics) for correctness checking
# -----------------------------------------------------------------------------
def reference_forward(src, layers, norm, n_head=N_HEAD):
    x = src                                          # (S, B, D)
    S, B, D = x.shape
    hd = D // n_head
    for p in layers:
        W, bias = p['in_proj_weight'], p['in_proj_bias']
        q = x @ W[:D].T + bias[:D]
        k = x @ W[D:2 * D].T + bias[D:2 * D]
        v = x @ W[2 * D:].T + bias[2 * D:]

        def split(t):
            return t.reshape(S, B, n_head, hd).transpose(1, 2, 0, 3)  # (B,H,S,hd)

        qh, kh, vh = split(q), split(k), split(v)
        scores = (qh @ jnp.swapaxes(kh, -1, -2)) / jnp.sqrt(jnp.float32(hd))
        pr = jax.nn.softmax(scores, axis=-1)
        ctx = (pr @ vh).transpose(2, 0, 1, 3).reshape(S, B, D)
        attn = ctx @ p['out_proj_weight'].T + p['out_proj_bias']
        x1 = _layer_norm(x + attn, p['ln1_weight'], p['ln1_bias'])
        h1 = jax.nn.relu(x1 @ p['linear1_weight'].T + p['linear1_bias'])
        ff = h1 @ p['linear2_weight'].T + p['linear2_bias']
        x = _layer_norm(x1 + ff, p['ln2_weight'], p['ln2_bias'])
    if norm is not None:
        x = _layer_norm(x, norm['weight'], norm['bias'])
    return x


if __name__ == "__main__":
    key = jax.random.PRNGKey(0)
    k_src, k_par = jax.random.split(key)
    # PyTorch convention: src is (seq, batch, d_model)
    src = jax.random.normal(k_src, (SEQ, BATCH, D_MODEL), jnp.float32)
    layer_params, norm_params = init_params(k_par)
    packed = pack_params(layer_params, norm_params)

    out = transformer_encoder(src, packed)
    jax.block_until_ready(out)

    assert out.shape == (SEQ, BATCH, D_MODEL)
    assert bool(jnp.all(jnp.isfinite(out)))

    ref = reference_forward(src, layer_params, norm_params)
    max_err = float(jnp.max(jnp.abs(out - ref)))
    assert max_err < 2e-2, f"mismatch vs reference: max abs err {max_err}"

    print("KERNEL_OK")
</pallas_src>

<mosaic_0001>
module attributes {stable_mosaic.version = 11 : i64} {
  func.func @kernel(%arg0: memref<16x32xf32, #tpu.memory_space<vmem>>, %arg1: memref<2x32x96xf32, #tpu.memory_space<vmem>>, %arg2: memref<2x1x96xf32, #tpu.memory_space<vmem>>, %arg3: memref<2x32x32xf32, #tpu.memory_space<vmem>>, %arg4: memref<2x32x64xf32, #tpu.memory_space<vmem>>, %arg5: memref<2x1x64xf32, #tpu.memory_space<vmem>>, %arg6: memref<2x64x32xf32, #tpu.memory_space<vmem>>, %arg7: memref<14x32xf32, #tpu.memory_space<vmem>>, %arg8: memref<16x32xf32, #tpu.memory_space<vmem>>) attributes {dimension_semantics = [], scalar_prefetch = 0 : i64, scratch_operands = 0 : i64, tpu.core_type = #tpu.core_type<tc>} {
    %c0 = arith.constant 0 : index
    %c0_0 = arith.constant 0 : index
    %0 = vector.load %arg0[%c0, %c0_0] : memref<16x32xf32, #tpu.memory_space<vmem>>, vector<16x32xf32>
    %1 = tpu.iota {dimensions = array<i32: 0>} : vector<16x16xi32>
    %2 = tpu.iota {dimensions = array<i32: 1>} : vector<16x16xi32>
    %c2_i32 = arith.constant 2 : i32
    %c0_i32 = arith.constant 0 : i32
    %3 = arith.cmpi eq, %c2_i32, %c0_i32 : i32
    %c1_i32 = arith.constant 1 : i32
    %4 = arith.select %3, %c1_i32, %c2_i32 : i32
    %5 = vector.broadcast %4 : i32 to vector<16x16xi32>
    %6 = arith.remsi %1, %5 : vector<16x16xi32>
    %c0_i32_1 = arith.constant 0 : i32
    %7 = vector.broadcast %c0_i32_1 : i32 to vector<16x16xi32>
    %8 = arith.cmpi ne, %6, %7 : vector<16x16xi32>
    %c0_i32_2 = arith.constant 0 : i32
    %9 = vector.broadcast %c0_i32_2 : i32 to vector<16x16xi32>
    %10 = arith.cmpi slt, %6, %9 : vector<16x16xi32>
    %c0_i32_3 = arith.constant 0 : i32
    %11 = arith.cmpi slt, %4, %c0_i32_3 : i32
    %12 = vector.broadcast %11 : i1 to vector<16x16xi1>
    %13 = vector.broadcast %12 : vector<16x16xi1> to vector<16x16xi1>
    %14 = arith.xori %10, %13 : vector<16x16xi1>
    %15 = arith.andi %14, %8 : vector<16x16xi1>
    %16 = vector.broadcast %4 : i32 to vector<16x16xi32>
    %17 = arith.addi %6, %16 : vector<16x16xi32>
    %18 = arith.select %15, %17, %6 : vector<16x16xi1>, vector<16x16xi32>
    %c2_i32_4 = arith.constant 2 : i32
    %c0_i32_5 = arith.constant 0 : i32
    %19 = arith.cmpi eq, %c2_i32_4, %c0_i32_5 : i32
    %c1_i32_6 = arith.constant 1 : i32
    %20 = arith.select %19, %c1_i32_6, %c2_i32_4 : i32
    %21 = vector.broadcast %20 : i32 to vector<16x16xi32>
    %22 = arith.remsi %2, %21 : vector<16x16xi32>
    %c0_i32_7 = arith.constant 0 : i32
    %23 = vector.broadcast %c0_i32_7 : i32 to vector<16x16xi32>
    %24 = arith.cmpi ne, %22, %23 : vector<16x16xi32>
    %c0_i32_8 = arith.constant 0 : i32
    %25 = vector.broadcast %c0_i32_8 : i32 to vector<16x16xi32>
    %26 = arith.cmpi slt, %22, %25 : vector<16x16xi32>
    %c0_i32_9 = arith.constant 0 : i32
    %27 = arith.cmpi slt, %20, %c0_i32_9 : i32
    %28 = vector.broadcast %27 : i1 to vector<16x16xi1>
    %29 = vector.broadcast %28 : vector<16x16xi1> to vector<16x16xi1>
    %30 = arith.xori %26, %29 : vector<16x16xi1>
    %31 = arith.andi %30, %24 : vector<16x16xi1>
    %32 = vector.broadcast %20 : i32 to vector<16x16xi32>
    %33 = arith.addi %22, %32 : vector<16x16xi32>
    %34 = arith.select %31, %33, %22 : vector<16x16xi1>, vector<16x16xi32>
    %35 = arith.cmpi eq, %18, %34 : vector<16x16xi32>
    %cst = arith.constant 0.000000e+00 : f32
    %cst_10 = arith.constant -1.000000e+30 : f32
    %36 = vector.broadcast %cst : f32 to vector<16x16xf32>
    %37 = vector.broadcast %cst_10 : f32 to vector<16x16xf32>
    %38 = arith.select %35, %36, %37 : vector<16x16xi1>, vector<16x16xf32>
    %c0_11 = arith.constant 0 : index
    %c0_12 = arith.constant 0 : index
    %c0_13 = arith.constant 0 : index
    %39 = vector.load %arg1[%c0_11, %c0_12, %c0_13] : memref<2x32x96xf32, #tpu.memory_space<vmem>>, vector<1x32x96xf32>
    %40 = vector.shape_cast %39 : vector<1x32x96xf32> to vector<32x96xf32>
    %c0_14 = arith.constant 0 : index
    %c0_15 = arith.constant 0 : index
    %c0_16 = arith.constant 0 : index
    %41 = vector.load %arg2[%c0_14, %c0_15, %c0_16] : memref<2x1x96xf32, #tpu.memory_space<vmem>>, vector<1x1x96xf32>
    %42 = vector.shape_cast %41 : vector<1x1x96xf32> to vector<1x96xf32>
    %c0_17 = arith.constant 0 : index
    %c0_18 = arith.constant 0 : index
    %c0_19 = arith.constant 0 : index
    %43 = vector.load %arg3[%c0_17, %c0_18, %c0_19] : memref<2x32x32xf32, #tpu.memory_space<vmem>>, vector<1x32x32xf32>
    %44 = vector.shape_cast %43 : vector<1x32x32xf32> to vector<32x32xf32>
    %c0_20 = arith.constant 0 : index
    %c0_21 = arith.constant 0 : index
    %c0_22 = arith.constant 0 : index
    %45 = vector.load %arg4[%c0_20, %c0_21, %c0_22] : memref<2x32x64xf32, #tpu.memory_space<vmem>>, vector<1x32x64xf32>
    %46 = vector.shape_cast %45 : vector<1x32x64xf32> to vector<32x64xf32>
    %c0_23 = arith.constant 0 : index
    %c0_24 = arith.constant 0 : index
    %c0_25 = arith.constant 0 : index
    %47 = vector.load %arg5[%c0_23, %c0_24, %c0_25] : memref<2x1x64xf32, #tpu.memory_space<vmem>>, vector<1x1x64xf32>
    %48 = vector.shape_cast %47 : vector<1x1x64xf32> to vector<1x64xf32>
    %c0_26 = arith.constant 0 : index
    %c0_27 = arith.constant 0 : index
    %c0_28 = arith.constant 0 : index
    %49 = vector.load %arg6[%c0_26, %c0_27, %c0_28] : memref<2x64x32xf32, #tpu.memory_space<vmem>>, vector<1x64x32xf32>
    %50 = vector.shape_cast %49 : vector<1x64x32xf32> to vector<64x32xf32>
    %c0_29 = arith.constant 0 : index
    %c0_30 = arith.constant 0 : index
    %51 = vector.load %arg7[%c0_29, %c0_30] : memref<14x32xf32, #tpu.memory_space<vmem>>, vector<1x32xf32>
    %c1 = arith.constant 1 : index
    %c0_31 = arith.constant 0 : index
    %52 = vector.load %arg7[%c1, %c0_31] : memref<14x32xf32, #tpu.memory_space<vmem>>, vector<1x32xf32>
    %c2 = arith.constant 2 : index
    %c0_32 = arith.constant 0 : index
    %53 = vector.load %arg7[%c2, %c0_32] : memref<14x32xf32, #tpu.memory_space<vmem>>, vector<1x32xf32>
    %c3 = arith.constant 3 : index
    %c0_33 = arith.constant 0 : index
    %54 = vector.load %arg7[%c3, %c0_33] : memref<14x32xf32, #tpu.memory_space<vmem>>, vector<1x32xf32>
    %c4 = arith.constant 4 : index
    %c0_34 = arith.constant 0 : index
    %55 = vector.load %arg7[%c4, %c0_34] : memref<14x32xf32, #tpu.memory_space<vmem>>, vector<1x32xf32>
    %c5 = arith.constant 5 : index
    %c0_35 = arith.constant 0 : index
    %56 = vector.load %arg7[%c5, %c0_35] : memref<14x32xf32, #tpu.memory_space<vmem>>, vector<1x32xf32>
    %cst_36 = arith.constant dense<0.000000e+00> : vector<16x96xf32>
    %57 = tpu.matmul %0, %40, %cst_36 {dimension_numbers = #tpu.dot_dimension_numbers<[1], [0], [0], [1], [0, 0, 1, 1], [], []>} : vector<16x32xf32>, vector<32x96xf32>, vector<16x96xf32> -> vector<16x96xf32>
    %58 = vector.broadcast %42 : vector<1x96xf32> to vector<16x96xf32>
    %59 = arith.addf %57, %58 : vector<16x96xf32>
    %60 = vector.extract_strided_slice %59 {offsets = [0, 0], sizes = [16, 8], strides = [1, 1]} : vector<16x96xf32> to vector<16x8xf32>
    %61 = vector.extract_strided_slice %59 {offsets = [0, 8], sizes = [16, 8], strides = [1, 1]} : vector<16x96xf32> to vector<16x8xf32>
    %62 = vector.extract_strided_slice %59 {offsets = [0, 16], sizes = [16, 8], strides = [1, 1]} : vector<16x96xf32> to vector<16x8xf32>
    %63 = vector.extract_strided_slice %59 {offsets = [0, 24], sizes = [16, 8], strides = [1, 1]} : vector<16x96xf32> to vector<16x8xf32>
    %64 = vector.shape_cast %60 : vector<16x8xf32> to vector<1x16x8xf32>
    %65 = vector.shape_cast %61 : vector<16x8xf32> to vector<1x16x8xf32>
    %66 = vector.shape_cast %62 : vector<16x8xf32> to vector<1x16x8xf32>
    %67 = vector.shape_cast %63 : vector<16x8xf32> to vector<1x16x8xf32>
    %68 = tpu.concatenate %64, %65, %66, %67 in 0 : vector<1x16x8xf32>, vector<1x16x8xf32>, vector<1x16x8xf32>, vector<1x16x8xf32> -> vector<4x16x8xf32>
    %69 = vector.extract_strided_slice %59 {offsets = [0, 32], sizes = [16, 8], strides = [1, 1]} : vector<16x96xf32> to vector<16x8xf32>
    %70 = vector.extract_strided_slice %59 {offsets = [0, 40], sizes = [16, 8], strides = [1, 1]} : vector<16x96xf32> to vector<16x8xf32>
    %71 = vector.extract_strided_slice %59 {offsets = [0, 48], sizes = [16, 8], strides = [1, 1]} : vector<16x96xf32> to vector<16x8xf32>
    %72 = vector.extract_strided_slice %59 {offsets = [0, 56], sizes = [16, 8], strides = [1, 1]} : vector<16x96xf32> to vector<16x8xf32>
    %73 = vector.shape_cast %69 : vector<16x8xf32> to vector<1x16x8xf32>
    %74 = vector.shape_cast %70 : vector<16x8xf32> to vector<1x16x8xf32>
    %75 = vector.shape_cast %71 : vector<16x8xf32> to vector<1x16x8xf32>
    %76 = vector.shape_cast %72 : vector<16x8xf32> to vector<1x16x8xf32>
    %77 = tpu.concatenate %73, %74, %75, %76 in 0 : vector<1x16x8xf32>, vector<1x16x8xf32>, vector<1x16x8xf32>, vector<1x16x8xf32> -> vector<4x16x8xf32>
    %78 = vector.extract_strided_slice %59 {offsets = [0, 64], sizes = [16, 8], strides = [1, 1]} : vector<16x96xf32> to vector<16x8xf32>
    %79 = vector.extract_strided_slice %59 {offsets = [0, 72], sizes = [16, 8], strides = [1, 1]} : vector<16x96xf32> to vector<16x8xf32>
    %80 = vector.extract_strided_slice %59 {offsets = [0, 80], sizes = [16, 8], strides = [1, 1]} : vector<16x96xf32> to vector<16x8xf32>
    %81 = vector.extract_strided_slice %59 {offsets = [0, 88], sizes = [16, 8], strides = [1, 1]} : vector<16x96xf32> to vector<16x8xf32>
    %82 = vector.shape_cast %78 : vector<16x8xf32> to vector<1x16x8xf32>
    %83 = vector.shape_cast %79 : vector<16x8xf32> to vector<1x16x8xf32>
    %84 = vector.shape_cast %80 : vector<16x8xf32> to vector<1x16x8xf32>
    %85 = vector.shape_cast %81 : vector<16x8xf32> to vector<1x16x8xf32>
    %86 = tpu.concatenate %82, %83, %84, %85 in 0 : vector<1x16x8xf32>, vector<1x16x8xf32>, vector<1x16x8xf32>, vector<1x16x8xf32> -> vector<4x16x8xf32>
    "tpu.trace_start"() <{level = 10 : i32, message = "hqd,hkd->hqk"}> : () -> ()
    %cst_37 = arith.constant dense<0.000000e+00> : vector<4x16x16xf32>
    %87 = tpu.matmul %68, %77, %cst_37 {dimension_numbers = #tpu.dot_dimension_numbers<[2], [2], [1], [1], [0, 0, 0, 1, 1, 1], [0], [0]>} : vector<4x16x8xf32>, vector<4x16x8xf32>, vector<4x16x16xf32> -> vector<4x16x16xf32>
    "tpu.trace_stop"() : () -> ()
    %88 = vector.shape_cast %38 : vector<16x16xf32> to vector<1x16x16xf32>
    %89 = vector.broadcast %88 : vector<1x16x16xf32> to vector<4x16x16xf32>
    %90 = arith.addf %87, %89 : vector<4x16x16xf32>
    %cst_38 = arith.constant dense<0xFF800000> : vector<4x16xf32>
    %91 = vector.multi_reduction <maximumf>, %90, %cst_38 [2] : vector<4x16x16xf32> to vector<4x16xf32>
    %92 = vector.shape_cast %91 : vector<4x16xf32> to vector<4x16x1xf32>
    %93 = vector.broadcast %92 : vector<4x16x1xf32> to vector<4x16x16xf32>
    %94 = arith.subf %90, %93 : vector<4x16x16xf32>
    %95 = math.exp %94 : vector<4x16x16xf32>
    %cst_39 = arith.constant dense<0.000000e+00> : vector<4x16xf32>
    %96 = vector.multi_reduction <add>, %95, %cst_39 [2] : vector<4x16x16xf32> to vector<4x16xf32>
    %97 = vector.shape_cast %96 : vector<4x16xf32> to vector<4x16x1xf32>
    %98 = tpu.reciprocal %97 {approx = true} : vector<4x16x1xf32> -> vector<4x16x1xf32>
    %99 = vector.broadcast %98 : vector<4x16x1xf32> to vector<4x16x16xf32>
    %100 = arith.mulf %95, %99 : vector<4x16x16xf32>
    "tpu.trace_start"() <{level = 10 : i32, message = "hqk,hkd->hqd"}> : () -> ()
    %cst_40 = arith.constant dense<0.000000e+00> : vector<4x16x8xf32>
    %101 = tpu.matmul %100, %86, %cst_40 {dimension_numbers = #tpu.dot_dimension_numbers<[2], [1], [1], [2], [0, 0, 0, 1, 1, 2], [0], [0]>} : vector<4x16x16xf32>, vector<4x16x8xf32>, vector<4x16x8xf32> -> vector<4x16x8xf32>
    "tpu.trace_stop"() : () -> ()
    %102 = vector.extract_strided_slice %101 {offsets = [0, 0, 0], sizes = [1, 16, 8], strides = [1, 1, 1]} : vector<4x16x8xf32> to vector<1x16x8xf32>
    %103 = vector.shape_cast %102 : vector<1x16x8xf32> to vector<16x8xf32>
    %104 = vector.extract_strided_slice %101 {offsets = [1, 0, 0], sizes = [1, 16, 8], strides = [1, 1, 1]} : vector<4x16x8xf32> to vector<1x16x8xf32>
    %105 = vector.shape_cast %104 : vector<1x16x8xf32> to vector<16x8xf32>
    %106 = vector.extract_strided_slice %101 {offsets = [2, 0, 0], sizes = [1, 16, 8], strides = [1, 1, 1]} : vector<4x16x8xf32> to vector<1x16x8xf32>
    %107 = vector.shape_cast %106 : vector<1x16x8xf32> to vector<16x8xf32>
    %108 = vector.extract_strided_slice %101 {offsets = [3, 0, 0], sizes = [1, 16, 8], strides = [1, 1, 1]} : vector<4x16x8xf32> to vector<1x16x8xf32>
    %109 = vector.shape_cast %108 : vector<1x16x8xf32> to vector<16x8xf32>
    %110 = tpu.concatenate %103, %105, %107, %109 in 1 : vector<16x8xf32>, vector<16x8xf32>, vector<16x8xf32>, vector<16x8xf32> -> vector<16x32xf32>
    %cst_41 = arith.constant dense<0.000000e+00> : vector<16x32xf32>
    %111 = tpu.matmul %110, %44, %cst_41 {dimension_numbers = #tpu.dot_dimension_numbers<[1], [0], [0], [1], [0, 0, 1, 1], [], []>} : vector<16x32xf32>, vector<32x32xf32>, vector<16x32xf32> -> vector<16x32xf32>
    %112 = vector.broadcast %51 : vector<1x32xf32> to vector<16x32xf32>
    %113 = arith.addf %111, %112 : vector<16x32xf32>
    %114 = arith.addf %0, %113 : vector<16x32xf32>
    %cst_42 = arith.constant dense<0.000000e+00> : vector<16xf32>
    %115 = vector.multi_reduction <add>, %114, %cst_42 [1] : vector<16x32xf32> to vector<16xf32>
    %116 = vector.shape_cast %115 : vector<16xf32> to vector<16x1xf32>
    %cst_43 = arith.constant 3.200000e+01 : f32
    %117 = vector.broadcast %cst_43 : f32 to vector<16x1xf32>
    %118 = arith.divf %116, %117 : vector<16x1xf32>
    %119 = vector.broadcast %118 : vector<16x1xf32> to vector<16x32xf32>
    %120 = arith.subf %114, %119 : vector<16x32xf32>
    %121 = arith.mulf %120, %120 : vector<16x32xf32>
    %cst_44 = arith.constant dense<0.000000e+00> : vector<16xf32>
    %122 = vector.multi_reduction <add>, %121, %cst_44 [1] : vector<16x32xf32> to vector<16xf32>
    %123 = vector.shape_cast %122 : vector<16xf32> to vector<16x1xf32>
    %cst_45 = arith.constant 3.200000e+01 : f32
    %124 = vector.broadcast %cst_45 : f32 to vector<16x1xf32>
    %125 = arith.divf %123, %124 : vector<16x1xf32>
    %126 = vector.broadcast %118 : vector<16x1xf32> to vector<16x32xf32>
    %127 = arith.subf %114, %126 : vector<16x32xf32>
    %cst_46 = arith.constant 9.99999974E-6 : f32
    %128 = vector.broadcast %cst_46 : f32 to vector<16x1xf32>
    %129 = arith.addf %125, %128 : vector<16x1xf32>
    %130 = math.rsqrt %129 : vector<16x1xf32>
    %131 = vector.broadcast %130 : vector<16x1xf32> to vector<16x32xf32>
    %132 = arith.mulf %127, %131 : vector<16x32xf32>
    %133 = vector.broadcast %53 : vector<1x32xf32> to vector<16x32xf32>
    %134 = arith.mulf %132, %133 : vector<16x32xf32>
    %135 = vector.broadcast %54 : vector<1x32xf32> to vector<16x32xf32>
    %136 = arith.addf %134, %135 : vector<16x32xf32>
    %cst_47 = arith.constant dense<0.000000e+00> : vector<16x64xf32>
    %137 = tpu.matmul %136, %46, %cst_47 {dimension_numbers = #tpu.dot_dimension_numbers<[1], [0], [0], [1], [0, 0, 1, 1], [], []>} : vector<16x32xf32>, vector<32x64xf32>, vector<16x64xf32> -> vector<16x64xf32>
    %138 = vector.broadcast %48 : vector<1x64xf32> to vector<16x64xf32>
    %139 = arith.addf %137, %138 : vector<16x64xf32>
    %cst_48 = arith.constant 0.000000e+00 : f32
    %140 = vector.broadcast %cst_48 : f32 to vector<16x64xf32>
    %141 = arith.maximumf %139, %140 : vector<16x64xf32>
    %cst_49 = arith.constant dense<0.000000e+00> : vector<16x32xf32>
    %142 = tpu.matmul %141, %50, %cst_49 {dimension_numbers = #tpu.dot_dimension_numbers<[1], [0], [0], [1], [0, 0, 1, 1], [], []>} : vector<16x64xf32>, vector<64x32xf32>, vector<16x32xf32> -> vector<16x32xf32>
    %143 = vector.broadcast %52 : vector<1x32xf32> to vector<16x32xf32>
    %144 = arith.addf %142, %143 : vector<16x32xf32>
    %145 = arith.addf %136, %144 : vector<16x32xf32>
    %cst_50 = arith.constant dense<0.000000e+00> : vector<16xf32>
    %146 = vector.multi_reduction <add>, %145, %cst_50 [1] : vector<16x32xf32> to vector<16xf32>
    %147 = vector.shape_cast %146 : vector<16xf32> to vector<16x1xf32>
    %cst_51 = arith.constant 3.200000e+01 : f32
    %148 = vector.broadcast %cst_51 : f32 to vector<16x1xf32>
    %149 = arith.divf %147, %148 : vector<16x1xf32>
    %150 = vector.broadcast %149 : vector<16x1xf32> to vector<16x32xf32>
    %151 = arith.subf %145, %150 : vector<16x32xf32>
    %152 = arith.mulf %151, %151 : vector<16x32xf32>
    %cst_52 = arith.constant dense<0.000000e+00> : vector<16xf32>
    %153 = vector.multi_reduction <add>, %152, %cst_52 [1] : vector<16x32xf32> to vector<16xf32>
    %154 = vector.shape_cast %153 : vector<16xf32> to vector<16x1xf32>
    %cst_53 = arith.constant 3.200000e+01 : f32
    %155 = vector.broadcast %cst_53 : f32 to vector<16x1xf32>
    %156 = arith.divf %154, %155 : vector<16x1xf32>
    %157 = vector.broadcast %149 : vector<16x1xf32> to vector<16x32xf32>
    %158 = arith.subf %145, %157 : vector<16x32xf32>
    %cst_54 = arith.constant 9.99999974E-6 : f32
    %159 = vector.broadcast %cst_54 : f32 to vector<16x1xf32>
    %160 = arith.addf %156, %159 : vector<16x1xf32>
    %161 = math.rsqrt %160 : vector<16x1xf32>
    %162 = vector.broadcast %161 : vector<16x1xf32> to vector<16x32xf32>
    %163 = arith.mulf %158, %162 : vector<16x32xf32>
    %164 = vector.broadcast %55 : vector<1x32xf32> to vector<16x32xf32>
    %165 = arith.mulf %163, %164 : vector<16x32xf32>
    %166 = vector.broadcast %56 : vector<1x32xf32> to vector<16x32xf32>
    %167 = arith.addf %165, %166 : vector<16x32xf32>
    %c1_55 = arith.constant 1 : index
    %c0_56 = arith.constant 0 : index
    %c0_57 = arith.constant 0 : index
    %168 = vector.load %arg1[%c1_55, %c0_56, %c0_57] : memref<2x32x96xf32, #tpu.memory_space<vmem>>, vector<1x32x96xf32>
    %169 = vector.shape_cast %168 : vector<1x32x96xf32> to vector<32x96xf32>
    %c1_58 = arith.constant 1 : index
    %c0_59 = arith.constant 0 : index
    %c0_60 = arith.constant 0 : index
    %170 = vector.load %arg2[%c1_58, %c0_59, %c0_60] : memref<2x1x96xf32, #tpu.memory_space<vmem>>, vector<1x1x96xf32>
    %171 = vector.shape_cast %170 : vector<1x1x96xf32> to vector<1x96xf32>
    %c1_61 = arith.constant 1 : index
    %c0_62 = arith.constant 0 : index
    %c0_63 = arith.constant 0 : index
    %172 = vector.load %arg3[%c1_61, %c0_62, %c0_63] : memref<2x32x32xf32, #tpu.memory_space<vmem>>, vector<1x32x32xf32>
    %173 = vector.shape_cast %172 : vector<1x32x32xf32> to vector<32x32xf32>
    %c1_64 = arith.constant 1 : index
    %c0_65 = arith.constant 0 : index
    %c0_66 = arith.constant 0 : index
    %174 = vector.load %arg4[%c1_64, %c0_65, %c0_66] : memref<2x32x64xf32, #tpu.memory_space<vmem>>, vector<1x32x64xf32>
    %175 = vector.shape_cast %174 : vector<1x32x64xf32> to vector<32x64xf32>
    %c1_67 = arith.constant 1 : index
    %c0_68 = arith.constant 0 : index
    %c0_69 = arith.constant 0 : index
    %176 = vector.load %arg5[%c1_67, %c0_68, %c0_69] : memref<2x1x64xf32, #tpu.memory_space<vmem>>, vector<1x1x64xf32>
    %177 = vector.shape_cast %176 : vector<1x1x64xf32> to vector<1x64xf32>
    %c1_70 = arith.constant 1 : index
    %c0_71 = arith.constant 0 : index
    %c0_72 = arith.constant 0 : index
    %178 = vector.load %arg6[%c1_70, %c0_71, %c0_72] : memref<2x64x32xf32, #tpu.memory_space<vmem>>, vector<1x64x32xf32>
    %179 = vector.shape_cast %178 : vector<1x64x32xf32> to vector<64x32xf32>
    %c6 = arith.constant 6 : index
    %c0_73 = arith.constant 0 : index
    %180 = vector.load %arg7[%c6, %c0_73] : memref<14x32xf32, #tpu.memory_space<vmem>>, vector<1x32xf32>
    %c7 = arith.constant 7 : index
    %c0_74 = arith.constant 0 : index
    %181 = vector.load %arg7[%c7, %c0_74] : memref<14x32xf32, #tpu.memory_space<vmem>>, vector<1x32xf32>
    %c8 = arith.constant 8 : index
    %c0_75 = arith.constant 0 : index
    %182 = vector.load %arg7[%c8, %c0_75] : memref<14x32xf32, #tpu.memory_space<vmem>>, vector<1x32xf32>
    %c9 = arith.constant 9 : index
    %c0_76 = arith.constant 0 : index
    %183 = vector.load %arg7[%c9, %c0_76] : memref<14x32xf32, #tpu.memory_space<vmem>>, vector<1x32xf32>
    %c10 = arith.constant 10 : index
    %c0_77 = arith.constant 0 : index
    %184 = vector.load %arg7[%c10, %c0_77] : memref<14x32xf32, #tpu.memory_space<vmem>>, vector<1x32xf32>
    %c11 = arith.constant 11 : index
    %c0_78 = arith.constant 0 : index
    %185 = vector.load %arg7[%c11, %c0_78] : memref<14x32xf32, #tpu.memory_space<vmem>>, vector<1x32xf32>
    %cst_79 = arith.constant dense<0.000000e+00> : vector<16x96xf32>
    %186 = tpu.matmul %167, %169, %cst_79 {dimension_numbers = #tpu.dot_dimension_numbers<[1], [0], [0], [1], [0, 0, 1, 1], [], []>} : vector<16x32xf32>, vector<32x96xf32>, vector<16x96xf32> -> vector<16x96xf32>
    %187 = vector.broadcast %171 : vector<1x96xf32> to vector<16x96xf32>
    %188 = arith.addf %186, %187 : vector<16x96xf32>
    %189 = vector.extract_strided_slice %188 {offsets = [0, 0], sizes = [16, 8], strides = [1, 1]} : vector<16x96xf32> to vector<16x8xf32>
    %190 = vector.extract_strided_slice %188 {offsets = [0, 8], sizes = [16, 8], strides = [1, 1]} : vector<16x96xf32> to vector<16x8xf32>
    %191 = vector.extract_strided_slice %188 {offsets = [0, 16], sizes = [16, 8], strides = [1, 1]} : vector<16x96xf32> to vector<16x8xf32>
    %192 = vector.extract_strided_slice %188 {offsets = [0, 24], sizes = [16, 8], strides = [1, 1]} : vector<16x96xf32> to vector<16x8xf32>
    %193 = vector.shape_cast %189 : vector<16x8xf32> to vector<1x16x8xf32>
    %194 = vector.shape_cast %190 : vector<16x8xf32> to vector<1x16x8xf32>
    %195 = vector.shape_cast %191 : vector<16x8xf32> to vector<1x16x8xf32>
    %196 = vector.shape_cast %192 : vector<16x8xf32> to vector<1x16x8xf32>
    %197 = tpu.concatenate %193, %194, %195, %196 in 0 : vector<1x16x8xf32>, vector<1x16x8xf32>, vector<1x16x8xf32>, vector<1x16x8xf32> -> vector<4x16x8xf32>
    %198 = vector.extract_strided_slice %188 {offsets = [0, 32], sizes = [16, 8], strides = [1, 1]} : vector<16x96xf32> to vector<16x8xf32>
    %199 = vector.extract_strided_slice %188 {offsets = [0, 40], sizes = [16, 8], strides = [1, 1]} : vector<16x96xf32> to vector<16x8xf32>
    %200 = vector.extract_strided_slice %188 {offsets = [0, 48], sizes = [16, 8], strides = [1, 1]} : vector<16x96xf32> to vector<16x8xf32>
    %201 = vector.extract_strided_slice %188 {offsets = [0, 56], sizes = [16, 8], strides = [1, 1]} : vector<16x96xf32> to vector<16x8xf32>
    %202 = vector.shape_cast %198 : vector<16x8xf32> to vector<1x16x8xf32>
    %203 = vector.shape_cast %199 : vector<16x8xf32> to vector<1x16x8xf32>
    %204 = vector.shape_cast %200 : vector<16x8xf32> to vector<1x16x8xf32>
    %205 = vector.shape_cast %201 : vector<16x8xf32> to vector<1x16x8xf32>
    %206 = tpu.concatenate %202, %203, %204, %205 in 0 : vector<1x16x8xf32>, vector<1x16x8xf32>, vector<1x16x8xf32>, vector<1x16x8xf32> -> vector<4x16x8xf32>
    %207 = vector.extract_strided_slice %188 {offsets = [0, 64], sizes = [16, 8], strides = [1, 1]} : vector<16x96xf32> to vector<16x8xf32>
    %208 = vector.extract_strided_slice %188 {offsets = [0, 72], sizes = [16, 8], strides = [1, 1]} : vector<16x96xf32> to vector<16x8xf32>
    %209 = vector.extract_strided_slice %188 {offsets = [0, 80], sizes = [16, 8], strides = [1, 1]} : vector<16x96xf32> to vector<16x8xf32>
    %210 = vector.extract_strided_slice %188 {offsets = [0, 88], sizes = [16, 8], strides = [1, 1]} : vector<16x96xf32> to vector<16x8xf32>
    %211 = vector.shape_cast %207 : vector<16x8xf32> to vector<1x16x8xf32>
    %212 = vector.shape_cast %208 : vector<16x8xf32> to vector<1x16x8xf32>
    %213 = vector.shape_cast %209 : vector<16x8xf32> to vector<1x16x8xf32>
    %214 = vector.shape_cast %210 : vector<16x8xf32> to vector<1x16x8xf32>
    %215 = tpu.concatenate %211, %212, %213, %214 in 0 : vector<1x16x8xf32>, vector<1x16x8xf32>, vector<1x16x8xf32>, vector<1x16x8xf32> -> vector<4x16x8xf32>
    "tpu.trace_start"() <{level = 10 : i32, message = "hqd,hkd->hqk"}> : () -> ()
    %cst_80 = arith.constant dense<0.000000e+00> : vector<4x16x16xf32>
    %216 = tpu.matmul %197, %206, %cst_80 {dimension_numbers = #tpu.dot_dimension_numbers<[2], [2], [1], [1], [0, 0, 0, 1, 1, 1], [0], [0]>} : vector<4x16x8xf32>, vector<4x16x8xf32>, vector<4x16x16xf32> -> vector<4x16x16xf32>
    "tpu.trace_stop"() : () -> ()
    %217 = vector.shape_cast %38 : vector<16x16xf32> to vector<1x16x16xf32>
    %218 = vector.broadcast %217 : vector<1x16x16xf32> to vector<4x16x16xf32>
    %219 = arith.addf %216, %218 : vector<4x16x16xf32>
    %cst_81 = arith.constant dense<0xFF800000> : vector<4x16xf32>
    %220 = vector.multi_reduction <maximumf>, %219, %cst_81 [2] : vector<4x16x16xf32> to vector<4x16xf32>
    %221 = vector.shape_cast %220 : vector<4x16xf32> to vector<4x16x1xf32>
    %222 = vector.broadcast %221 : vector<4x16x1xf32> to vector<4x16x16xf32>
    %223 = arith.subf %219, %222 : vector<4x16x16xf32>
    %224 = math.exp %223 : vector<4x16x16xf32>
    %cst_82 = arith.constant dense<0.000000e+00> : vector<4x16xf32>
    %225 = vector.multi_reduction <add>, %224, %cst_82 [2] : vector<4x16x16xf32> to vector<4x16xf32>
    %226 = vector.shape_cast %225 : vector<4x16xf32> to vector<4x16x1xf32>
    %227 = tpu.reciprocal %226 {approx = true} : vector<4x16x1xf32> -> vector<4x16x1xf32>
    %228 = vector.broadcast %227 : vector<4x16x1xf32> to vector<4x16x16xf32>
    %229 = arith.mulf %224, %228 : vector<4x16x16xf32>
    "tpu.trace_start"() <{level = 10 : i32, message = "hqk,hkd->hqd"}> : () -> ()
    %cst_83 = arith.constant dense<0.000000e+00> : vector<4x16x8xf32>
    %230 = tpu.matmul %229, %215, %cst_83 {dimension_numbers = #tpu.dot_dimension_numbers<[2], [1], [1], [2], [0, 0, 0, 1, 1, 2], [0], [0]>} : vector<4x16x16xf32>, vector<4x16x8xf32>, vector<4x16x8xf32> -> vector<4x16x8xf32>
    "tpu.trace_stop"() : () -> ()
    %231 = vector.extract_strided_slice %230 {offsets = [0, 0, 0], sizes = [1, 16, 8], strides = [1, 1, 1]} : vector<4x16x8xf32> to vector<1x16x8xf32>
    %232 = vector.shape_cast %231 : vector<1x16x8xf32> to vector<16x8xf32>
    %233 = vector.extract_strided_slice %230 {offsets = [1, 0, 0], sizes = [1, 16, 8], strides = [1, 1, 1]} : vector<4x16x8xf32> to vector<1x16x8xf32>
    %234 = vector.shape_cast %233 : vector<1x16x8xf32> to vector<16x8xf32>
    %235 = vector.extract_strided_slice %230 {offsets = [2, 0, 0], sizes = [1, 16, 8], strides = [1, 1, 1]} : vector<4x16x8xf32> to vector<1x16x8xf32>
    %236 = vector.shape_cast %235 : vector<1x16x8xf32> to vector<16x8xf32>
    %237 = vector.extract_strided_slice %230 {offsets = [3, 0, 0], sizes = [1, 16, 8], strides = [1, 1, 1]} : vector<4x16x8xf32> to vector<1x16x8xf32>
    %238 = vector.shape_cast %237 : vector<1x16x8xf32> to vector<16x8xf32>
    %239 = tpu.concatenate %232, %234, %236, %238 in 1 : vector<16x8xf32>, vector<16x8xf32>, vector<16x8xf32>, vector<16x8xf32> -> vector<16x32xf32>
    %cst_84 = arith.constant dense<0.000000e+00> : vector<16x32xf32>
    %240 = tpu.matmul %239, %173, %cst_84 {dimension_numbers = #tpu.dot_dimension_numbers<[1], [0], [0], [1], [0, 0, 1, 1], [], []>} : vector<16x32xf32>, vector<32x32xf32>, vector<16x32xf32> -> vector<16x32xf32>
    %241 = vector.broadcast %180 : vector<1x32xf32> to vector<16x32xf32>
    %242 = arith.addf %240, %241 : vector<16x32xf32>
    %243 = arith.addf %167, %242 : vector<16x32xf32>
    %cst_85 = arith.constant dense<0.000000e+00> : vector<16xf32>
    %244 = vector.multi_reduction <add>, %243, %cst_85 [1] : vector<16x32xf32> to vector<16xf32>
    %245 = vector.shape_cast %244 : vector<16xf32> to vector<16x1xf32>
    %cst_86 = arith.constant 3.200000e+01 : f32
    %246 = vector.broadcast %cst_86 : f32 to vector<16x1xf32>
    %247 = arith.divf %245, %246 : vector<16x1xf32>
    %248 = vector.broadcast %247 : vector<16x1xf32> to vector<16x32xf32>
    %249 = arith.subf %243, %248 : vector<16x32xf32>
    %250 = arith.mulf %249, %249 : vector<16x32xf32>
    %cst_87 = arith.constant dense<0.000000e+00> : vector<16xf32>
    %251 = vector.multi_reduction <add>, %250, %cst_87 [1] : vector<16x32xf32> to vector<16xf32>
    %252 = vector.shape_cast %251 : vector<16xf32> to vector<16x1xf32>
    %cst_88 = arith.constant 3.200000e+01 : f32
    %253 = vector.broadcast %cst_88 : f32 to vector<16x1xf32>
    %254 = arith.divf %252, %253 : vector<16x1xf32>
    %255 = vector.broadcast %247 : vector<16x1xf32> to vector<16x32xf32>
    %256 = arith.subf %243, %255 : vector<16x32xf32>
    %cst_89 = arith.constant 9.99999974E-6 : f32
    %257 = vector.broadcast %cst_89 : f32 to vector<16x1xf32>
    %258 = arith.addf %254, %257 : vector<16x1xf32>
    %259 = math.rsqrt %258 : vector<16x1xf32>
    %260 = vector.broadcast %259 : vector<16x1xf32> to vector<16x32xf32>
    %261 = arith.mulf %256, %260 : vector<16x32xf32>
    %262 = vector.broadcast %182 : vector<1x32xf32> to vector<16x32xf32>
    %263 = arith.mulf %261, %262 : vector<16x32xf32>
    %264 = vector.broadcast %183 : vector<1x32xf32> to vector<16x32xf32>
    %265 = arith.addf %263, %264 : vector<16x32xf32>
    %cst_90 = arith.constant dense<0.000000e+00> : vector<16x64xf32>
    %266 = tpu.matmul %265, %175, %cst_90 {dimension_numbers = #tpu.dot_dimension_numbers<[1], [0], [0], [1], [0, 0, 1, 1], [], []>} : vector<16x32xf32>, vector<32x64xf32>, vector<16x64xf32> -> vector<16x64xf32>
    %267 = vector.broadcast %177 : vector<1x64xf32> to vector<16x64xf32>
    %268 = arith.addf %266, %267 : vector<16x64xf32>
    %cst_91 = arith.constant 0.000000e+00 : f32
    %269 = vector.broadcast %cst_91 : f32 to vector<16x64xf32>
    %270 = arith.maximumf %268, %269 : vector<16x64xf32>
    %cst_92 = arith.constant dense<0.000000e+00> : vector<16x32xf32>
    %271 = tpu.matmul %270, %179, %cst_92 {dimension_numbers = #tpu.dot_dimension_numbers<[1], [0], [0], [1], [0, 0, 1, 1], [], []>} : vector<16x64xf32>, vector<64x32xf32>, vector<16x32xf32> -> vector<16x32xf32>
    %272 = vector.broadcast %181 : vector<1x32xf32> to vector<16x32xf32>
    %273 = arith.addf %271, %272 : vector<16x32xf32>
    %274 = arith.addf %265, %273 : vector<16x32xf32>
    %cst_93 = arith.constant dense<0.000000e+00> : vector<16xf32>
    %275 = vector.multi_reduction <add>, %274, %cst_93 [1] : vector<16x32xf32> to vector<16xf32>
    %276 = vector.shape_cast %275 : vector<16xf32> to vector<16x1xf32>
    %cst_94 = arith.constant 3.200000e+01 : f32
    %277 = vector.broadcast %cst_94 : f32 to vector<16x1xf32>
    %278 = arith.divf %276, %277 : vector<16x1xf32>
    %279 = vector.broadcast %278 : vector<16x1xf32> to vector<16x32xf32>
    %280 = arith.subf %274, %279 : vector<16x32xf32>
    %281 = arith.mulf %280, %280 : vector<16x32xf32>
    %cst_95 = arith.constant dense<0.000000e+00> : vector<16xf32>
    %282 = vector.multi_reduction <add>, %281, %cst_95 [1] : vector<16x32xf32> to vector<16xf32>
    %283 = vector.shape_cast %282 : vector<16xf32> to vector<16x1xf32>
    %cst_96 = arith.constant 3.200000e+01 : f32
    %284 = vector.broadcast %cst_96 : f32 to vector<16x1xf32>
    %285 = arith.divf %283, %284 : vector<16x1xf32>
    %286 = vector.broadcast %278 : vector<16x1xf32> to vector<16x32xf32>
    %287 = arith.subf %274, %286 : vector<16x32xf32>
    %cst_97 = arith.constant 9.99999974E-6 : f32
    %288 = vector.broadcast %cst_97 : f32 to vector<16x1xf32>
    %289 = arith.addf %285, %288 : vector<16x1xf32>
    %290 = math.rsqrt %289 : vector<16x1xf32>
    %291 = vector.broadcast %290 : vector<16x1xf32> to vector<16x32xf32>
    %292 = arith.mulf %287, %291 : vector<16x32xf32>
    %293 = vector.broadcast %184 : vector<1x32xf32> to vector<16x32xf32>
    %294 = arith.mulf %292, %293 : vector<16x32xf32>
    %295 = vector.broadcast %185 : vector<1x32xf32> to vector<16x32xf32>
    %296 = arith.addf %294, %295 : vector<16x32xf32>
    %c12 = arith.constant 12 : index
    %c0_98 = arith.constant 0 : index
    %297 = vector.load %arg7[%c12, %c0_98] : memref<14x32xf32, #tpu.memory_space<vmem>>, vector<1x32xf32>
    %c13 = arith.constant 13 : index
    %c0_99 = arith.constant 0 : index
    %298 = vector.load %arg7[%c13, %c0_99] : memref<14x32xf32, #tpu.memory_space<vmem>>, vector<1x32xf32>
    %cst_100 = arith.constant dense<0.000000e+00> : vector<16xf32>
    %299 = vector.multi_reduction <add>, %296, %cst_100 [1] : vector<16x32xf32> to vector<16xf32>
    %300 = vector.shape_cast %299 : vector<16xf32> to vector<16x1xf32>
    %cst_101 = arith.constant 3.200000e+01 : f32
    %301 = vector.broadcast %cst_101 : f32 to vector<16x1xf32>
    %302 = arith.divf %300, %301 : vector<16x1xf32>
    %303 = vector.broadcast %302 : vector<16x1xf32> to vector<16x32xf32>
    %304 = arith.subf %296, %303 : vector<16x32xf32>
    %305 = arith.mulf %304, %304 : vector<16x32xf32>
    %cst_102 = arith.constant dense<0.000000e+00> : vector<16xf32>
    %306 = vector.multi_reduction <add>, %305, %cst_102 [1] : vector<16x32xf32> to vector<16xf32>
    %307 = vector.shape_cast %306 : vector<16xf32> to vector<16x1xf32>
    %cst_103 = arith.constant 3.200000e+01 : f32
    %308 = vector.broadcast %cst_103 : f32 to vector<16x1xf32>
    %309 = arith.divf %307, %308 : vector<16x1xf32>
    %310 = vector.broadcast %302 : vector<16x1xf32> to vector<16x32xf32>
    %311 = arith.subf %296, %310 : vector<16x32xf32>
    %cst_104 = arith.constant 9.99999974E-6 : f32
    %312 = vector.broadcast %cst_104 : f32 to vector<16x1xf32>
    %313 = arith.addf %309, %312 : vector<16x1xf32>
    %314 = math.rsqrt %313 : vector<16x1xf32>
    %315 = vector.broadcast %314 : vector<16x1xf32> to vector<16x32xf32>
    %316 = arith.mulf %311, %315 : vector<16x32xf32>
    %317 = vector.broadcast %297 : vector<1x32xf32> to vector<16x32xf32>
    %318 = arith.mulf %316, %317 : vector<16x32xf32>
    %319 = vector.broadcast %298 : vector<1x32xf32> to vector<16x32xf32>
    %320 = arith.addf %318, %319 : vector<16x32xf32>
    %c0_105 = arith.constant 0 : index
    %c0_106 = arith.constant 0 : index
    %321 = vector.load %arg8[%c0_105, %c0_106] : memref<16x32xf32, #tpu.memory_space<vmem>>, vector<16x32xf32>
    tpu.vector_store %arg8[%c0_105, %c0_106], %320 {strides = array<i32>} : memref<16x32xf32, #tpu.memory_space<vmem>>, vector<16x32xf32>,
    return
  }
}

</mosaic_0001>

<llo_original>
// kernel: transformer_encoder.1
$region0: #{transformer_encoder.1}
  #allocation0 [shape = 'u32[]', space=smem, size = 0x4, offset = 0x4, fixed_abs, tag = 'smem constant byte address 0x4 - core index']
  #allocation1 [shape = 'u32[144,128]{1,0:T(1,128)}', space=vmem, size = 0x12000, scoped, tag = 'internal scratch']
  %s0 = inlined_call_operand.hbm [shape: f32[16,32], index: 0, kind: input, shape index: {}]
  %s1 = inlined_call_operand.vmem [shape: f32[2,32,96], index: 1, kind: input, shape index: {}]
  %s2 = inlined_call_operand.vmem [shape: f32[2,1,96], index: 2, kind: input, shape index: {}]
  %s3 = inlined_call_operand.vmem [shape: f32[2,32,32], index: 3, kind: input, shape index: {}]
  %s4 = inlined_call_operand.vmem [shape: f32[2,32,64], index: 4, kind: input, shape index: {}]
  %s5 = inlined_call_operand.hbm [shape: f32[2,1,64], index: 5, kind: input, shape index: {}]
  %s6 = inlined_call_operand.vmem [shape: f32[2,64,32], index: 6, kind: input, shape index: {}]
  %s7 = inlined_call_operand.hbm [shape: f32[14,32], index: 7, kind: input, shape index: {}]
  %s8 = inlined_call_operand.hbm [shape: f32[16,32], index: 8, kind: output, shape index: {}]
  %s9 = sld [smem:[#allocation0]]
  $region54: #{transformer_encoder.1} parent=0
    _
  %s11 = ssub.s32 1, %s9
  %s12 = scalar_select 0, %s11, %s9
  $region1: #{transformer_encoder.1} parent=0
    #allocation2 [shape = 'u8[8192]{0}', space=vmem, size = 0x2000, scoped, tag = 'input window, operand 0, single buffered']
    #allocation3 [shape = 's32[1]{0}', space=sflag, size = 0x4, scoped, tag = 'scoped memory for transformer_encoder.1']
    #allocation4 [shape = 's32[1]{0}', space=sflag, size = 0x4, scoped, tag = 'scoped memory for transformer_encoder.1']
    #allocation5 [shape = 'u8[1024]{0}', space=vmem, size = 0x400, scoped, tag = 'input window, operand 5, single buffered']
    #allocation6 [shape = 's32[1]{0}', space=sflag, size = 0x4, scoped, tag = 'scoped memory for transformer_encoder.1']
    #allocation7 [shape = 'u8[8192]{0}', space=vmem, size = 0x2000, scoped, tag = 'input window, operand 7, single buffered']
    #allocation8 [shape = 'u8[8192]{0}', space=vmem, size = 0x2000, scoped, tag = 'output window, operand 0, single buffered']
    %13 = vsyncpa [#allocation3], 0
    %14 = vsyncpa [#allocation6], 0
    %15 = vsyncpa [#allocation4], 0
    // Predicated region
    $region2: #{transformer_encoder.1} parent=1 // pred_check
      _
    $region3: #{transformer_encoder.1} parent=1 // pred_check_branch
      %17 = sbr.rel (0) target = $region5
    $region4: #{transformer_encoder.1} parent=1 // pred_region
      %s19 = ssub.s32 256, 256
      %20 = vsyncadd [#allocation3], %s19
      %s21 = sshll.u32 [#allocation2], 4
      %s22 = int_to_ptr.vmem [resolvable:$true] %s21
      %27 = dma.hbm_to_vmem [thread:$0]  %s0, 256, %s22, [#allocation3], 128, 128, 8
    $region5: #{transformer_encoder.1} parent=1 // pred_fallthru
      _
    // Predicated region
    $region6: #{transformer_encoder.1} parent=1 // pred_check
      _
    $region7: #{transformer_encoder.1} parent=1 // pred_check_branch
      %29 = sbr.rel (0) target = $region9
    $region8: #{transformer_encoder.1} parent=1 // pred_region
      _
    $region9: #{transformer_encoder.1} parent=1 // pred_fallthru
      _
    // Predicated region
    $region10: #{transformer_encoder.1} parent=1 // pred_check
      _
    $region11: #{transformer_encoder.1} parent=1 // pred_check_branch
      %31 = sbr.rel (0) target = $region13
    $region12: #{transformer_encoder.1} parent=1 // pred_region
      _
    $region13: #{transformer_encoder.1} parent=1 // pred_fallthru
      _
    // Predicated region
    $region14: #{transformer_encoder.1} parent=1 // pred_check
      _
    $region15: #{transformer_encoder.1} parent=1 // pred_check_branch
      %33 = sbr.rel (0) target = $region17
    $region16: #{transformer_encoder.1} parent=1 // pred_region
      _
    $region17: #{transformer_encoder.1} parent=1 // pred_fallthru
      _
    // Predicated region
    $region18: #{transformer_encoder.1} parent=1 // pred_check
      _
    $region19: #{transformer_encoder.1} parent=1 // pred_check_branch
      %35 = sbr.rel (0) target = $region21
    $region20: #{transformer_encoder.1} parent=1 // pred_region
      _
    $region21: #{transformer_encoder.1} parent=1 // pred_fallthru
      _
    // Predicated region
    $region22: #{transformer_encoder.1} parent=1 // pred_check
      _
    $region23: #{transformer_encoder.1} parent=1 // pred_check_branch
      %37 = sbr.rel (0) target = $region25
    $region24: #{transformer_encoder.1} parent=1 // pred_region
      %s39 = ssub.s32 32, 32
      %40 = vsyncadd [#allocation6], %s39
      %s41 = sshll.u32 [#allocation5], 4
      %s42 = int_to_ptr.vmem [resolvable:$true] %s41
      %47 = dma.hbm_to_vmem [thread:$0]  %s5, 32, %s42, [#allocation6], 16, 16, 1
    $region25: #{transformer_encoder.1} parent=1 // pred_fallthru
      _
    // Predicated region
    $region26: #{transformer_encoder.1} parent=1 // pred_check
      _
    $region27: #{transformer_encoder.1} parent=1 // pred_check_branch
      %49 = sbr.rel (0) target = $region29
    $region28: #{transformer_encoder.1} parent=1 // pred_region
      _
    $region29: #{transformer_encoder.1} parent=1 // pred_fallthru
      _
    // Predicated region
    $region30: #{transformer_encoder.1} parent=1 // pred_check
      _
    $region31: #{transformer_encoder.1} parent=1 // pred_check_branch
      %51 = sbr.rel (0) target = $region33
    $region32: #{transformer_encoder.1} parent=1 // pred_region
      %s53 = ssub.s32 256, 256
      %54 = vsyncadd [#allocation6], %s53
      %s55 = sshll.u32 [#allocation7], 4
      %s56 = int_to_ptr.vmem [resolvable:$true] %s55
      %61 = dma.hbm_to_vmem [thread:$0]  %s7, 256, %s56, [#allocation6], 128, 128, 8
    $region33: #{transformer_encoder.1} parent=1 // pred_fallthru
      _
    // Predicated region
    $region34: #{transformer_encoder.1} parent=1 // pred_check
      _
    $region35: #{transformer_encoder.1} parent=1 // pred_check_branch
      %63 = sbr.rel (0) target = $region37
    $region36: #{transformer_encoder.1} parent=1 // pred_region
      %64 = dma.done [#allocation3], 256
    $region37: #{transformer_encoder.1} parent=1 // pred_fallthru
      _
    // Predicated region
    $region38: #{transformer_encoder.1} parent=1 // pred_check
      _
    $region39: #{transformer_encoder.1} parent=1 // pred_check_branch
      %66 = sbr.rel (0) target = $region41
    $region40: #{transformer_encoder.1} parent=1 // pred_region
      %67 = dma.done [#allocation6], 32
    $region41: #{transformer_encoder.1} parent=1 // pred_fallthru
      _
    // Predicated region
    $region42: #{transformer_encoder.1} parent=1 // pred_check
      _
    $region43: #{transformer_encoder.1} parent=1 // pred_check_branch
      %69 = sbr.rel (0) target = $region45
    $region44: #{transformer_encoder.1} parent=1 // pred_region
      %70 = dma.done [#allocation6], 256
    $region45: #{transformer_encoder.1} parent=1 // pred_fallthru
      _
    %v71 = vld [vmem:[#allocation2] sm:$0xff]
    %v72 = vld [vmem:[#allocation2 + $0x8] sm:$0xff]
    %v73 = vlaneseq
    %v74 = vshrl.u32 %v73, 7
    %v75 = vadd.s32 %v74, 8
    %v76 = vlaneseq
    %v77 = vand.u32 %v76, 127
    %vm78 = vcmp.lt.s32.totalorder %v74, 0
    %v79 = vsub.s32 0, %v74
    %v80 = vsel %vm78, %v79, %v74
    %v81 = vshrl.u32 %v80, 1
    %v82 = vand.u32 %v80, 1
    %v83 = vsub.s32 0, %v82
    %v84 = vsel %vm78, %v83, %v82
    %vm85 = vcmp.lt.s32.totalorder %v75, 0
    %v86 = vsub.s32 0, %v75
    %v87 = vsel %vm85, %v86, %v75
    %v88 = vshrl.u32 %v87, 1
    %v89 = vand.u32 %v87, 1
    %v90 = vsub.s32 0, %v89
    %v91 = vsel %vm85, %v90, %v89
    %vm92 = vcmp.ne.s32.totalorder %v84, 0
    %vm93 = vcmp.ne.s32.totalorder %v91, 0
    %vm94 = vcmp.lt.s32.totalorder %v84, 0
    %vm95 = vcmp.lt.s32.totalorder %v91, 0
    %vm96 = vmand %vm94, %vm92
    %vm97 = vmand %vm95, %vm93
    %v98 = vadd.s32 %v84, 2
    %v99 = vadd.s32 %v91, 2
    %v100 = vsel %vm96, %v98, %v84
    %v101 = vsel %vm97, %v99, %v91
    %vm102 = vcmp.lt.s32.totalorder %v77, 0
    %v103 = vsub.s32 0, %v77
    %v104 = vsel %vm102, %v103, %v77
    %v105 = vshrl.u32 %v104, 1
    %v106 = vand.u32 %v104, 1
    %v107 = vsub.s32 0, %v106
    %v108 = vsel %vm102, %v107, %v106
    %vm109 = vcmp.ne.s32.totalorder %v108, 0
    %vm110 = vcmp.lt.s32.totalorder %v108, 0
    %vm111 = vmand %vm110, %vm109
    %v112 = vadd.s32 %v108, 2
    %v113 = vsel %vm111, %v112, %v108
    %vm114 = vcmp.eq.s32.totalorder %v100, %v113
    %vm115 = vcmp.eq.s32.totalorder %v101, %v113
    %v116 = vsel %vm114, 0.0, -1e+30
    %v117 = vsel %vm115, 0.0, -1e+30
    %v118 = vld [vmem:[%s1] sm:$0xff]
    %v119 = vld [vmem:[%s1 + $0x8] sm:$0xff]
    %v120 = vld [vmem:[%s1 + $0x10] sm:$0xff]
    %v121 = vld [vmem:[%s1 + $0x18] sm:$0xff]
    %v122 = vld [vmem:[%s2] sm:$0x1]
    %v123 = vld [vmem:[%s3] sm:$0xff]
    %v124 = vld [vmem:[%s3 + $0x8] sm:$0xff]
    %v125 = vld [vmem:[%s3 + $0x10] sm:$0xff]
    %v126 = vld [vmem:[%s3 + $0x18] sm:$0xff]
    %v127 = vld [vmem:[%s4] sm:$0xff]
    %v128 = vld [vmem:[%s4 + $0x8] sm:$0xff]
    %v129 = vld [vmem:[%s4 + $0x10] sm:$0xff]
    %v130 = vld [vmem:[%s4 + $0x18] sm:$0xff]
    %v131 = vld [vmem:[#allocation5] sm:$0x1]
    %v132 = vld [vmem:[%s6] sm:$0xff]
    %v133 = vld [vmem:[%s6 + $0x8] sm:$0xff]
    %v134 = vld [vmem:[%s6 + $0x10] sm:$0xff]
    %v135 = vld [vmem:[%s6 + $0x18] sm:$0xff]
    %v136 = vld [vmem:[%s6 + $0x20] sm:$0xff]
    %v137 = vld [vmem:[%s6 + $0x28] sm:$0xff]
    %v138 = vld [vmem:[%s6 + $0x30] sm:$0xff]
    %v139 = vld [vmem:[%s6 + $0x38] sm:$0xff]
    %v140 = vld [vmem:[#allocation7] sm:$0x1]
    %v141 = vld [vmem:[#allocation7 + $0x1] sm:$0x1]
    %v142 = vld [vmem:[#allocation7 + $0x2] sm:$0x1]
    %v143 = vld [vmem:[#allocation7 + $0x3] sm:$0x1]
    %v144 = vld [vmem:[#allocation7 + $0x4] sm:$0x1]
    %v145 = vld [vmem:[#allocation7 + $0x5] sm:$0x1]
    %v147 = vlaneseq
    %v148 = vshrl.u32 %v147, 7
    %v149 = vsub.s32 0, %v148
    %v150 = vrot.slane %v122, %v149
    %vm152 = vcmask 261120
    %v154 = vsel %vm152, %v71, 0
    %v157 = vsel %vm152, %v72, 0
    %159 = vmatprep.subr.mxu0 0.0
    %160 = vmatpush1.msra.mxu0 0.0
    %161 = vmatprep.subr.mxu0 0.0
    %162 = vmatpush1.msra.mxu0 0.0
    %163 = vmatprep.subr.mxu0 0.0
    %164 = vmatpush1.msra.mxu0 0.0
    %165 = vmatprep.subr.mxu0 0.0
    %166 = vmatpush1.msra.mxu0 0.0
    %167 = vmatprep.subr.mxu0 0.0
    %168 = vmatpush1.msra.mxu0 0.0
    %169 = vmatprep.subr.mxu0 0.0
    %170 = vmatpush1.msra.mxu0 0.0
    %171 = vmatprep.subr.mxu0 0.0
    %172 = vmatpush1.msra.mxu0 0.0
    %173 = vmatprep.subr.mxu0 0.0
    %174 = vmatpush1.msra.mxu0 0.0
    %175 = vmatprep.subr.mxu0 0.0
    %176 = vmatpush1.msra.mxu0 0.0
    %177 = vmatprep.subr.mxu0 0.0
    %178 = vmatpush1.msra.mxu0 0.0
    %179 = vmatprep.subr.mxu0 0.0
    %180 = vmatpush1.msra.mxu0 0.0
    %181 = vmatprep.subr.mxu0 0.0
    %182 = vmatpush1.msra.mxu0 0.0
    %183 = vmatprep.subr.mxu0 0.0
    %184 = vmatpush1.msra.mxu0 %v121
    %185 = vmatprep.subr.mxu0 0.0
    %186 = vmatpush1.msra.mxu0 %v120
    %187 = vmatprep.subr.mxu0 0.0
    %188 = vmatpush1.msra.mxu0 %v119
    %189 = vmatprep.subr.mxu0 0.0
    %190 = vmatpush1.msra.mxu0 %v118
    %191 = vmatprep.subr.mxu0 0.0
    %192 = vmatpush2.msra.mxu0 0.0
    %193 = vmatprep.subr.mxu0 0.0
    %194 = vmatpush2.msra.mxu0 0.0
    %195 = vmatprep.subr.mxu0 0.0
    %196 = vmatpush2.msra.mxu0 0.0
    %197 = vmatprep.subr.mxu0 0.0
    %198 = vmatpush2.msra.mxu0 0.0
    %199 = vmatprep.subr.mxu0 0.0
    %200 = vmatpush2.msra.mxu0 0.0
    %201 = vmatprep.subr.mxu0 0.0
    %202 = vmatpush2.msra.mxu0 0.0
    %203 = vmatprep.subr.mxu0 0.0
    %204 = vmatpush2.msra.mxu0 0.0
    %205 = vmatprep.subr.mxu0 0.0
    %206 = vmatpush2.msra.mxu0 0.0
    %207 = vmatprep.subr.mxu0 0.0
    %208 = vmatpush2.msra.mxu0 0.0
    %209 = vmatprep.subr.mxu0 0.0
    %210 = vmatpush2.msra.mxu0 0.0
    %211 = vmatprep.subr.mxu0 0.0
    %212 = vmatpush2.msra.mxu0 0.0
    %213 = vmatprep.subr.mxu0 0.0
    %214 = vmatpush2.msra.mxu0 0.0
    %215 = vmatprep.subr.mxu0 0.0
    %216 = vmatpush2.msra.mxu0 0.0
    %217 = vmatprep.subr.mxu0 0.0
    %218 = vmatpush2.msra.mxu0 0.0
    %219 = vmatprep.subr.mxu0 0.0
    %220 = vmatpush2.msra.mxu0 0.0
    %221 = vmatprep.subr.mxu0 0.0
    %222 = vmatpush2.msra.mxu0 0.0
    %223 = vmatprep.mubr.f32.mxu0 0.0
    %224 = vmatmul.mubr.f32.gmra.mxu0 %v154
    %v225 = vpop.f32.mrf.mxu0
    %v226 = vadd.f32 %v150, %v225
    %v227 = vpop.f32.mrf.mxu0
    %228 = vmatprep.mubr.f32.mxu0 0.0
    %229 = vmatmul.mubr.f32.gmra.mxu0 %v157
    %v230 = vpop.f32.mrf.mxu0
    %v231 = vadd.f32 %v150, %v230
    %v232 = vpop.f32.mrf.mxu0
    %233 = vdwg.mxu0
    %236 = vrot.lane.b32.xlu0 %v226, 120
    %v237 = vpop.permute.xlu0 %236
    %238 = vrot.lane.b32.xlu0 %v231, 120
    %v239 = vpop.permute.xlu0 %238
    %240 = vrot.lane.b32.xlu0 %v226, 112
    %v241 = vpop.permute.xlu0 %240
    %242 = vrot.lane.b32.xlu0 %v231, 112
    %v243 = vpop.permute.xlu0 %242
    %244 = vrot.lane.b32.xlu0 %v226, 104
    %v245 = vpop.permute.xlu0 %244
    %246 = vrot.lane.b32.xlu0 %v231, 104
    %v247 = vpop.permute.xlu0 %246
    %248 = vrot.lane.b32.xlu0 %v226, 96
    %v249 = vpop.permute.xlu0 %248
    %250 = vrot.lane.b32.xlu0 %v231, 96
    %v251 = vpop.permute.xlu0 %250
    %vm252 = vcmask 64512
    %v253 = vsel %vm252, %v226, 0
    %v255 = vsel %vm252, %v231, 0
    %v257 = vsel %vm252, %v249, 0
    %v259 = vsel %vm252, %v251, 0
    %261 = vmatprep.subr.mxu0 0.0
    %262 = vmatpush1.xpose.msra.mxu0 0.0
    %263 = vmatprep.subr.mxu0 0.0
    %264 = vmatpush1.xpose.msra.mxu0 0.0
    %265 = vmatprep.subr.mxu0 0.0
    %266 = vmatpush1.xpose.msra.mxu0 0.0
    %267 = vmatprep.subr.mxu0 0.0
    %268 = vmatpush1.xpose.msra.mxu0 0.0
    %269 = vmatprep.subr.mxu0 0.0
    %270 = vmatpush1.xpose.msra.mxu0 0.0
    %271 = vmatprep.subr.mxu0 0.0
    %272 = vmatpush1.xpose.msra.mxu0 0.0
    %273 = vmatprep.subr.mxu0 0.0
    %274 = vmatpush1.xpose.msra.mxu0 0.0
    %275 = vmatprep.subr.mxu0 0.0
    %276 = vmatpush1.xpose.msra.mxu0 0.0
    %277 = vmatprep.subr.mxu0 0.0
    %278 = vmatpush1.xpose.msra.mxu0 0.0
    %279 = vmatprep.subr.mxu0 0.0
    %280 = vmatpush1.xpose.msra.mxu0 0.0
    %281 = vmatprep.subr.mxu0 0.0
    %282 = vmatpush1.xpose.msra.mxu0 0.0
    %283 = vmatprep.subr.mxu0 0.0
    %284 = vmatpush1.xpose.msra.mxu0 0.0
    %285 = vmatprep.subr.mxu0 0.0
    %286 = vmatpush1.xpose.msra.mxu0 0.0
    %287 = vmatprep.subr.mxu0 0.0
    %288 = vmatpush1.xpose.msra.mxu0 0.0
    %289 = vmatprep.subr.mxu0 0.0
    %290 = vmatpush1.xpose.msra.mxu0 %v259
    %291 = vmatprep.subr.mxu0 0.0
    %292 = vmatpush1.xpose.msra.mxu0 %v257
    %293 = vmatprep.subr.mxu0 0.0
    %294 = vmatpush2.xpose.msra.mxu0 0.0
    %295 = vmatprep.subr.mxu0 0.0
    %296 = vmatpush2.xpose.msra.mxu0 0.0
    %297 = vmatprep.subr.mxu0 0.0
    %298 = vmatpush2.xpose.msra.mxu0 0.0
    %299 = vmatprep.subr.mxu0 0.0
    %300 = vmatpush2.xpose.msra.mxu0 0.0
    %301 = vmatprep.subr.mxu0 0.0
    %302 = vmatpush2.xpose.msra.mxu0 0.0
    %303 = vmatprep.subr.mxu0 0.0
    %304 = vmatpush2.xpose.msra.mxu0 0.0
    %305 = vmatprep.subr.mxu0 0.0
    %306 = vmatpush2.xpose.msra.mxu0 0.0
    %307 = vmatprep.subr.mxu0 0.0
    %308 = vmatpush2.xpose.msra.mxu0 0.0
    %309 = vmatprep.subr.mxu0 0.0
    %310 = vmatpush2.xpose.msra.mxu0 0.0
    %311 = vmatprep.subr.mxu0 0.0
    %312 = vmatpush2.xpose.msra.mxu0 0.0
    %313 = vmatprep.subr.mxu0 0.0
    %314 = vmatpush2.xpose.msra.mxu0 0.0
    %315 = vmatprep.subr.mxu0 0.0
    %316 = vmatpush2.xpose.msra.mxu0 0.0
    %317 = vmatprep.subr.mxu0 0.0
    %318 = vmatpush2.xpose.msra.mxu0 0.0
    %319 = vmatprep.subr.mxu0 0.0
    %320 = vmatpush2.xpose.msra.mxu0 0.0
    %321 = vmatprep.subr.mxu0 0.0
    %322 = vmatpush2.xpose.msra.mxu0 0.0
    %323 = vmatprep.subr.mxu0 0.0
    %324 = vmatpush2.xpose.msra.mxu0 0.0
    %325 = vmatprep.mubr.f32.mxu0 0.0
    %326 = vmatmul.mubr.f32.gmra.mxu0 %v253
    %v327 = vpop.f32.mrf.mxu0
    %v328 = vadd.f32 %v116, %v327
    %v329 = vpop.f32.mrf.mxu0
    %330 = vmatprep.mubr.f32.mxu0 0.0
    %331 = vmatmul.mubr.f32.gmra.mxu0 %v255
    %v332 = vpop.f32.mrf.mxu0
    %v333 = vadd.f32 %v117, %v332
    %v334 = vpop.f32.mrf.mxu0
    %335 = vdwg.mxu0
    %336 = vrot.lane.b32.xlu0 %v237, 96
    %v337 = vpop.permute.xlu0 %336
    %338 = vrot.lane.b32.xlu0 %v239, 96
    %v339 = vpop.permute.xlu0 %338
    %v340 = vsel %vm252, %v237, 0
    %v342 = vsel %vm252, %v239, 0
    %v344 = vsel %vm252, %v337, 0
    %v346 = vsel %vm252, %v339, 0
    %348 = vmatprep.subr.mxu0 0.0
    %349 = vmatpush1.xpose.msra.mxu0 0.0
    %350 = vmatprep.subr.mxu0 0.0
    %351 = vmatpush1.xpose.msra.mxu0 0.0
    %352 = vmatprep.subr.mxu0 0.0
    %353 = vmatpush1.xpose.msra.mxu0 0.0
    %354 = vmatprep.subr.mxu0 0.0
    %355 = vmatpush1.xpose.msra.mxu0 0.0
    %356 = vmatprep.subr.mxu0 0.0
    %357 = vmatpush1.xpose.msra.mxu0 0.0
    %358 = vmatprep.subr.mxu0 0.0
    %359 = vmatpush1.xpose.msra.mxu0 0.0
    %360 = vmatprep.subr.mxu0 0.0
    %361 = vmatpush1.xpose.msra.mxu0 0.0
    %362 = vmatprep.subr.mxu0 0.0
    %363 = vmatpush1.xpose.msra.mxu0 0.0
    %364 = vmatprep.subr.mxu0 0.0
    %365 = vmatpush1.xpose.msra.mxu0 0.0
    %366 = vmatprep.subr.mxu0 0.0
    %367 = vmatpush1.xpose.msra.mxu0 0.0
    %368 = vmatprep.subr.mxu0 0.0
    %369 = vmatpush1.xpose.msra.mxu0 0.0
    %370 = vmatprep.subr.mxu0 0.0
    %371 = vmatpush1.xpose.msra.mxu0 0.0
    %372 = vmatprep.subr.mxu0 0.0
    %373 = vmatpush1.xpose.msra.mxu0 0.0
    %374 = vmatprep.subr.mxu0 0.0
    %375 = vmatpush1.xpose.msra.mxu0 0.0
    %376 = vmatprep.subr.mxu0 0.0
    %377 = vmatpush1.xpose.msra.mxu0 %v346
    %378 = vmatprep.subr.mxu0 0.0
    %379 = vmatpush1.xpose.msra.mxu0 %v344
    %380 = vmatprep.subr.mxu0 0.0
    %381 = vmatpush2.xpose.msra.mxu0 0.0
    %382 = vmatprep.subr.mxu0 0.0
    %383 = vmatpush2.xpose.msra.mxu0 0.0
    %384 = vmatprep.subr.mxu0 0.0
    %385 = vmatpush2.xpose.msra.mxu0 0.0
    %386 = vmatprep.subr.mxu0 0.0
    %387 = vmatpush2.xpose.msra.mxu0 0.0
    %388 = vmatprep.subr.mxu0 0.0
    %389 = vmatpush2.xpose.msra.mxu0 0.0
    %390 = vmatprep.subr.mxu0 0.0
    %391 = vmatpush2.xpose.msra.mxu0 0.0
    %392 = vmatprep.subr.mxu0 0.0
    %393 = vmatpush2.xpose.msra.mxu0 0.0
    %394 = vmatprep.subr.mxu0 0.0
    %395 = vmatpush2.xpose.msra.mxu0 0.0
    %396 = vmatprep.subr.mxu0 0.0
    %397 = vmatpush2.xpose.msra.mxu0 0.0
    %398 = vmatprep.subr.mxu0 0.0
    %399 = vmatpush2.xpose.msra.mxu0 0.0
    %400 = vmatprep.subr.mxu0 0.0
    %401 = vmatpush2.xpose.msra.mxu0 0.0
    %402 = vmatprep.subr.mxu0 0.0
    %403 = vmatpush2.xpose.msra.mxu0 0.0
    %404 = vmatprep.subr.mxu0 0.0
    %405 = vmatpush2.xpose.msra.mxu0 0.0
    %406 = vmatprep.subr.mxu0 0.0
    %407 = vmatpush2.xpose.msra.mxu0 0.0
    %408 = vmatprep.subr.mxu0 0.0
    %409 = vmatpush2.xpose.msra.mxu0 0.0
    %410 = vmatprep.subr.mxu0 0.0
    %411 = vmatpush2.xpose.msra.mxu0 0.0
    %412 = vmatprep.mubr.f32.mxu0 0.0
    %413 = vmatmul.mubr.f32.gmra.mxu0 %v340
    %v414 = vpop.f32.mrf.mxu0
    %v415 = vadd.f32 %v116, %v414
    %v416 = vpop.f32.mrf.mxu0
    %417 = vmatprep.mubr.f32.mxu0 0.0
    %418 = vmatmul.mubr.f32.gmra.mxu0 %v342
    %v419 = vpop.f32.mrf.mxu0
    %v420 = vadd.f32 %v117, %v419
    %v421 = vpop.f32.mrf.mxu0
    %422 = vdwg.mxu0
    %423 = vrot.lane.b32.xlu0 %v241, 96
    %v424 = vpop.permute.xlu0 %423
    %425 = vrot.lane.b32.xlu0 %v243, 96
    %v426 = vpop.permute.xlu0 %425
    %v427 = vsel %vm252, %v241, 0
    %v429 = vsel %vm252, %v243, 0
    %v431 = vsel %vm252, %v424, 0
    %v433 = vsel %vm252, %v426, 0
    %435 = vmatprep.subr.mxu0 0.0
    %436 = vmatpush1.xpose.msra.mxu0 0.0
    %437 = vmatprep.subr.mxu0 0.0
    %438 = vmatpush1.xpose.msra.mxu0 0.0
    %439 = vmatprep.subr.mxu0 0.0
    %440 = vmatpush1.xpose.msra.mxu0 0.0
    %441 = vmatprep.subr.mxu0 0.0
    %442 = vmatpush1.xpose.msra.mxu0 0.0
    %443 = vmatprep.subr.mxu0 0.0
    %444 = vmatpush1.xpose.msra.mxu0 0.0
    %445 = vmatprep.subr.mxu0 0.0
    %446 = vmatpush1.xpose.msra.mxu0 0.0
    %447 = vmatprep.subr.mxu0 0.0
    %448 = vmatpush1.xpose.msra.mxu0 0.0
    %449 = vmatprep.subr.mxu0 0.0
    %450 = vmatpush1.xpose.msra.mxu0 0.0
    %451 = vmatprep.subr.mxu0 0.0
    %452 = vmatpush1.xpose.msra.mxu0 0.0
    %453 = vmatprep.subr.mxu0 0.0
    %454 = vmatpush1.xpose.msra.mxu0 0.0
    %455 = vmatprep.subr.mxu0 0.0
    %456 = vmatpush1.xpose.msra.mxu0 0.0
    %457 = vmatprep.subr.mxu0 0.0
    %458 = vmatpush1.xpose.msra.mxu0 0.0
    %459 = vmatprep.subr.mxu0 0.0
    %460 = vmatpush1.xpose.msra.mxu0 0.0
    %461 = vmatprep.subr.mxu0 0.0
    %462 = vmatpush1.xpose.msra.mxu0 0.0
    %463 = vmatprep.subr.mxu0 0.0
    %464 = vmatpush1.xpose.msra.mxu0 %v433
    %465 = vmatprep.subr.mxu0 0.0
    %466 = vmatpush1.xpose.msra.mxu0 %v431
    %467 = vmatprep.subr.mxu0 0.0
    %468 = vmatpush2.xpose.msra.mxu0 0.0
    %469 = vmatprep.subr.mxu0 0.0
    %470 = vmatpush2.xpose.msra.mxu0 0.0
    %471 = vmatprep.subr.mxu0 0.0
    %472 = vmatpush2.xpose.msra.mxu0 0.0
    %473 = vmatprep.subr.mxu0 0.0
    %474 = vmatpush2.xpose.msra.mxu0 0.0
    %475 = vmatprep.subr.mxu0 0.0
    %476 = vmatpush2.xpose.msra.mxu0 0.0
    %477 = vmatprep.subr.mxu0 0.0
    %478 = vmatpush2.xpose.msra.mxu0 0.0
    %479 = vmatprep.subr.mxu0 0.0
    %480 = vmatpush2.xpose.msra.mxu0 0.0
    %481 = vmatprep.subr.mxu0 0.0
    %482 = vmatpush2.xpose.msra.mxu0 0.0
    %483 = vmatprep.subr.mxu0 0.0
    %484 = vmatpush2.xpose.msra.mxu0 0.0
    %485 = vmatprep.subr.mxu0 0.0
    %486 = vmatpush2.xpose.msra.mxu0 0.0
    %487 = vmatprep.subr.mxu0 0.0
    %488 = vmatpush2.xpose.msra.mxu0 0.0
    %489 = vmatprep.subr.mxu0 0.0
    %490 = vmatpush2.xpose.msra.mxu0 0.0
    %491 = vmatprep.subr.mxu0 0.0
    %492 = vmatpush2.xpose.msra.mxu0 0.0
    %493 = vmatprep.subr.mxu0 0.0
    %494 = vmatpush2.xpose.msra.mxu0 0.0
    %495 = vmatprep.subr.mxu0 0.0
    %496 = vmatpush2.xpose.msra.mxu0 0.0
    %497 = vmatprep.subr.mxu0 0.0
    %498 = vmatpush2.xpose.msra.mxu0 0.0
    %499 = vmatprep.mubr.f32.mxu0 0.0
    %500 = vmatmul.mubr.f32.gmra.mxu0 %v427
    %v501 = vpop.f32.mrf.mxu0
    %v502 = vadd.f32 %v116, %v501
    %v503 = vpop.f32.mrf.mxu0
    %504 = vmatprep.mubr.f32.mxu0 0.0
    %505 = vmatmul.mubr.f32.gmra.mxu0 %v429
    %v506 = vpop.f32.mrf.mxu0
    %v507 = vadd.f32 %v117, %v506
    %v508 = vpop.f32.mrf.mxu0
    %509 = vdwg.mxu0
    %510 = vrot.lane.b32.xlu0 %v245, 96
    %v511 = vpop.permute.xlu0 %510
    %512 = vrot.lane.b32.xlu0 %v247, 96
    %v513 = vpop.permute.xlu0 %512
    %v514 = vsel %vm252, %v245, 0
    %v516 = vsel %vm252, %v247, 0
    %v518 = vsel %vm252, %v511, 0
    %v520 = vsel %vm252, %v513, 0
    %522 = vmatprep.subr.mxu0 0.0
    %523 = vmatpush1.xpose.msra.mxu0 0.0
    %524 = vmatprep.subr.mxu0 0.0
    %525 = vmatpush1.xpose.msra.mxu0 0.0
    %526 = vmatprep.subr.mxu0 0.0
    %527 = vmatpush1.xpose.msra.mxu0 0.0
    %528 = vmatprep.subr.mxu0 0.0
    %529 = vmatpush1.xpose.msra.mxu0 0.0
    %530 = vmatprep.subr.mxu0 0.0
    %531 = vmatpush1.xpose.msra.mxu0 0.0
    %532 = vmatprep.subr.mxu0 0.0
    %533 = vmatpush1.xpose.msra.mxu0 0.0
    %534 = vmatprep.subr.mxu0 0.0
    %535 = vmatpush1.xpose.msra.mxu0 0.0
    %536 = vmatprep.subr.mxu0 0.0
    %537 = vmatpush1.xpose.msra.mxu0 0.0
    %538 = vmatprep.subr.mxu0 0.0
    %539 = vmatpush1.xpose.msra.mxu0 0.0
    %540 = vmatprep.subr.mxu0 0.0
    %541 = vmatpush1.xpose.msra.mxu0 0.0
    %542 = vmatprep.subr.mxu0 0.0
    %543 = vmatpush1.xpose.msra.mxu0 0.0
    %544 = vmatprep.subr.mxu0 0.0
    %545 = vmatpush1.xpose.msra.mxu0 0.0
    %546 = vmatprep.subr.mxu0 0.0
    %547 = vmatpush1.xpose.msra.mxu0 0.0
    %548 = vmatprep.subr.mxu0 0.0
    %549 = vmatpush1.xpose.msra.mxu0 0.0
    %550 = vmatprep.subr.mxu0 0.0
    %551 = vmatpush1.xpose.msra.mxu0 %v520
    %552 = vmatprep.subr.mxu0 0.0
    %553 = vmatpush1.xpose.msra.mxu0 %v518
    %554 = vmatprep.subr.mxu0 0.0
    %555 = vmatpush2.xpose.msra.mxu0 0.0
    %556 = vmatprep.subr.mxu0 0.0
    %557 = vmatpush2.xpose.msra.mxu0 0.0
    %558 = vmatprep.subr.mxu0 0.0
    %559 = vmatpush2.xpose.msra.mxu0 0.0
    %560 = vmatprep.subr.mxu0 0.0
    %561 = vmatpush2.xpose.msra.mxu0 0.0
    %562 = vmatprep.subr.mxu0 0.0
    %563 = vmatpush2.xpose.msra.mxu0 0.0
    %564 = vmatprep.subr.mxu0 0.0
    %565 = vmatpush2.xpose.msra.mxu0 0.0
    %566 = vmatprep.subr.mxu0 0.0
    %567 = vmatpush2.xpose.msra.mxu0 0.0
    %568 = vmatprep.subr.mxu0 0.0
    %569 = vmatpush2.xpose.msra.mxu0 0.0
    %570 = vmatprep.subr.mxu0 0.0
    %571 = vmatpush2.xpose.msra.mxu0 0.0
    %572 = vmatprep.subr.mxu0 0.0
    %573 = vmatpush2.xpose.msra.mxu0 0.0
    %574 = vmatprep.subr.mxu0 0.0
    %575 = vmatpush2.xpose.msra.mxu0 0.0
    %576 = vmatprep.subr.mxu0 0.0
    %577 = vmatpush2.xpose.msra.mxu0 0.0
    %578 = vmatprep.subr.mxu0 0.0
    %579 = vmatpush2.xpose.msra.mxu0 0.0
    %580 = vmatprep.subr.mxu0 0.0
    %581 = vmatpush2.xpose.msra.mxu0 0.0
    %582 = vmatprep.subr.mxu0 0.0
    %583 = vmatpush2.xpose.msra.mxu0 0.0
    %584 = vmatprep.subr.mxu0 0.0
    %585 = vmatpush2.xpose.msra.mxu0 0.0
    %586 = vmatprep.mubr.f32.mxu0 0.0
    %587 = vmatmul.mubr.f32.gmra.mxu0 %v514
    %v588 = vpop.f32.mrf.mxu0
    %v589 = vadd.f32 %v116, %v588
    %v590 = vpop.f32.mrf.mxu0
    %591 = vmatprep.mubr.f32.mxu0 0.0
    %592 = vmatmul.mubr.f32.gmra.mxu0 %v516
    %v593 = vpop.f32.mrf.mxu0
    %v594 = vadd.f32 %v117, %v593
    %v595 = vpop.f32.mrf.mxu0
    %596 = vdwg.mxu0
    %vm597 = vcmask 130048
    %v598 = vsel %vm597, %v328, -inf
    %599 = vmax.xlane.f32.xlu0 %v598
    %v600 = vpop.xlane.xlu0 %599
    %v601 = vsel %vm597, %v333, -inf
    %602 = vmax.xlane.f32.xlu0 %v601
    %v603 = vpop.xlane.xlu0 %602
    %v604 = vsel %vm597, %v415, -inf
    %605 = vmax.xlane.f32.xlu0 %v604
    %v606 = vpop.xlane.xlu0 %605
    %v607 = vsel %vm597, %v420, -inf
    %608 = vmax.xlane.f32.xlu0 %v607
    %v609 = vpop.xlane.xlu0 %608
    %v610 = vsel %vm597, %v502, -inf
    %611 = vmax.xlane.f32.xlu0 %v610
    %v612 = vpop.xlane.xlu0 %611
    %v613 = vsel %vm597, %v507, -inf
    %614 = vmax.xlane.f32.xlu0 %v613
    %v615 = vpop.xlane.xlu0 %614
    %v616 = vsel %vm597, %v589, -inf
    %617 = vmax.xlane.f32.xlu0 %v616
    %v618 = vpop.xlane.xlu0 %617
    %v619 = vsel %vm597, %v594, -inf
    %620 = vmax.xlane.f32.xlu0 %v619
    %v621 = vpop.xlane.xlu0 %620
    %v622 = vsub.f32 %v328, %v600
    %v623 = vsub.f32 %v333, %v603
    %v624 = vsub.f32 %v415, %v606
    %v625 = vsub.f32 %v420, %v609
    %v626 = vsub.f32 %v502, %v612
    %v627 = vsub.f32 %v507, %v615
    %v628 = vsub.f32 %v589, %v618
    %v629 = vsub.f32 %v594, %v621
    %v630 = vmul.f32 %v622, 1.442695
    %v631 = vpow.pop %v630
    %v632 = vmul.f32 %v623, 1.442695
    %v633 = vpow.pop %v632
    %v634 = vmul.f32 %v624, 1.442695
    %v635 = vpow.pop %v634
    %v636 = vmul.f32 %v625, 1.442695
    %v637 = vpow.pop %v636
    %v638 = vmul.f32 %v626, 1.442695
    %v639 = vpow.pop %v638
    %v640 = vmul.f32 %v627, 1.442695
    %v641 = vpow.pop %v640
    %v642 = vmul.f32 %v628, 1.442695
    %v643 = vpow.pop %v642
    %v644 = vmul.f32 %v629, 1.442695
    %v645 = vpow.pop %v644
    %v646 = vsel %vm597, %v631, 0.0
    %647 = vadd.xlane.f32.xlu0 %v646
    %v648 = vpop.xlane.xlu0 %647
    %v649 = vsel %vm597, %v633, 0.0
    %650 = vadd.xlane.f32.xlu0 %v649
    %v651 = vpop.xlane.xlu0 %650
    %v652 = vsel %vm597, %v635, 0.0
    %653 = vadd.xlane.f32.xlu0 %v652
    %v654 = vpop.xlane.xlu0 %653
    %v655 = vsel %vm597, %v637, 0.0
    %656 = vadd.xlane.f32.xlu0 %v655
    %v657 = vpop.xlane.xlu0 %656
    %v658 = vsel %vm597, %v639, 0.0
    %659 = vadd.xlane.f32.xlu0 %v658
    %v660 = vpop.xlane.xlu0 %659
    %v661 = vsel %vm597, %v641, 0.0
    %662 = vadd.xlane.f32.xlu0 %v661
    %v663 = vpop.xlane.xlu0 %662
    %v664 = vsel %vm597, %v643, 0.0
    %665 = vadd.xlane.f32.xlu0 %v664
    %v666 = vpop.xlane.xlu0 %665
    %v667 = vsel %vm597, %v645, 0.0
    %668 = vadd.xlane.f32.xlu0 %v667
    %v669 = vpop.xlane.xlu0 %668
    %v670 = vrcp.pop %v648
    %v671 = vrcp.pop %v651
    %v672 = vrcp.pop %v654
    %v673 = vrcp.pop %v657
    %v674 = vrcp.pop %v660
    %v675 = vrcp.pop %v663
    %v676 = vrcp.pop %v666
    %v677 = vrcp.pop %v669
    %v678 = vmul.f32 %v631, %v670
    %v679 = vmul.f32 %v633, %v671
    %v680 = vmul.f32 %v635, %v672
    %v681 = vmul.f32 %v637, %v673
    %v682 = vmul.f32 %v639, %v674
    %v683 = vmul.f32 %v641, %v675
    %v684 = vmul.f32 %v643, %v676
    %v685 = vmul.f32 %v645, %v677
    %686 = vrot.lane.b32.xlu0 %v226, 64
    %v687 = vpop.permute.xlu0 %686
    %688 = vrot.lane.b32.xlu0 %v231, 64
    %v689 = vpop.permute.xlu0 %688
    %v693 = vsel %vm597, %v678, 0
    %v696 = vsel %vm597, %v679, 0
    %698 = vmatprep.subr.mxu0 0.0
    %699 = vmatpush1.msra.mxu0 0.0
    %700 = vmatprep.subr.mxu0 0.0
    %701 = vmatpush1.msra.mxu0 0.0
    %702 = vmatprep.subr.mxu0 0.0
    %703 = vmatpush1.msra.mxu0 0.0
    %704 = vmatprep.subr.mxu0 0.0
    %705 = vmatpush1.msra.mxu0 0.0
    %706 = vmatprep.subr.mxu0 0.0
    %707 = vmatpush1.msra.mxu0 0.0
    %708 = vmatprep.subr.mxu0 0.0
    %709 = vmatpush1.msra.mxu0 0.0
    %710 = vmatprep.subr.mxu0 0.0
    %711 = vmatpush1.msra.mxu0 0.0
    %712 = vmatprep.subr.mxu0 0.0
    %713 = vmatpush1.msra.mxu0 0.0
    %714 = vmatprep.subr.mxu0 0.0
    %715 = vmatpush1.msra.mxu0 0.0
    %716 = vmatprep.subr.mxu0 0.0
    %717 = vmatpush1.msra.mxu0 0.0
    %718 = vmatprep.subr.mxu0 0.0
    %719 = vmatpush1.msra.mxu0 0.0
    %720 = vmatprep.subr.mxu0 0.0
    %721 = vmatpush1.msra.mxu0 0.0
    %722 = vmatprep.subr.mxu0 0.0
    %723 = vmatpush1.msra.mxu0 0.0
    %724 = vmatprep.subr.mxu0 0.0
    %725 = vmatpush1.msra.mxu0 0.0
    %726 = vmatprep.subr.mxu0 0.0
    %727 = vmatpush1.msra.mxu0 %v689
    %728 = vmatprep.subr.mxu0 0.0
    %729 = vmatpush1.msra.mxu0 %v687
    %730 = vmatprep.subr.mxu0 0.0
    %731 = vmatpush2.msra.mxu0 0.0
    %732 = vmatprep.subr.mxu0 0.0
    %733 = vmatpush2.msra.mxu0 0.0
    %734 = vmatprep.subr.mxu0 0.0
    %735 = vmatpush2.msra.mxu0 0.0
    %736 = vmatprep.subr.mxu0 0.0
    %737 = vmatpush2.msra.mxu0 0.0
    %738 = vmatprep.subr.mxu0 0.0
    %739 = vmatpush2.msra.mxu0 0.0
    %740 = vmatprep.subr.mxu0 0.0
    %741 = vmatpush2.msra.mxu0 0.0
    %742 = vmatprep.subr.mxu0 0.0
    %743 = vmatpush2.msra.mxu0 0.0
    %744 = vmatprep.subr.mxu0 0.0
    %745 = vmatpush2.msra.mxu0 0.0
    %746 = vmatprep.subr.mxu0 0.0
    %747 = vmatpush2.msra.mxu0 0.0
    %748 = vmatprep.subr.mxu0 0.0
    %749 = vmatpush2.msra.mxu0 0.0
    %750 = vmatprep.subr.mxu0 0.0
    %751 = vmatpush2.msra.mxu0 0.0
    %752 = vmatprep.subr.mxu0 0.0
    %753 = vmatpush2.msra.mxu0 0.0
    %754 = vmatprep.subr.mxu0 0.0
    %755 = vmatpush2.msra.mxu0 0.0
    %756 = vmatprep.subr.mxu0 0.0
    %757 = vmatpush2.msra.mxu0 0.0
    %758 = vmatprep.subr.mxu0 0.0
    %759 = vmatpush2.msra.mxu0 0.0
    %760 = vmatprep.subr.mxu0 0.0
    %761 = vmatpush2.msra.mxu0 0.0
    %762 = vmatprep.mubr.f32.mxu0 0.0
    %763 = vmatmul.mubr.f32.gmra.mxu0 %v693
    %v764 = vpop.f32.mrf.mxu0
    %v765 = vadd.f32 0.0, %v764
    %v766 = vpop.f32.mrf.mxu0
    %767 = vmatprep.mubr.f32.mxu0 0.0
    %768 = vmatmul.mubr.f32.gmra.mxu0 %v696
    %v769 = vpop.f32.mrf.mxu0
    %v770 = vadd.f32 0.0, %v769
    %v771 = vpop.f32.mrf.mxu0
    %772 = vdwg.mxu0
    %773 = vrot.lane.b32.xlu0 %v237, 64
    %v774 = vpop.permute.xlu0 %773
    %775 = vrot.lane.b32.xlu0 %v239, 64
    %v776 = vpop.permute.xlu0 %775
    %v780 = vsel %vm597, %v680, 0
    %v783 = vsel %vm597, %v681, 0
    %785 = vmatprep.subr.mxu0 0.0
    %786 = vmatpush1.msra.mxu0 0.0
    %787 = vmatprep.subr.mxu0 0.0
    %788 = vmatpush1.msra.mxu0 0.0
    %789 = vmatprep.subr.mxu0 0.0
    %790 = vmatpush1.msra.mxu0 0.0
    %791 = vmatprep.subr.mxu0 0.0
    %792 = vmatpush1.msra.mxu0 0.0
    %793 = vmatprep.subr.mxu0 0.0
    %794 = vmatpush1.msra.mxu0 0.0
    %795 = vmatprep.subr.mxu0 0.0
    %796 = vmatpush1.msra.mxu0 0.0
    %797 = vmatprep.subr.mxu0 0.0
    %798 = vmatpush1.msra.mxu0 0.0
    %799 = vmatprep.subr.mxu0 0.0
    %800 = vmatpush1.msra.mxu0 0.0
    %801 = vmatprep.subr.mxu0 0.0
    %802 = vmatpush1.msra.mxu0 0.0
    %803 = vmatprep.subr.mxu0 0.0
    %804 = vmatpush1.msra.mxu0 0.0
    %805 = vmatprep.subr.mxu0 0.0
    %806 = vmatpush1.msra.mxu0 0.0
    %807 = vmatprep.subr.mxu0 0.0
    %808 = vmatpush1.msra.mxu0 0.0
    %809 = vmatprep.subr.mxu0 0.0
    %810 = vmatpush1.msra.mxu0 0.0
    %811 = vmatprep.subr.mxu0 0.0
    %812 = vmatpush1.msra.mxu0 0.0
    %813 = vmatprep.subr.mxu0 0.0
    %814 = vmatpush1.msra.mxu0 %v776
    %815 = vmatprep.subr.mxu0 0.0
    %816 = vmatpush1.msra.mxu0 %v774
    %817 = vmatprep.subr.mxu0 0.0
    %818 = vmatpush2.msra.mxu0 0.0
    %819 = vmatprep.subr.mxu0 0.0
    %820 = vmatpush2.msra.mxu0 0.0
    %821 = vmatprep.subr.mxu0 0.0
    %822 = vmatpush2.msra.mxu0 0.0
    %823 = vmatprep.subr.mxu0 0.0
    %824 = vmatpush2.msra.mxu0 0.0
    %825 = vmatprep.subr.mxu0 0.0
    %826 = vmatpush2.msra.mxu0 0.0
    %827 = vmatprep.subr.mxu0 0.0
    %828 = vmatpush2.msra.mxu0 0.0
    %829 = vmatprep.subr.mxu0 0.0
    %830 = vmatpush2.msra.mxu0 0.0
    %831 = vmatprep.subr.mxu0 0.0
    %832 = vmatpush2.msra.mxu0 0.0
    %833 = vmatprep.subr.mxu0 0.0
    %834 = vmatpush2.msra.mxu0 0.0
    %835 = vmatprep.subr.mxu0 0.0
    %836 = vmatpush2.msra.mxu0 0.0
    %837 = vmatprep.subr.mxu0 0.0
    %838 = vmatpush2.msra.mxu0 0.0
    %839 = vmatprep.subr.mxu0 0.0
    %840 = vmatpush2.msra.mxu0 0.0
    %841 = vmatprep.subr.mxu0 0.0
    %842 = vmatpush2.msra.mxu0 0.0
    %843 = vmatprep.subr.mxu0 0.0
    %844 = vmatpush2.msra.mxu0 0.0
    %845 = vmatprep.subr.mxu0 0.0
    %846 = vmatpush2.msra.mxu0 0.0
    %847 = vmatprep.subr.mxu0 0.0
    %848 = vmatpush2.msra.mxu0 0.0
    %849 = vmatprep.mubr.f32.mxu0 0.0
    %850 = vmatmul.mubr.f32.gmra.mxu0 %v780
    %v851 = vpop.f32.mrf.mxu0
    %v852 = vadd.f32 0.0, %v851
    %v853 = vpop.f32.mrf.mxu0
    %854 = vmatprep.mubr.f32.mxu0 0.0
    %855 = vmatmul.mubr.f32.gmra.mxu0 %v783
    %v856 = vpop.f32.mrf.mxu0
    %v857 = vadd.f32 0.0, %v856
    %v858 = vpop.f32.mrf.mxu0
    %859 = vdwg.mxu0
    %860 = vrot.lane.b32.xlu0 %v241, 64
    %v861 = vpop.permute.xlu0 %860
    %862 = vrot.lane.b32.xlu0 %v243, 64
    %v863 = vpop.permute.xlu0 %862
    %v867 = vsel %vm597, %v682, 0
    %v870 = vsel %vm597, %v683, 0
    %872 = vmatprep.subr.mxu0 0.0
    %873 = vmatpush1.msra.mxu0 0.0
    %874 = vmatprep.subr.mxu0 0.0
    %875 = vmatpush1.msra.mxu0 0.0
    %876 = vmatprep.subr.mxu0 0.0
    %877 = vmatpush1.msra.mxu0 0.0
    %878 = vmatprep.subr.mxu0 0.0
    %879 = vmatpush1.msra.mxu0 0.0
    %880 = vmatprep.subr.mxu0 0.0
    %881 = vmatpush1.msra.mxu0 0.0
    %882 = vmatprep.subr.mxu0 0.0
    %883 = vmatpush1.msra.mxu0 0.0
    %884 = vmatprep.subr.mxu0 0.0
    %885 = vmatpush1.msra.mxu0 0.0
    %886 = vmatprep.subr.mxu0 0.0
    %887 = vmatpush1.msra.mxu0 0.0
    %888 = vmatprep.subr.mxu0 0.0
    %889 = vmatpush1.msra.mxu0 0.0
    %890 = vmatprep.subr.mxu0 0.0
    %891 = vmatpush1.msra.mxu0 0.0
    %892 = vmatprep.subr.mxu0 0.0
    %893 = vmatpush1.msra.mxu0 0.0
    %894 = vmatprep.subr.mxu0 0.0
    %895 = vmatpush1.msra.mxu0 0.0
    %896 = vmatprep.subr.mxu0 0.0
    %897 = vmatpush1.msra.mxu0 0.0
    %898 = vmatprep.subr.mxu0 0.0
    %899 = vmatpush1.msra.mxu0 0.0
    %900 = vmatprep.subr.mxu0 0.0
    %901 = vmatpush1.msra.mxu0 %v863
    %902 = vmatprep.subr.mxu0 0.0
    %903 = vmatpush1.msra.mxu0 %v861
    %904 = vmatprep.subr.mxu0 0.0
    %905 = vmatpush2.msra.mxu0 0.0
    %906 = vmatprep.subr.mxu0 0.0
    %907 = vmatpush2.msra.mxu0 0.0
    %908 = vmatprep.subr.mxu0 0.0
    %909 = vmatpush2.msra.mxu0 0.0
    %910 = vmatprep.subr.mxu0 0.0
    %911 = vmatpush2.msra.mxu0 0.0
    %912 = vmatprep.subr.mxu0 0.0
    %913 = vmatpush2.msra.mxu0 0.0
    %914 = vmatprep.subr.mxu0 0.0
    %915 = vmatpush2.msra.mxu0 0.0
    %916 = vmatprep.subr.mxu0 0.0
    %917 = vmatpush2.msra.mxu0 0.0
    %918 = vmatprep.subr.mxu0 0.0
    %919 = vmatpush2.msra.mxu0 0.0
    %920 = vmatprep.subr.mxu0 0.0
    %921 = vmatpush2.msra.mxu0 0.0
    %922 = vmatprep.subr.mxu0 0.0
    %923 = vmatpush2.msra.mxu0 0.0
    %924 = vmatprep.subr.mxu0 0.0
    %925 = vmatpush2.msra.mxu0 0.0
    %926 = vmatprep.subr.mxu0 0.0
    %927 = vmatpush2.msra.mxu0 0.0
    %928 = vmatprep.subr.mxu0 0.0
    %929 = vmatpush2.msra.mxu0 0.0
    %930 = vmatprep.subr.mxu0 0.0
    %931 = vmatpush2.msra.mxu0 0.0
    %932 = vmatprep.subr.mxu0 0.0
    %933 = vmatpush2.msra.mxu0 0.0
    %934 = vmatprep.subr.mxu0 0.0
    %935 = vmatpush2.msra.mxu0 0.0
    %936 = vmatprep.mubr.f32.mxu0 0.0
    %937 = vmatmul.mubr.f32.gmra.mxu0 %v867
    %v938 = vpop.f32.mrf.mxu0
    %v939 = vadd.f32 0.0, %v938
    %v940 = vpop.f32.mrf.mxu0
    %941 = vmatprep.mubr.f32.mxu0 0.0
    %942 = vmatmul.mubr.f32.gmra.mxu0 %v870
    %v943 = vpop.f32.mrf.mxu0
    %v944 = vadd.f32 0.0, %v943
    %v945 = vpop.f32.mrf.mxu0
    %946 = vdwg.mxu0
    %947 = vrot.lane.b32.xlu0 %v245, 64
    %v948 = vpop.permute.xlu0 %947
    %949 = vrot.lane.b32.xlu0 %v247, 64
    %v950 = vpop.permute.xlu0 %949
    %v954 = vsel %vm597, %v684, 0
    %v957 = vsel %vm597, %v685, 0
    %959 = vmatprep.subr.mxu0 0.0
    %960 = vmatpush1.msra.mxu0 0.0
    %961 = vmatprep.subr.mxu0 0.0
    %962 = vmatpush1.msra.mxu0 0.0
    %963 = vmatprep.subr.mxu0 0.0
    %964 = vmatpush1.msra.mxu0 0.0
    %965 = vmatprep.subr.mxu0 0.0
    %966 = vmatpush1.msra.mxu0 0.0
    %967 = vmatprep.subr.mxu0 0.0
    %968 = vmatpush1.msra.mxu0 0.0
    %969 = vmatprep.subr.mxu0 0.0
    %970 = vmatpush1.msra.mxu0 0.0
    %971 = vmatprep.subr.mxu0 0.0
    %972 = vmatpush1.msra.mxu0 0.0
    %973 = vmatprep.subr.mxu0 0.0
    %974 = vmatpush1.msra.mxu0 0.0
    %975 = vmatprep.subr.mxu0 0.0
    %976 = vmatpush1.msra.mxu0 0.0
    %977 = vmatprep.subr.mxu0 0.0
    %978 = vmatpush1.msra.mxu0 0.0
    %979 = vmatprep.subr.mxu0 0.0
    %980 = vmatpush1.msra.mxu0 0.0
    %981 = vmatprep.subr.mxu0 0.0
    %982 = vmatpush1.msra.mxu0 0.0
    %983 = vmatprep.subr.mxu0 0.0
    %984 = vmatpush1.msra.mxu0 0.0
    %985 = vmatprep.subr.mxu0 0.0
    %986 = vmatpush1.msra.mxu0 0.0
    %987 = vmatprep.subr.mxu0 0.0
    %988 = vmatpush1.msra.mxu0 %v950
    %989 = vmatprep.subr.mxu0 0.0
    %990 = vmatpush1.msra.mxu0 %v948
    %991 = vmatprep.subr.mxu0 0.0
    %992 = vmatpush2.msra.mxu0 0.0
    %993 = vmatprep.subr.mxu0 0.0
    %994 = vmatpush2.msra.mxu0 0.0
    %995 = vmatprep.subr.mxu0 0.0
    %996 = vmatpush2.msra.mxu0 0.0
    %997 = vmatprep.subr.mxu0 0.0
    %998 = vmatpush2.msra.mxu0 0.0
    %999 = vmatprep.subr.mxu0 0.0
    %1000 = vmatpush2.msra.mxu0 0.0
    %1001 = vmatprep.subr.mxu0 0.0
    %1002 = vmatpush2.msra.mxu0 0.0
    %1003 = vmatprep.subr.mxu0 0.0
    %1004 = vmatpush2.msra.mxu0 0.0
    %1005 = vmatprep.subr.mxu0 0.0
    %1006 = vmatpush2.msra.mxu0 0.0
    %1007 = vmatprep.subr.mxu0 0.0
    %1008 = vmatpush2.msra.mxu0 0.0
    %1009 = vmatprep.subr.mxu0 0.0
    %1010 = vmatpush2.msra.mxu0 0.0
    %1011 = vmatprep.subr.mxu0 0.0
    %1012 = vmatpush2.msra.mxu0 0.0
    %1013 = vmatprep.subr.mxu0 0.0
    %1014 = vmatpush2.msra.mxu0 0.0
    %1015 = vmatprep.subr.mxu0 0.0
    %1016 = vmatpush2.msra.mxu0 0.0
    %1017 = vmatprep.subr.mxu0 0.0
    %1018 = vmatpush2.msra.mxu0 0.0
    %1019 = vmatprep.subr.mxu0 0.0
    %1020 = vmatpush2.msra.mxu0 0.0
    %1021 = vmatprep.subr.mxu0 0.0
    %1022 = vmatpush2.msra.mxu0 0.0
    %1023 = vmatprep.mubr.f32.mxu0 0.0
    %1024 = vmatmul.mubr.f32.gmra.mxu0 %v954
    %v1025 = vpop.f32.mrf.mxu0
    %v1026 = vadd.f32 0.0, %v1025
    %v1027 = vpop.f32.mrf.mxu0
    %1028 = vmatprep.mubr.f32.mxu0 0.0
    %1029 = vmatmul.mubr.f32.gmra.mxu0 %v957
    %v1030 = vpop.f32.mrf.mxu0
    %v1031 = vadd.f32 0.0, %v1030
    %v1032 = vpop.f32.mrf.mxu0
    %1033 = vdwg.mxu0
    %1036 = vrot.lane.b32.xlu0 %v852, 8
    %v1037 = vpop.permute.xlu0 %1036
    %1038 = vrot.lane.b32.xlu0 %v857, 8
    %v1039 = vpop.permute.xlu0 %1038
    %1044 = vrot.lane.b32.xlu0 %v939, 16
    %v1045 = vpop.permute.xlu0 %1044
    %1046 = vrot.lane.b32.xlu0 %v944, 16
    %v1047 = vpop.permute.xlu0 %1046
    %1052 = vrot.lane.b32.xlu0 %v1026, 24
    %v1053 = vpop.permute.xlu0 %1052
    %1054 = vrot.lane.b32.xlu0 %v1031, 24
    %v1055 = vpop.permute.xlu0 %1054
    %v1058 = vsel %vm252, %v765, %v1037
    %v1059 = vsel %vm252, %v770, %v1039
    %v1060 = vsel %vm597, %v1058, %v1045
    %v1061 = vsel %vm597, %v1059, %v1047
    %vm1062 = vcmask 195584
    %v1063 = vsel %vm1062, %v1060, %v1053
    %v1064 = vsel %vm1062, %v1061, %v1055
    %v1065 = vlaneseq
    %v1066 = vshrl.u32 %v1065, 7
    %v1067 = vsub.s32 0, %v1066
    %v1068 = vrot.slane %v140, %v1067
    %v1070 = vsel %vm152, %v1063, 0
    %v1073 = vsel %vm152, %v1064, 0
    %1075 = vmatprep.subr.mxu0 0.0
    %1076 = vmatpush1.msra.mxu0 0.0
    %1077 = vmatprep.subr.mxu0 0.0
    %1078 = vmatpush1.msra.mxu0 0.0
    %1079 = vmatprep.subr.mxu0 0.0
    %1080 = vmatpush1.msra.mxu0 0.0
    %1081 = vmatprep.subr.mxu0 0.0
    %1082 = vmatpush1.msra.mxu0 0.0
    %1083 = vmatprep.subr.mxu0 0.0
    %1084 = vmatpush1.msra.mxu0 0.0
    %1085 = vmatprep.subr.mxu0 0.0
    %1086 = vmatpush1.msra.mxu0 0.0
    %1087 = vmatprep.subr.mxu0 0.0
    %1088 = vmatpush1.msra.mxu0 0.0
    %1089 = vmatprep.subr.mxu0 0.0
    %1090 = vmatpush1.msra.mxu0 0.0
    %1091 = vmatprep.subr.mxu0 0.0
    %1092 = vmatpush1.msra.mxu0 0.0
    %1093 = vmatprep.subr.mxu0 0.0
    %1094 = vmatpush1.msra.mxu0 0.0
    %1095 = vmatprep.subr.mxu0 0.0
    %1096 = vmatpush1.msra.mxu0 0.0
    %1097 = vmatprep.subr.mxu0 0.0
    %1098 = vmatpush1.msra.mxu0 0.0
    %1099 = vmatprep.subr.mxu0 0.0
    %1100 = vmatpush1.msra.mxu0 %v126
    %1101 = vmatprep.subr.mxu0 0.0
    %1102 = vmatpush1.msra.mxu0 %v125
    %1103 = vmatprep.subr.mxu0 0.0
    %1104 = vmatpush1.msra.mxu0 %v124
    %1105 = vmatprep.subr.mxu0 0.0
    %1106 = vmatpush1.msra.mxu0 %v123
    %1107 = vmatprep.subr.mxu0 0.0
    %1108 = vmatpush2.msra.mxu0 0.0
    %1109 = vmatprep.subr.mxu0 0.0
    %1110 = vmatpush2.msra.mxu0 0.0
    %1111 = vmatprep.subr.mxu0 0.0
    %1112 = vmatpush2.msra.mxu0 0.0
    %1113 = vmatprep.subr.mxu0 0.0
    %1114 = vmatpush2.msra.mxu0 0.0
    %1115 = vmatprep.subr.mxu0 0.0
    %1116 = vmatpush2.msra.mxu0 0.0
    %1117 = vmatprep.subr.mxu0 0.0
    %1118 = vmatpush2.msra.mxu0 0.0
    %1119 = vmatprep.subr.mxu0 0.0
    %1120 = vmatpush2.msra.mxu0 0.0
    %1121 = vmatprep.subr.mxu0 0.0
    %1122 = vmatpush2.msra.mxu0 0.0
    %1123 = vmatprep.subr.mxu0 0.0
    %1124 = vmatpush2.msra.mxu0 0.0
    %1125 = vmatprep.subr.mxu0 0.0
    %1126 = vmatpush2.msra.mxu0 0.0
    %1127 = vmatprep.subr.mxu0 0.0
    %1128 = vmatpush2.msra.mxu0 0.0
    %1129 = vmatprep.subr.mxu0 0.0
    %1130 = vmatpush2.msra.mxu0 0.0
    %1131 = vmatprep.subr.mxu0 0.0
    %1132 = vmatpush2.msra.mxu0 0.0
    %1133 = vmatprep.subr.mxu0 0.0
    %1134 = vmatpush2.msra.mxu0 0.0
    %1135 = vmatprep.subr.mxu0 0.0
    %1136 = vmatpush2.msra.mxu0 0.0
    %1137 = vmatprep.subr.mxu0 0.0
    %1138 = vmatpush2.msra.mxu0 0.0
    %1139 = vmatprep.mubr.f32.mxu0 0.0
    %1140 = vmatmul.mubr.f32.gmra.mxu0 %v1070
    %v1141 = vpop.f32.mrf.mxu0
    %v1142 = vadd.f32 %v1068, %v1141
    %v1143 = vpop.f32.mrf.mxu0
    %1144 = vmatprep.mubr.f32.mxu0 0.0
    %1145 = vmatmul.mubr.f32.gmra.mxu0 %v1073
    %v1146 = vpop.f32.mrf.mxu0
    %v1147 = vadd.f32 %v1068, %v1146
    %v1148 = vpop.f32.mrf.mxu0
    %1149 = vdwg.mxu0
    %v1150 = vadd.f32 %v71, %v1142
    %v1151 = vadd.f32 %v72, %v1147
    %v1152 = vsel %vm152, %v1150, 0.0
    %1153 = vadd.xlane.f32.xlu0 %v1152
    %v1154 = vpop.xlane.xlu0 %1153
    %v1155 = vsel %vm152, %v1151, 0.0
    %1156 = vadd.xlane.f32.xlu0 %v1155
    %v1157 = vpop.xlane.xlu0 %1156
    %v1158 = vrcp.pop 32.0
    %v1159 = vmul.f32 %v1154, %v1158
    %v1160 = vmul.f32 %v1157, %v1158
    %v1161 = vsub.f32 %v1150, %v1159
    %v1162 = vsub.f32 %v1151, %v1160
    %v1163 = vmul.f32 %v1161, %v1161
    %v1164 = vmul.f32 %v1162, %v1162
    %v1165 = vsel %vm152, %v1163, 0.0
    %1166 = vadd.xlane.f32.xlu0 %v1165
    %v1167 = vpop.xlane.xlu0 %1166
    %v1168 = vsel %vm152, %v1164, 0.0
    %1169 = vadd.xlane.f32.xlu0 %v1168
    %v1170 = vpop.xlane.xlu0 %1169
    %v1171 = vmul.f32 %v1167, %v1158
    %v1172 = vmul.f32 %v1170, %v1158
    %v1173 = vadd.f32 %v1171, 1e-05
    %v1174 = vadd.f32 %v1172, 1e-05
    %v1175 = vrsqrt.pop %v1173
    %v1176 = vrsqrt.pop %v1174
    %v1177 = vmul.f32 %v1161, %v1175
    %v1178 = vmul.f32 %v1162, %v1176
    %v1179 = vlaneseq
    %v1180 = vshrl.u32 %v1179, 7
    %v1181 = vsub.s32 0, %v1180
    %v1182 = vrot.slane %v142, %v1181
    %v1183 = vmul.f32 %v1177, %v1182
    %v1184 = vmul.f32 %v1178, %v1182
    %v1185 = vlaneseq
    %v1186 = vshrl.u32 %v1185, 7
    %v1187 = vsub.s32 0, %v1186
    %v1188 = vrot.slane %v143, %v1187
    %v1189 = vadd.f32 %v1183, %v1188
    %v1190 = vadd.f32 %v1184, %v1188
    %v1192 = vlaneseq
    %v1193 = vshrl.u32 %v1192, 7
    %v1194 = vsub.s32 0, %v1193
    %v1195 = vrot.slane %v131, %v1194
    %v1198 = vsel %vm152, %v1189, 0
    %v1201 = vsel %vm152, %v1190, 0
    %1203 = vmatprep.subr.mxu0 0.0
    %1204 = vmatpush1.msra.mxu0 0.0
    %1205 = vmatprep.subr.mxu0 0.0
    %1206 = vmatpush1.msra.mxu0 0.0
    %1207 = vmatprep.subr.mxu0 0.0
    %1208 = vmatpush1.msra.mxu0 0.0
    %1209 = vmatprep.subr.mxu0 0.0
    %1210 = vmatpush1.msra.mxu0 0.0
    %1211 = vmatprep.subr.mxu0 0.0
    %1212 = vmatpush1.msra.mxu0 0.0
    %1213 = vmatprep.subr.mxu0 0.0
    %1214 = vmatpush1.msra.mxu0 0.0
    %1215 = vmatprep.subr.mxu0 0.0
    %1216 = vmatpush1.msra.mxu0 0.0
    %1217 = vmatprep.subr.mxu0 0.0
    %1218 = vmatpush1.msra.mxu0 0.0
    %1219 = vmatprep.subr.mxu0 0.0
    %1220 = vmatpush1.msra.mxu0 0.0
    %1221 = vmatprep.subr.mxu0 0.0
    %1222 = vmatpush1.msra.mxu0 0.0
    %1223 = vmatprep.subr.mxu0 0.0
    %1224 = vmatpush1.msra.mxu0 0.0
    %1225 = vmatprep.subr.mxu0 0.0
    %1226 = vmatpush1.msra.mxu0 0.0
    %1227 = vmatprep.subr.mxu0 0.0
    %1228 = vmatpush1.msra.mxu0 %v130
    %1229 = vmatprep.subr.mxu0 0.0
    %1230 = vmatpush1.msra.mxu0 %v129
    %1231 = vmatprep.subr.mxu0 0.0
    %1232 = vmatpush1.msra.mxu0 %v128
    %1233 = vmatprep.subr.mxu0 0.0
    %1234 = vmatpush1.msra.mxu0 %v127
    %1235 = vmatprep.subr.mxu0 0.0
    %1236 = vmatpush2.msra.mxu0 0.0
    %1237 = vmatprep.subr.mxu0 0.0
    %1238 = vmatpush2.msra.mxu0 0.0
    %1239 = vmatprep.subr.mxu0 0.0
    %1240 = vmatpush2.msra.mxu0 0.0
    %1241 = vmatprep.subr.mxu0 0.0
    %1242 = vmatpush2.msra.mxu0 0.0
    %1243 = vmatprep.subr.mxu0 0.0
    %1244 = vmatpush2.msra.mxu0 0.0
    %1245 = vmatprep.subr.mxu0 0.0
    %1246 = vmatpush2.msra.mxu0 0.0
    %1247 = vmatprep.subr.mxu0 0.0
    %1248 = vmatpush2.msra.mxu0 0.0
    %1249 = vmatprep.subr.mxu0 0.0
    %1250 = vmatpush2.msra.mxu0 0.0
    %1251 = vmatprep.subr.mxu0 0.0
    %1252 = vmatpush2.msra.mxu0 0.0
    %1253 = vmatprep.subr.mxu0 0.0
    %1254 = vmatpush2.msra.mxu0 0.0
    %1255 = vmatprep.subr.mxu0 0.0
    %1256 = vmatpush2.msra.mxu0 0.0
    %1257 = vmatprep.subr.mxu0 0.0
    %1258 = vmatpush2.msra.mxu0 0.0
    %1259 = vmatprep.subr.mxu0 0.0
    %1260 = vmatpush2.msra.mxu0 0.0
    %1261 = vmatprep.subr.mxu0 0.0
    %1262 = vmatpush2.msra.mxu0 0.0
    %1263 = vmatprep.subr.mxu0 0.0
    %1264 = vmatpush2.msra.mxu0 0.0
    %1265 = vmatprep.subr.mxu0 0.0
    %1266 = vmatpush2.msra.mxu0 0.0
    %1267 = vmatprep.mubr.f32.mxu0 0.0
    %1268 = vmatmul.mubr.f32.gmra.mxu0 %v1198
    %v1269 = vpop.f32.mrf.mxu0
    %v1270 = vadd.f32 %v1195, %v1269
    %v1271 = vpop.f32.mrf.mxu0
    %1272 = vmatprep.mubr.f32.mxu0 0.0
    %1273 = vmatmul.mubr.f32.gmra.mxu0 %v1201
    %v1274 = vpop.f32.mrf.mxu0
    %v1275 = vadd.f32 %v1195, %v1274
    %v1276 = vpop.f32.mrf.mxu0
    %1277 = vdwg.mxu0
    %v1278 = vmax.f32 %v1270, 0.0
    %v1279 = vmax.f32 %v1275, 0.0
    %v1280 = vlaneseq
    %v1281 = vshrl.u32 %v1280, 7
    %v1282 = vsub.s32 0, %v1281
    %v1283 = vrot.slane %v141, %v1282
    %vm1284 = vcmask 523264
    %v1286 = vsel %vm1284, %v1278, 0
    %v1289 = vsel %vm1284, %v1279, 0
    %1291 = vmatprep.subr.mxu0 0.0
    %1292 = vmatpush1.msra.mxu0 0.0
    %1293 = vmatprep.subr.mxu0 0.0
    %1294 = vmatpush1.msra.mxu0 0.0
    %1295 = vmatprep.subr.mxu0 0.0
    %1296 = vmatpush1.msra.mxu0 0.0
    %1297 = vmatprep.subr.mxu0 0.0
    %1298 = vmatpush1.msra.mxu0 0.0
    %1299 = vmatprep.subr.mxu0 0.0
    %1300 = vmatpush1.msra.mxu0 0.0
    %1301 = vmatprep.subr.mxu0 0.0
    %1302 = vmatpush1.msra.mxu0 0.0
    %1303 = vmatprep.subr.mxu0 0.0
    %1304 = vmatpush1.msra.mxu0 0.0
    %1305 = vmatprep.subr.mxu0 0.0
    %1306 = vmatpush1.msra.mxu0 0.0
    %1307 = vmatprep.subr.mxu0 0.0
    %1308 = vmatpush1.msra.mxu0 %v139
    %1309 = vmatprep.subr.mxu0 0.0
    %1310 = vmatpush1.msra.mxu0 %v138
    %1311 = vmatprep.subr.mxu0 0.0
    %1312 = vmatpush1.msra.mxu0 %v137
    %1313 = vmatprep.subr.mxu0 0.0
    %1314 = vmatpush1.msra.mxu0 %v136
    %1315 = vmatprep.subr.mxu0 0.0
    %1316 = vmatpush1.msra.mxu0 %v135
    %1317 = vmatprep.subr.mxu0 0.0
    %1318 = vmatpush1.msra.mxu0 %v134
    %1319 = vmatprep.subr.mxu0 0.0
    %1320 = vmatpush1.msra.mxu0 %v133
    %1321 = vmatprep.subr.mxu0 0.0
    %1322 = vmatpush1.msra.mxu0 %v132
    %1323 = vmatprep.subr.mxu0 0.0
    %1324 = vmatpush2.msra.mxu0 0.0
    %1325 = vmatprep.subr.mxu0 0.0
    %1326 = vmatpush2.msra.mxu0 0.0
    %1327 = vmatprep.subr.mxu0 0.0
    %1328 = vmatpush2.msra.mxu0 0.0
    %1329 = vmatprep.subr.mxu0 0.0
    %1330 = vmatpush2.msra.mxu0 0.0
    %1331 = vmatprep.subr.mxu0 0.0
    %1332 = vmatpush2.msra.mxu0 0.0
    %1333 = vmatprep.subr.mxu0 0.0
    %1334 = vmatpush2.msra.mxu0 0.0
    %1335 = vmatprep.subr.mxu0 0.0
    %1336 = vmatpush2.msra.mxu0 0.0
    %1337 = vmatprep.subr.mxu0 0.0
    %1338 = vmatpush2.msra.mxu0 0.0
    %1339 = vmatprep.subr.mxu0 0.0
    %1340 = vmatpush2.msra.mxu0 0.0
    %1341 = vmatprep.subr.mxu0 0.0
    %1342 = vmatpush2.msra.mxu0 0.0
    %1343 = vmatprep.subr.mxu0 0.0
    %1344 = vmatpush2.msra.mxu0 0.0
    %1345 = vmatprep.subr.mxu0 0.0
    %1346 = vmatpush2.msra.mxu0 0.0
    %1347 = vmatprep.subr.mxu0 0.0
    %1348 = vmatpush2.msra.mxu0 0.0
    %1349 = vmatprep.subr.mxu0 0.0
    %1350 = vmatpush2.msra.mxu0 0.0
    %1351 = vmatprep.subr.mxu0 0.0
    %1352 = vmatpush2.msra.mxu0 0.0
    %1353 = vmatprep.subr.mxu0 0.0
    %1354 = vmatpush2.msra.mxu0 0.0
    %1355 = vmatprep.mubr.f32.mxu0 0.0
    %1356 = vmatmul.mubr.f32.gmra.mxu0 %v1286
    %v1357 = vpop.f32.mrf.mxu0
    %v1358 = vadd.f32 %v1283, %v1357
    %v1359 = vpop.f32.mrf.mxu0
    %1360 = vmatprep.mubr.f32.mxu0 0.0
    %1361 = vmatmul.mubr.f32.gmra.mxu0 %v1289
    %v1362 = vpop.f32.mrf.mxu0
    %v1363 = vadd.f32 %v1283, %v1362
    %v1364 = vpop.f32.mrf.mxu0
    %1365 = vdwg.mxu0
    %v1366 = vadd.f32 %v1189, %v1358
    %v1367 = vadd.f32 %v1190, %v1363
    %v1368 = vsel %vm152, %v1366, 0.0
    %1369 = vadd.xlane.f32.xlu0 %v1368
    %v1370 = vpop.xlane.xlu0 %1369
    %v1371 = vsel %vm152, %v1367, 0.0
    %1372 = vadd.xlane.f32.xlu0 %v1371
    %v1373 = vpop.xlane.xlu0 %1372
    %v1374 = vmul.f32 %v1370, %v1158
    %v1375 = vmul.f32 %v1373, %v1158
    %v1376 = vsub.f32 %v1366, %v1374
    %v1377 = vsub.f32 %v1367, %v1375
    %v1378 = vmul.f32 %v1376, %v1376
    %v1379 = vmul.f32 %v1377, %v1377
    %v1380 = vsel %vm152, %v1378, 0.0
    %1381 = vadd.xlane.f32.xlu0 %v1380
    %v1382 = vpop.xlane.xlu0 %1381
    %v1383 = vsel %vm152, %v1379, 0.0
    %1384 = vadd.xlane.f32.xlu0 %v1383
    %v1385 = vpop.xlane.xlu0 %1384
    %v1386 = vmul.f32 %v1382, %v1158
    %v1387 = vmul.f32 %v1385, %v1158
    %v1388 = vadd.f32 %v1386, 1e-05
    %v1389 = vadd.f32 %v1387, 1e-05
    %v1390 = vrsqrt.pop %v1388
    %v1391 = vrsqrt.pop %v1389
    %v1392 = vmul.f32 %v1376, %v1390
    %v1393 = vmul.f32 %v1377, %v1391
    %v1394 = vlaneseq
    %v1395 = vshrl.u32 %v1394, 7
    %v1396 = vsub.s32 0, %v1395
    %v1397 = vrot.slane %v144, %v1396
    %v1398 = vmul.f32 %v1392, %v1397
    %v1399 = vmul.f32 %v1393, %v1397
    %v1400 = vlaneseq
    %v1401 = vshrl.u32 %v1400, 7
    %v1402 = vsub.s32 0, %v1401
    %v1403 = vrot.slane %v145, %v1402
    %v1404 = vadd.f32 %v1398, %v1403
    %v1405 = vadd.f32 %v1399, %v1403
    %s1406 = scalar_lea.vmem %s1, 32
    %v1407 = vld [vmem:[%s1406] sm:$0xff]
    %v1408 = vld [vmem:[%s1406 + $0x8] sm:$0xff]
    %v1409 = vld [vmem:[%s1406 + $0x10] sm:$0xff]
    %v1410 = vld [vmem:[%s1406 + $0x18] sm:$0xff]
    %s1411 = scalar_lea.vmem %s2, 1
    %v1412 = vld [vmem:[%s1411] sm:$0x1]
    %s1413 = scalar_lea.vmem %s3, 32
    %v1414 = vld [vmem:[%s1413] sm:$0xff]
    %v1415 = vld [vmem:[%s1413 + $0x8] sm:$0xff]
    %v1416 = vld [vmem:[%s1413 + $0x10] sm:$0xff]
    %v1417 = vld [vmem:[%s1413 + $0x18] sm:$0xff]
    %s1418 = scalar_lea.vmem %s4, 32
    %v1419 = vld [vmem:[%s1418] sm:$0xff]
    %v1420 = vld [vmem:[%s1418 + $0x8] sm:$0xff]
    %v1421 = vld [vmem:[%s1418 + $0x10] sm:$0xff]
    %v1422 = vld [vmem:[%s1418 + $0x18] sm:$0xff]
    %s1423 = scalar_lea.vmem [#allocation5], 1
    %v1424 = vld [vmem:[%s1423] sm:$0x1]
    %s1425 = scalar_lea.vmem %s6, 64
    %v1426 = vld [vmem:[%s1425] sm:$0xff]
    %v1427 = vld [vmem:[%s1425 + $0x8] sm:$0xff]
    %v1428 = vld [vmem:[%s1425 + $0x10] sm:$0xff]
    %v1429 = vld [vmem:[%s1425 + $0x18] sm:$0xff]
    %v1430 = vld [vmem:[%s1425 + $0x20] sm:$0xff]
    %v1431 = vld [vmem:[%s1425 + $0x28] sm:$0xff]
    %v1432 = vld [vmem:[%s1425 + $0x30] sm:$0xff]
    %v1433 = vld [vmem:[%s1425 + $0x38] sm:$0xff]
    %v1434 = vld [vmem:[#allocation7 + $0x6] sm:$0x1]
    %v1435 = vld [vmem:[#allocation7 + $0x7] sm:$0x1]
    %v1436 = vld [vmem:[#allocation7 + $0x8] sm:$0x1]
    %v1437 = vld [vmem:[#allocation7 + $0x9] sm:$0x1]
    %v1438 = vld [vmem:[#allocation7 + $0xa] sm:$0x1]
    %v1439 = vld [vmem:[#allocation7 + $0xb] sm:$0x1]
    %v1441 = vlaneseq
    %v1442 = vshrl.u32 %v1441, 7
    %v1443 = vsub.s32 0, %v1442
    %v1444 = vrot.slane %v1412, %v1443
    %v1447 = vsel %vm152, %v1404, 0
    %v1450 = vsel %vm152, %v1405, 0
    %1452 = vmatprep.subr.mxu0 0.0
    %1453 = vmatpush1.msra.mxu0 0.0
    %1454 = vmatprep.subr.mxu0 0.0
    %1455 = vmatpush1.msra.mxu0 0.0
    %1456 = vmatprep.subr.mxu0 0.0
    %1457 = vmatpush1.msra.mxu0 0.0
    %1458 = vmatprep.subr.mxu0 0.0
    %1459 = vmatpush1.msra.mxu0 0.0
    %1460 = vmatprep.subr.mxu0 0.0
    %1461 = vmatpush1.msra.mxu0 0.0
    %1462 = vmatprep.subr.mxu0 0.0
    %1463 = vmatpush1.msra.mxu0 0.0
    %1464 = vmatprep.subr.mxu0 0.0
    %1465 = vmatpush1.msra.mxu0 0.0
    %1466 = vmatprep.subr.mxu0 0.0
    %1467 = vmatpush1.msra.mxu0 0.0
    %1468 = vmatprep.subr.mxu0 0.0
    %1469 = vmatpush1.msra.mxu0 0.0
    %1470 = vmatprep.subr.mxu0 0.0
    %1471 = vmatpush1.msra.mxu0 0.0
    %1472 = vmatprep.subr.mxu0 0.0
    %1473 = vmatpush1.msra.mxu0 0.0
    %1474 = vmatprep.subr.mxu0 0.0
    %1475 = vmatpush1.msra.mxu0 0.0
    %1476 = vmatprep.subr.mxu0 0.0
    %1477 = vmatpush1.msra.mxu0 %v1410
    %1478 = vmatprep.subr.mxu0 0.0
    %1479 = vmatpush1.msra.mxu0 %v1409
    %1480 = vmatprep.subr.mxu0 0.0
    %1481 = vmatpush1.msra.mxu0 %v1408
    %1482 = vmatprep.subr.mxu0 0.0
    %1483 = vmatpush1.msra.mxu0 %v1407
    %1484 = vmatprep.subr.mxu0 0.0
    %1485 = vmatpush2.msra.mxu0 0.0
    %1486 = vmatprep.subr.mxu0 0.0
    %1487 = vmatpush2.msra.mxu0 0.0
    %1488 = vmatprep.subr.mxu0 0.0
    %1489 = vmatpush2.msra.mxu0 0.0
    %1490 = vmatprep.subr.mxu0 0.0
    %1491 = vmatpush2.msra.mxu0 0.0
    %1492 = vmatprep.subr.mxu0 0.0
    %1493 = vmatpush2.msra.mxu0 0.0
    %1494 = vmatprep.subr.mxu0 0.0
    %1495 = vmatpush2.msra.mxu0 0.0
    %1496 = vmatprep.subr.mxu0 0.0
    %1497 = vmatpush2.msra.mxu0 0.0
    %1498 = vmatprep.subr.mxu0 0.0
    %1499 = vmatpush2.msra.mxu0 0.0
    %1500 = vmatprep.subr.mxu0 0.0
    %1501 = vmatpush2.msra.mxu0 0.0
    %1502 = vmatprep.subr.mxu0 0.0
    %1503 = vmatpush2.msra.mxu0 0.0
    %1504 = vmatprep.subr.mxu0 0.0
    %1505 = vmatpush2.msra.mxu0 0.0
    %1506 = vmatprep.subr.mxu0 0.0
    %1507 = vmatpush2.msra.mxu0 0.0
    %1508 = vmatprep.subr.mxu0 0.0
    %1509 = vmatpush2.msra.mxu0 0.0
    %1510 = vmatprep.subr.mxu0 0.0
    %1511 = vmatpush2.msra.mxu0 0.0
    %1512 = vmatprep.subr.mxu0 0.0
    %1513 = vmatpush2.msra.mxu0 0.0
    %1514 = vmatprep.subr.mxu0 0.0
    %1515 = vmatpush2.msra.mxu0 0.0
    %1516 = vmatprep.mubr.f32.mxu0 0.0
    %1517 = vmatmul.mubr.f32.gmra.mxu0 %v1447
    %v1518 = vpop.f32.mrf.mxu0
    %v1519 = vadd.f32 %v1444, %v1518
    %v1520 = vpop.f32.mrf.mxu0
    %1521 = vmatprep.mubr.f32.mxu0 0.0
    %1522 = vmatmul.mubr.f32.gmra.mxu0 %v1450
    %v1523 = vpop.f32.mrf.mxu0
    %v1524 = vadd.f32 %v1444, %v1523
    %v1525 = vpop.f32.mrf.mxu0
    %1526 = vdwg.mxu0
    %1529 = vrot.lane.b32.xlu0 %v1519, 120
    %v1530 = vpop.permute.xlu0 %1529
    %1531 = vrot.lane.b32.xlu0 %v1524, 120
    %v1532 = vpop.permute.xlu0 %1531
    %1533 = vrot.lane.b32.xlu0 %v1519, 112
    %v1534 = vpop.permute.xlu0 %1533
    %1535 = vrot.lane.b32.xlu0 %v1524, 112
    %v1536 = vpop.permute.xlu0 %1535
    %1537 = vrot.lane.b32.xlu0 %v1519, 104
    %v1538 = vpop.permute.xlu0 %1537
    %1539 = vrot.lane.b32.xlu0 %v1524, 104
    %v1540 = vpop.permute.xlu0 %1539
    %1541 = vrot.lane.b32.xlu0 %v1519, 96
    %v1542 = vpop.permute.xlu0 %1541
    %1543 = vrot.lane.b32.xlu0 %v1524, 96
    %v1544 = vpop.permute.xlu0 %1543
    %v1545 = vsel %vm252, %v1519, 0
    %v1547 = vsel %vm252, %v1524, 0
    %v1549 = vsel %vm252, %v1542, 0
    %v1551 = vsel %vm252, %v1544, 0
    %1553 = vmatprep.subr.mxu0 0.0
    %1554 = vmatpush1.xpose.msra.mxu0 0.0
    %1555 = vmatprep.subr.mxu0 0.0
    %1556 = vmatpush1.xpose.msra.mxu0 0.0
    %1557 = vmatprep.subr.mxu0 0.0
    %1558 = vmatpush1.xpose.msra.mxu0 0.0
    %1559 = vmatprep.subr.mxu0 0.0
    %1560 = vmatpush1.xpose.msra.mxu0 0.0
    %1561 = vmatprep.subr.mxu0 0.0
    %1562 = vmatpush1.xpose.msra.mxu0 0.0
    %1563 = vmatprep.subr.mxu0 0.0
    %1564 = vmatpush1.xpose.msra.mxu0 0.0
    %1565 = vmatprep.subr.mxu0 0.0
    %1566 = vmatpush1.xpose.msra.mxu0 0.0
    %1567 = vmatprep.subr.mxu0 0.0
    %1568 = vmatpush1.xpose.msra.mxu0 0.0
    %1569 = vmatprep.subr.mxu0 0.0
    %1570 = vmatpush1.xpose.msra.mxu0 0.0
    %1571 = vmatprep.subr.mxu0 0.0
    %1572 = vmatpush1.xpose.msra.mxu0 0.0
    %1573 = vmatprep.subr.mxu0 0.0
    %1574 = vmatpush1.xpose.msra.mxu0 0.0
    %1575 = vmatprep.subr.mxu0 0.0
    %1576 = vmatpush1.xpose.msra.mxu0 0.0
    %1577 = vmatprep.subr.mxu0 0.0
    %1578 = vmatpush1.xpose.msra.mxu0 0.0
    %1579 = vmatprep.subr.mxu0 0.0
    %1580 = vmatpush1.xpose.msra.mxu0 0.0
    %1581 = vmatprep.subr.mxu0 0.0
    %1582 = vmatpush1.xpose.msra.mxu0 %v1551
    %1583 = vmatprep.subr.mxu0 0.0
    %1584 = vmatpush1.xpose.msra.mxu0 %v1549
    %1585 = vmatprep.subr.mxu0 0.0
    %1586 = vmatpush2.xpose.msra.mxu0 0.0
    %1587 = vmatprep.subr.mxu0 0.0
    %1588 = vmatpush2.xpose.msra.mxu0 0.0
    %1589 = vmatprep.subr.mxu0 0.0
    %1590 = vmatpush2.xpose.msra.mxu0 0.0
    %1591 = vmatprep.subr.mxu0 0.0
    %1592 = vmatpush2.xpose.msra.mxu0 0.0
    %1593 = vmatprep.subr.mxu0 0.0
    %1594 = vmatpush2.xpose.msra.mxu0 0.0
    %1595 = vmatprep.subr.mxu0 0.0
    %1596 = vmatpush2.xpose.msra.mxu0 0.0
    %1597 = vmatprep.subr.mxu0 0.0
    %1598 = vmatpush2.xpose.msra.mxu0 0.0
    %1599 = vmatprep.subr.mxu0 0.0
    %1600 = vmatpush2.xpose.msra.mxu0 0.0
    %1601 = vmatprep.subr.mxu0 0.0
    %1602 = vmatpush2.xpose.msra.mxu0 0.0
    %1603 = vmatprep.subr.mxu0 0.0
    %1604 = vmatpush2.xpose.msra.mxu0 0.0
    %1605 = vmatprep.subr.mxu0 0.0
    %1606 = vmatpush2.xpose.msra.mxu0 0.0
    %1607 = vmatprep.subr.mxu0 0.0
    %1608 = vmatpush2.xpose.msra.mxu0 0.0
    %1609 = vmatprep.subr.mxu0 0.0
    %1610 = vmatpush2.xpose.msra.mxu0 0.0
    %1611 = vmatprep.subr.mxu0 0.0
    %1612 = vmatpush2.xpose.msra.mxu0 0.0
    %1613 = vmatprep.subr.mxu0 0.0
    %1614 = vmatpush2.xpose.msra.mxu0 0.0
    %1615 = vmatprep.subr.mxu0 0.0
    %1616 = vmatpush2.xpose.msra.mxu0 0.0
    %1617 = vmatprep.mubr.f32.mxu0 0.0
    %1618 = vmatmul.mubr.f32.gmra.mxu0 %v1545
    %v1619 = vpop.f32.mrf.mxu0
    %v1620 = vadd.f32 %v116, %v1619
    %v1621 = vpop.f32.mrf.mxu0
    %1622 = vmatprep.mubr.f32.mxu0 0.0
    %1623 = vmatmul.mubr.f32.gmra.mxu0 %v1547
    %v1624 = vpop.f32.mrf.mxu0
    %v1625 = vadd.f32 %v117, %v1624
    %v1626 = vpop.f32.mrf.mxu0
    %1627 = vdwg.mxu0
    %1628 = vrot.lane.b32.xlu0 %v1530, 96
    %v1629 = vpop.permute.xlu0 %1628
    %1630 = vrot.lane.b32.xlu0 %v1532, 96
    %v1631 = vpop.permute.xlu0 %1630
    %v1632 = vsel %vm252, %v1530, 0
    %v1634 = vsel %vm252, %v1532, 0
    %v1636 = vsel %vm252, %v1629, 0
    %v1638 = vsel %vm252, %v1631, 0
    %1640 = vmatprep.subr.mxu0 0.0
    %1641 = vmatpush1.xpose.msra.mxu0 0.0
    %1642 = vmatprep.subr.mxu0 0.0
    %1643 = vmatpush1.xpose.msra.mxu0 0.0
    %1644 = vmatprep.subr.mxu0 0.0
    %1645 = vmatpush1.xpose.msra.mxu0 0.0
    %1646 = vmatprep.subr.mxu0 0.0
    %1647 = vmatpush1.xpose.msra.mxu0 0.0
    %1648 = vmatprep.subr.mxu0 0.0
    %1649 = vmatpush1.xpose.msra.mxu0 0.0
    %1650 = vmatprep.subr.mxu0 0.0
    %1651 = vmatpush1.xpose.msra.mxu0 0.0
    %1652 = vmatprep.subr.mxu0 0.0
    %1653 = vmatpush1.xpose.msra.mxu0 0.0
    %1654 = vmatprep.subr.mxu0 0.0
    %1655 = vmatpush1.xpose.msra.mxu0 0.0
    %1656 = vmatprep.subr.mxu0 0.0
    %1657 = vmatpush1.xpose.msra.mxu0 0.0
    %1658 = vmatprep.subr.mxu0 0.0
    %1659 = vmatpush1.xpose.msra.mxu0 0.0
    %1660 = vmatprep.subr.mxu0 0.0
    %1661 = vmatpush1.xpose.msra.mxu0 0.0
    %1662 = vmatprep.subr.mxu0 0.0
    %1663 = vmatpush1.xpose.msra.mxu0 0.0
    %1664 = vmatprep.subr.mxu0 0.0
    %1665 = vmatpush1.xpose.msra.mxu0 0.0
    %1666 = vmatprep.subr.mxu0 0.0
    %1667 = vmatpush1.xpose.msra.mxu0 0.0
    %1668 = vmatprep.subr.mxu0 0.0
    %1669 = vmatpush1.xpose.msra.mxu0 %v1638
    %1670 = vmatprep.subr.mxu0 0.0
    %1671 = vmatpush1.xpose.msra.mxu0 %v1636
    %1672 = vmatprep.subr.mxu0 0.0
    %1673 = vmatpush2.xpose.msra.mxu0 0.0
    %1674 = vmatprep.subr.mxu0 0.0
    %1675 = vmatpush2.xpose.msra.mxu0 0.0
    %1676 = vmatprep.subr.mxu0 0.0
    %1677 = vmatpush2.xpose.msra.mxu0 0.0
    %1678 = vmatprep.subr.mxu0 0.0
    %1679 = vmatpush2.xpose.msra.mxu0 0.0
    %1680 = vmatprep.subr.mxu0 0.0
    %1681 = vmatpush2.xpose.msra.mxu0 0.0
    %1682 = vmatprep.subr.mxu0 0.0
    %1683 = vmatpush2.xpose.msra.mxu0 0.0
    %1684 = vmatprep.subr.mxu0 0.0
    %1685 = vmatpush2.xpose.msra.mxu0 0.0
    %1686 = vmatprep.subr.mxu0 0.0
    %1687 = vmatpush2.xpose.msra.mxu0 0.0
    %1688 = vmatprep.subr.mxu0 0.0
    %1689 = vmatpush2.xpose.msra.mxu0 0.0
    %1690 = vmatprep.subr.mxu0 0.0
    %1691 = vmatpush2.xpose.msra.mxu0 0.0
    %1692 = vmatprep.subr.mxu0 0.0
    %1693 = vmatpush2.xpose.msra.mxu0 0.0
    %1694 = vmatprep.subr.mxu0 0.0
    %1695 = vmatpush2.xpose.msra.mxu0 0.0
    %1696 = vmatprep.subr.mxu0 0.0
    %1697 = vmatpush2.xpose.msra.mxu0 0.0
    %1698 = vmatprep.subr.mxu0 0.0
    %1699 = vmatpush2.xpose.msra.mxu0 0.0
    %1700 = vmatprep.subr.mxu0 0.0
    %1701 = vmatpush2.xpose.msra.mxu0 0.0
    %1702 = vmatprep.subr.mxu0 0.0
    %1703 = vmatpush2.xpose.msra.mxu0 0.0
    %1704 = vmatprep.mubr.f32.mxu0 0.0
    %1705 = vmatmul.mubr.f32.gmra.mxu0 %v1632
    %v1706 = vpop.f32.mrf.mxu0
    %v1707 = vadd.f32 %v116, %v1706
    %v1708 = vpop.f32.mrf.mxu0
    %1709 = vmatprep.mubr.f32.mxu0 0.0
    %1710 = vmatmul.mubr.f32.gmra.mxu0 %v1634
    %v1711 = vpop.f32.mrf.mxu0
    %v1712 = vadd.f32 %v117, %v1711
    %v1713 = vpop.f32.mrf.mxu0
    %1714 = vdwg.mxu0
    %1715 = vrot.lane.b32.xlu0 %v1534, 96
    %v1716 = vpop.permute.xlu0 %1715
    %1717 = vrot.lane.b32.xlu0 %v1536, 96
    %v1718 = vpop.permute.xlu0 %1717
    %v1719 = vsel %vm252, %v1534, 0
    %v1721 = vsel %vm252, %v1536, 0
    %v1723 = vsel %vm252, %v1716, 0
    %v1725 = vsel %vm252, %v1718, 0
    %1727 = vmatprep.subr.mxu0 0.0
    %1728 = vmatpush1.xpose.msra.mxu0 0.0
    %1729 = vmatprep.subr.mxu0 0.0
    %1730 = vmatpush1.xpose.msra.mxu0 0.0
    %1731 = vmatprep.subr.mxu0 0.0
    %1732 = vmatpush1.xpose.msra.mxu0 0.0
    %1733 = vmatprep.subr.mxu0 0.0
    %1734 = vmatpush1.xpose.msra.mxu0 0.0
    %1735 = vmatprep.subr.mxu0 0.0
    %1736 = vmatpush1.xpose.msra.mxu0 0.0
    %1737 = vmatprep.subr.mxu0 0.0
    %1738 = vmatpush1.xpose.msra.mxu0 0.0
    %1739 = vmatprep.subr.mxu0 0.0
    %1740 = vmatpush1.xpose.msra.mxu0 0.0
    %1741 = vmatprep.subr.mxu0 0.0
    %1742 = vmatpush1.xpose.msra.mxu0 0.0
    %1743 = vmatprep.subr.mxu0 0.0
    %1744 = vmatpush1.xpose.msra.mxu0 0.0
    %1745 = vmatprep.subr.mxu0 0.0
    %1746 = vmatpush1.xpose.msra.mxu0 0.0
    %1747 = vmatprep.subr.mxu0 0.0
    %1748 = vmatpush1.xpose.msra.mxu0 0.0
    %1749 = vmatprep.subr.mxu0 0.0
    %1750 = vmatpush1.xpose.msra.mxu0 0.0
    %1751 = vmatprep.subr.mxu0 0.0
    %1752 = vmatpush1.xpose.msra.mxu0 0.0
    %1753 = vmatprep.subr.mxu0 0.0
    %1754 = vmatpush1.xpose.msra.mxu0 0.0
    %1755 = vmatprep.subr.mxu0 0.0
    %1756 = vmatpush1.xpose.msra.mxu0 %v1725
    %1757 = vmatprep.subr.mxu0 0.0
    %1758 = vmatpush1.xpose.msra.mxu0 %v1723
    %1759 = vmatprep.subr.mxu0 0.0
    %1760 = vmatpush2.xpose.msra.mxu0 0.0
    %1761 = vmatprep.subr.mxu0 0.0
    %1762 = vmatpush2.xpose.msra.mxu0 0.0
    %1763 = vmatprep.subr.mxu0 0.0
    %1764 = vmatpush2.xpose.msra.mxu0 0.0
    %1765 = vmatprep.subr.mxu0 0.0
    %1766 = vmatpush2.xpose.msra.mxu0 0.0
    %1767 = vmatprep.subr.mxu0 0.0
    %1768 = vmatpush2.xpose.msra.mxu0 0.0
    %1769 = vmatprep.subr.mxu0 0.0
    %1770 = vmatpush2.xpose.msra.mxu0 0.0
    %1771 = vmatprep.subr.mxu0 0.0
    %1772 = vmatpush2.xpose.msra.mxu0 0.0
    %1773 = vmatprep.subr.mxu0 0.0
    %1774 = vmatpush2.xpose.msra.mxu0 0.0
    %1775 = vmatprep.subr.mxu0 0.0
    %1776 = vmatpush2.xpose.msra.mxu0 0.0
    %1777 = vmatprep.subr.mxu0 0.0
    %1778 = vmatpush2.xpose.msra.mxu0 0.0
    %1779 = vmatprep.subr.mxu0 0.0
    %1780 = vmatpush2.xpose.msra.mxu0 0.0
    %1781 = vmatprep.subr.mxu0 0.0
    %1782 = vmatpush2.xpose.msra.mxu0 0.0
    %1783 = vmatprep.subr.mxu0 0.0
    %1784 = vmatpush2.xpose.msra.mxu0 0.0
    %1785 = vmatprep.subr.mxu0 0.0
    %1786 = vmatpush2.xpose.msra.mxu0 0.0
    %1787 = vmatprep.subr.mxu0 0.0
    %1788 = vmatpush2.xpose.msra.mxu0 0.0
    %1789 = vmatprep.subr.mxu0 0.0
    %1790 = vmatpush2.xpose.msra.mxu0 0.0
    %1791 = vmatprep.mubr.f32.mxu0 0.0
    %1792 = vmatmul.mubr.f32.gmra.mxu0 %v1719
    %v1793 = vpop.f32.mrf.mxu0
    %v1794 = vadd.f32 %v116, %v1793
    %v1795 = vpop.f32.mrf.mxu0
    %1796 = vmatprep.mubr.f32.mxu0 0.0
    %1797 = vmatmul.mubr.f32.gmra.mxu0 %v1721
    %v1798 = vpop.f32.mrf.mxu0
    %v1799 = vadd.f32 %v117, %v1798
    %v1800 = vpop.f32.mrf.mxu0
    %1801 = vdwg.mxu0
    %1802 = vrot.lane.b32.xlu0 %v1538, 96
    %v1803 = vpop.permute.xlu0 %1802
    %1804 = vrot.lane.b32.xlu0 %v1540, 96
    %v1805 = vpop.permute.xlu0 %1804
    %v1806 = vsel %vm252, %v1538, 0
    %v1808 = vsel %vm252, %v1540, 0
    %v1810 = vsel %vm252, %v1803, 0
    %v1812 = vsel %vm252, %v1805, 0
    %1814 = vmatprep.subr.mxu0 0.0
    %1815 = vmatpush1.xpose.msra.mxu0 0.0
    %1816 = vmatprep.subr.mxu0 0.0
    %1817 = vmatpush1.xpose.msra.mxu0 0.0
    %1818 = vmatprep.subr.mxu0 0.0
    %1819 = vmatpush1.xpose.msra.mxu0 0.0
    %1820 = vmatprep.subr.mxu0 0.0
    %1821 = vmatpush1.xpose.msra.mxu0 0.0
    %1822 = vmatprep.subr.mxu0 0.0
    %1823 = vmatpush1.xpose.msra.mxu0 0.0
    %1824 = vmatprep.subr.mxu0 0.0
    %1825 = vmatpush1.xpose.msra.mxu0 0.0
    %1826 = vmatprep.subr.mxu0 0.0
    %1827 = vmatpush1.xpose.msra.mxu0 0.0
    %1828 = vmatprep.subr.mxu0 0.0
    %1829 = vmatpush1.xpose.msra.mxu0 0.0
    %1830 = vmatprep.subr.mxu0 0.0
    %1831 = vmatpush1.xpose.msra.mxu0 0.0
    %1832 = vmatprep.subr.mxu0 0.0
    %1833 = vmatpush1.xpose.msra.mxu0 0.0
    %1834 = vmatprep.subr.mxu0 0.0
    %1835 = vmatpush1.xpose.msra.mxu0 0.0
    %1836 = vmatprep.subr.mxu0 0.0
    %1837 = vmatpush1.xpose.msra.mxu0 0.0
    %1838 = vmatprep.subr.mxu0 0.0
    %1839 = vmatpush1.xpose.msra.mxu0 0.0
    %1840 = vmatprep.subr.mxu0 0.0
    %1841 = vmatpush1.xpose.msra.mxu0 0.0
    %1842 = vmatprep.subr.mxu0 0.0
    %1843 = vmatpush1.xpose.msra.mxu0 %v1812
    %1844 = vmatprep.subr.mxu0 0.0
    %1845 = vmatpush1.xpose.msra.mxu0 %v1810
    %1846 = vmatprep.subr.mxu0 0.0
    %1847 = vmatpush2.xpose.msra.mxu0 0.0
    %1848 = vmatprep.subr.mxu0 0.0
    %1849 = vmatpush2.xpose.msra.mxu0 0.0
    %1850 = vmatprep.subr.mxu0 0.0
    %1851 = vmatpush2.xpose.msra.mxu0 0.0
    %1852 = vmatprep.subr.mxu0 0.0
    %1853 = vmatpush2.xpose.msra.mxu0 0.0
    %1854 = vmatprep.subr.mxu0 0.0
    %1855 = vmatpush2.xpose.msra.mxu0 0.0
    %1856 = vmatprep.subr.mxu0 0.0
    %1857 = vmatpush2.xpose.msra.mxu0 0.0
    %1858 = vmatprep.subr.mxu0 0.0
    %1859 = vmatpush2.xpose.msra.mxu0 0.0
    %1860 = vmatprep.subr.mxu0 0.0
    %1861 = vmatpush2.xpose.msra.mxu0 0.0
    %1862 = vmatprep.subr.mxu0 0.0
    %1863 = vmatpush2.xpose.msra.mxu0 0.0
    %1864 = vmatprep.subr.mxu0 0.0
    %1865 = vmatpush2.xpose.msra.mxu0 0.0
    %1866 = vmatprep.subr.mxu0 0.0
    %1867 = vmatpush2.xpose.msra.mxu0 0.0
    %1868 = vmatprep.subr.mxu0 0.0
    %1869 = vmatpush2.xpose.msra.mxu0 0.0
    %1870 = vmatprep.subr.mxu0 0.0
    %1871 = vmatpush2.xpose.msra.mxu0 0.0
    %1872 = vmatprep.subr.mxu0 0.0
    %1873 = vmatpush2.xpose.msra.mxu0 0.0
    %1874 = vmatprep.subr.mxu0 0.0
    %1875 = vmatpush2.xpose.msra.mxu0 0.0
    %1876 = vmatprep.subr.mxu0 0.0
    %1877 = vmatpush2.xpose.msra.mxu0 0.0
    %1878 = vmatprep.mubr.f32.mxu0 0.0
    %1879 = vmatmul.mubr.f32.gmra.mxu0 %v1806
    %v1880 = vpop.f32.mrf.mxu0
    %v1881 = vadd.f32 %v116, %v1880
    %v1882 = vpop.f32.mrf.mxu0
    %1883 = vmatprep.mubr.f32.mxu0 0.0
    %1884 = vmatmul.mubr.f32.gmra.mxu0 %v1808
    %v1885 = vpop.f32.mrf.mxu0
    %v1886 = vadd.f32 %v117, %v1885
    %v1887 = vpop.f32.mrf.mxu0
    %1888 = vdwg.mxu0
    %v1889 = vsel %vm597, %v1620, -inf
    %1890 = vmax.xlane.f32.xlu0 %v1889
    %v1891 = vpop.xlane.xlu0 %1890
    %v1892 = vsel %vm597, %v1625, -inf
    %1893 = vmax.xlane.f32.xlu0 %v1892
    %v1894 = vpop.xlane.xlu0 %1893
    %v1895 = vsel %vm597, %v1707, -inf
    %1896 = vmax.xlane.f32.xlu0 %v1895
    %v1897 = vpop.xlane.xlu0 %1896
    %v1898 = vsel %vm597, %v1712, -inf
    %1899 = vmax.xlane.f32.xlu0 %v1898
    %v1900 = vpop.xlane.xlu0 %1899
    %v1901 = vsel %vm597, %v1794, -inf
    %1902 = vmax.xlane.f32.xlu0 %v1901
    %v1903 = vpop.xlane.xlu0 %1902
    %v1904 = vsel %vm597, %v1799, -inf
    %1905 = vmax.xlane.f32.xlu0 %v1904
    %v1906 = vpop.xlane.xlu0 %1905
    %v1907 = vsel %vm597, %v1881, -inf
    %1908 = vmax.xlane.f32.xlu0 %v1907
    %v1909 = vpop.xlane.xlu0 %1908
    %v1910 = vsel %vm597, %v1886, -inf
    %1911 = vmax.xlane.f32.xlu0 %v1910
    %v1912 = vpop.xlane.xlu0 %1911
    %v1913 = vsub.f32 %v1620, %v1891
    %v1914 = vsub.f32 %v1625, %v1894
    %v1915 = vsub.f32 %v1707, %v1897
    %v1916 = vsub.f32 %v1712, %v1900
    %v1917 = vsub.f32 %v1794, %v1903
    %v1918 = vsub.f32 %v1799, %v1906
    %v1919 = vsub.f32 %v1881, %v1909
    %v1920 = vsub.f32 %v1886, %v1912
    %v1921 = vmul.f32 %v1913, 1.442695
    %v1922 = vpow.pop %v1921
    %v1923 = vmul.f32 %v1914, 1.442695
    %v1924 = vpow.pop %v1923
    %v1925 = vmul.f32 %v1915, 1.442695
    %v1926 = vpow.pop %v1925
    %v1927 = vmul.f32 %v1916, 1.442695
    %v1928 = vpow.pop %v1927
    %v1929 = vmul.f32 %v1917, 1.442695
    %v1930 = vpow.pop %v1929
    %v1931 = vmul.f32 %v1918, 1.442695
    %v1932 = vpow.pop %v1931
    %v1933 = vmul.f32 %v1919, 1.442695
    %v1934 = vpow.pop %v1933
    %v1935 = vmul.f32 %v1920, 1.442695
    %v1936 = vpow.pop %v1935
    %v1937 = vsel %vm597, %v1922, 0.0
    %1938 = vadd.xlane.f32.xlu0 %v1937
    %v1939 = vpop.xlane.xlu0 %1938
    %v1940 = vsel %vm597, %v1924, 0.0
    %1941 = vadd.xlane.f32.xlu0 %v1940
    %v1942 = vpop.xlane.xlu0 %1941
    %v1943 = vsel %vm597, %v1926, 0.0
    %1944 = vadd.xlane.f32.xlu0 %v1943
    %v1945 = vpop.xlane.xlu0 %1944
    %v1946 = vsel %vm597, %v1928, 0.0
    %1947 = vadd.xlane.f32.xlu0 %v1946
    %v1948 = vpop.xlane.xlu0 %1947
    %v1949 = vsel %vm597, %v1930, 0.0
    %1950 = vadd.xlane.f32.xlu0 %v1949
    %v1951 = vpop.xlane.xlu0 %1950
    %v1952 = vsel %vm597, %v1932, 0.0
    %1953 = vadd.xlane.f32.xlu0 %v1952
    %v1954 = vpop.xlane.xlu0 %1953
    %v1955 = vsel %vm597, %v1934, 0.0
    %1956 = vadd.xlane.f32.xlu0 %v1955
    %v1957 = vpop.xlane.xlu0 %1956
    %v1958 = vsel %vm597, %v1936, 0.0
    %1959 = vadd.xlane.f32.xlu0 %v1958
    %v1960 = vpop.xlane.xlu0 %1959
    %v1961 = vrcp.pop %v1939
    %v1962 = vrcp.pop %v1942
    %v1963 = vrcp.pop %v1945
    %v1964 = vrcp.pop %v1948
    %v1965 = vrcp.pop %v1951
    %v1966 = vrcp.pop %v1954
    %v1967 = vrcp.pop %v1957
    %v1968 = vrcp.pop %v1960
    %v1969 = vmul.f32 %v1922, %v1961
    %v1970 = vmul.f32 %v1924, %v1962
    %v1971 = vmul.f32 %v1926, %v1963
    %v1972 = vmul.f32 %v1928, %v1964
    %v1973 = vmul.f32 %v1930, %v1965
    %v1974 = vmul.f32 %v1932, %v1966
    %v1975 = vmul.f32 %v1934, %v1967
    %v1976 = vmul.f32 %v1936, %v1968
    %1977 = vrot.lane.b32.xlu0 %v1519, 64
    %v1978 = vpop.permute.xlu0 %1977
    %1979 = vrot.lane.b32.xlu0 %v1524, 64
    %v1980 = vpop.permute.xlu0 %1979
    %v1984 = vsel %vm597, %v1969, 0
    %v1987 = vsel %vm597, %v1970, 0
    %1989 = vmatprep.subr.mxu0 0.0
    %1990 = vmatpush1.msra.mxu0 0.0
    %1991 = vmatprep.subr.mxu0 0.0
    %1992 = vmatpush1.msra.mxu0 0.0
    %1993 = vmatprep.subr.mxu0 0.0
    %1994 = vmatpush1.msra.mxu0 0.0
    %1995 = vmatprep.subr.mxu0 0.0
    %1996 = vmatpush1.msra.mxu0 0.0
    %1997 = vmatprep.subr.mxu0 0.0
    %1998 = vmatpush1.msra.mxu0 0.0
    %1999 = vmatprep.subr.mxu0 0.0
    %2000 = vmatpush1.msra.mxu0 0.0
    %2001 = vmatprep.subr.mxu0 0.0
    %2002 = vmatpush1.msra.mxu0 0.0
    %2003 = vmatprep.subr.mxu0 0.0
    %2004 = vmatpush1.msra.mxu0 0.0
    %2005 = vmatprep.subr.mxu0 0.0
    %2006 = vmatpush1.msra.mxu0 0.0
    %2007 = vmatprep.subr.mxu0 0.0
    %2008 = vmatpush1.msra.mxu0 0.0
    %2009 = vmatprep.subr.mxu0 0.0
    %2010 = vmatpush1.msra.mxu0 0.0
    %2011 = vmatprep.subr.mxu0 0.0
    %2012 = vmatpush1.msra.mxu0 0.0
    %2013 = vmatprep.subr.mxu0 0.0
    %2014 = vmatpush1.msra.mxu0 0.0
    %2015 = vmatprep.subr.mxu0 0.0
    %2016 = vmatpush1.msra.mxu0 0.0
    %2017 = vmatprep.subr.mxu0 0.0
    %2018 = vmatpush1.msra.mxu0 %v1980
    %2019 = vmatprep.subr.mxu0 0.0
    %2020 = vmatpush1.msra.mxu0 %v1978
    %2021 = vmatprep.subr.mxu0 0.0
    %2022 = vmatpush2.msra.mxu0 0.0
    %2023 = vmatprep.subr.mxu0 0.0
    %2024 = vmatpush2.msra.mxu0 0.0
    %2025 = vmatprep.subr.mxu0 0.0
    %2026 = vmatpush2.msra.mxu0 0.0
    %2027 = vmatprep.subr.mxu0 0.0
    %2028 = vmatpush2.msra.mxu0 0.0
    %2029 = vmatprep.subr.mxu0 0.0
    %2030 = vmatpush2.msra.mxu0 0.0
    %2031 = vmatprep.subr.mxu0 0.0
    %2032 = vmatpush2.msra.mxu0 0.0
    %2033 = vmatprep.subr.mxu0 0.0
    %2034 = vmatpush2.msra.mxu0 0.0
    %2035 = vmatprep.subr.mxu0 0.0
    %2036 = vmatpush2.msra.mxu0 0.0
    %2037 = vmatprep.subr.mxu0 0.0
    %2038 = vmatpush2.msra.mxu0 0.0
    %2039 = vmatprep.subr.mxu0 0.0
    %2040 = vmatpush2.msra.mxu0 0.0
    %2041 = vmatprep.subr.mxu0 0.0
    %2042 = vmatpush2.msra.mxu0 0.0
    %2043 = vmatprep.subr.mxu0 0.0
    %2044 = vmatpush2.msra.mxu0 0.0
    %2045 = vmatprep.subr.mxu0 0.0
    %2046 = vmatpush2.msra.mxu0 0.0
    %2047 = vmatprep.subr.mxu0 0.0
    %2048 = vmatpush2.msra.mxu0 0.0
    %2049 = vmatprep.subr.mxu0 0.0
    %2050 = vmatpush2.msra.mxu0 0.0
    %2051 = vmatprep.subr.mxu0 0.0
    %2052 = vmatpush2.msra.mxu0 0.0
    %2053 = vmatprep.mubr.f32.mxu0 0.0
    %2054 = vmatmul.mubr.f32.gmra.mxu0 %v1984
    %v2055 = vpop.f32.mrf.mxu0
    %v2056 = vadd.f32 0.0, %v2055
    %v2057 = vpop.f32.mrf.mxu0
    %2058 = vmatprep.mubr.f32.mxu0 0.0
    %2059 = vmatmul.mubr.f32.gmra.mxu0 %v1987
    %v2060 = vpop.f32.mrf.mxu0
    %v2061 = vadd.f32 0.0, %v2060
    %v2062 = vpop.f32.mrf.mxu0
    %2063 = vdwg.mxu0
    %2064 = vrot.lane.b32.xlu0 %v1530, 64
    %v2065 = vpop.permute.xlu0 %2064
    %2066 = vrot.lane.b32.xlu0 %v1532, 64
    %v2067 = vpop.permute.xlu0 %2066
    %v2071 = vsel %vm597, %v1971, 0
    %v2074 = vsel %vm597, %v1972, 0
    %2076 = vmatprep.subr.mxu0 0.0
    %2077 = vmatpush1.msra.mxu0 0.0
    %2078 = vmatprep.subr.mxu0 0.0
    %2079 = vmatpush1.msra.mxu0 0.0
    %2080 = vmatprep.subr.mxu0 0.0
    %2081 = vmatpush1.msra.mxu0 0.0
    %2082 = vmatprep.subr.mxu0 0.0
    %2083 = vmatpush1.msra.mxu0 0.0
    %2084 = vmatprep.subr.mxu0 0.0
    %2085 = vmatpush1.msra.mxu0 0.0
    %2086 = vmatprep.subr.mxu0 0.0
    %2087 = vmatpush1.msra.mxu0 0.0
    %2088 = vmatprep.subr.mxu0 0.0
    %2089 = vmatpush1.msra.mxu0 0.0
    %2090 = vmatprep.subr.mxu0 0.0
    %2091 = vmatpush1.msra.mxu0 0.0
    %2092 = vmatprep.subr.mxu0 0.0
    %2093 = vmatpush1.msra.mxu0 0.0
    %2094 = vmatprep.subr.mxu0 0.0
    %2095 = vmatpush1.msra.mxu0 0.0
    %2096 = vmatprep.subr.mxu0 0.0
    %2097 = vmatpush1.msra.mxu0 0.0
    %2098 = vmatprep.subr.mxu0 0.0
    %2099 = vmatpush1.msra.mxu0 0.0
    %2100 = vmatprep.subr.mxu0 0.0
    %2101 = vmatpush1.msra.mxu0 0.0
    %2102 = vmatprep.subr.mxu0 0.0
    %2103 = vmatpush1.msra.mxu0 0.0
    %2104 = vmatprep.subr.mxu0 0.0
    %2105 = vmatpush1.msra.mxu0 %v2067
    %2106 = vmatprep.subr.mxu0 0.0
    %2107 = vmatpush1.msra.mxu0 %v2065
    %2108 = vmatprep.subr.mxu0 0.0
    %2109 = vmatpush2.msra.mxu0 0.0
    %2110 = vmatprep.subr.mxu0 0.0
    %2111 = vmatpush2.msra.mxu0 0.0
    %2112 = vmatprep.subr.mxu0 0.0
    %2113 = vmatpush2.msra.mxu0 0.0
    %2114 = vmatprep.subr.mxu0 0.0
    %2115 = vmatpush2.msra.mxu0 0.0
    %2116 = vmatprep.subr.mxu0 0.0
    %2117 = vmatpush2.msra.mxu0 0.0
    %2118 = vmatprep.subr.mxu0 0.0
    %2119 = vmatpush2.msra.mxu0 0.0
    %2120 = vmatprep.subr.mxu0 0.0
    %2121 = vmatpush2.msra.mxu0 0.0
    %2122 = vmatprep.subr.mxu0 0.0
    %2123 = vmatpush2.msra.mxu0 0.0
    %2124 = vmatprep.subr.mxu0 0.0
    %2125 = vmatpush2.msra.mxu0 0.0
    %2126 = vmatprep.subr.mxu0 0.0
    %2127 = vmatpush2.msra.mxu0 0.0
    %2128 = vmatprep.subr.mxu0 0.0
    %2129 = vmatpush2.msra.mxu0 0.0
    %2130 = vmatprep.subr.mxu0 0.0
    %2131 = vmatpush2.msra.mxu0 0.0
    %2132 = vmatprep.subr.mxu0 0.0
    %2133 = vmatpush2.msra.mxu0 0.0
    %2134 = vmatprep.subr.mxu0 0.0
    %2135 = vmatpush2.msra.mxu0 0.0
    %2136 = vmatprep.subr.mxu0 0.0
    %2137 = vmatpush2.msra.mxu0 0.0
    %2138 = vmatprep.subr.mxu0 0.0
    %2139 = vmatpush2.msra.mxu0 0.0
    %2140 = vmatprep.mubr.f32.mxu0 0.0
    %2141 = vmatmul.mubr.f32.gmra.mxu0 %v2071
    %v2142 = vpop.f32.mrf.mxu0
    %v2143 = vadd.f32 0.0, %v2142
    %v2144 = vpop.f32.mrf.mxu0
    %2145 = vmatprep.mubr.f32.mxu0 0.0
    %2146 = vmatmul.mubr.f32.gmra.mxu0 %v2074
    %v2147 = vpop.f32.mrf.mxu0
    %v2148 = vadd.f32 0.0, %v2147
    %v2149 = vpop.f32.mrf.mxu0
    %2150 = vdwg.mxu0
    %2151 = vrot.lane.b32.xlu0 %v1534, 64
    %v2152 = vpop.permute.xlu0 %2151
    %2153 = vrot.lane.b32.xlu0 %v1536, 64
    %v2154 = vpop.permute.xlu0 %2153
    %v2158 = vsel %vm597, %v1973, 0
    %v2161 = vsel %vm597, %v1974, 0
    %2163 = vmatprep.subr.mxu0 0.0
    %2164 = vmatpush1.msra.mxu0 0.0
    %2165 = vmatprep.subr.mxu0 0.0
    %2166 = vmatpush1.msra.mxu0 0.0
    %2167 = vmatprep.subr.mxu0 0.0
    %2168 = vmatpush1.msra.mxu0 0.0
    %2169 = vmatprep.subr.mxu0 0.0
    %2170 = vmatpush1.msra.mxu0 0.0
    %2171 = vmatprep.subr.mxu0 0.0
    %2172 = vmatpush1.msra.mxu0 0.0
    %2173 = vmatprep.subr.mxu0 0.0
    %2174 = vmatpush1.msra.mxu0 0.0
    %2175 = vmatprep.subr.mxu0 0.0
    %2176 = vmatpush1.msra.mxu0 0.0
    %2177 = vmatprep.subr.mxu0 0.0
    %2178 = vmatpush1.msra.mxu0 0.0
    %2179 = vmatprep.subr.mxu0 0.0
    %2180 = vmatpush1.msra.mxu0 0.0
    %2181 = vmatprep.subr.mxu0 0.0
    %2182 = vmatpush1.msra.mxu0 0.0
    %2183 = vmatprep.subr.mxu0 0.0
    %2184 = vmatpush1.msra.mxu0 0.0
    %2185 = vmatprep.subr.mxu0 0.0
    %2186 = vmatpush1.msra.mxu0 0.0
    %2187 = vmatprep.subr.mxu0 0.0
    %2188 = vmatpush1.msra.mxu0 0.0
    %2189 = vmatprep.subr.mxu0 0.0
    %2190 = vmatpush1.msra.mxu0 0.0
    %2191 = vmatprep.subr.mxu0 0.0
    %2192 = vmatpush1.msra.mxu0 %v2154
    %2193 = vmatprep.subr.mxu0 0.0
    %2194 = vmatpush1.msra.mxu0 %v2152
    %2195 = vmatprep.subr.mxu0 0.0
    %2196 = vmatpush2.msra.mxu0 0.0
    %2197 = vmatprep.subr.mxu0 0.0
    %2198 = vmatpush2.msra.mxu0 0.0
    %2199 = vmatprep.subr.mxu0 0.0
    %2200 = vmatpush2.msra.mxu0 0.0
    %2201 = vmatprep.subr.mxu0 0.0
    %2202 = vmatpush2.msra.mxu0 0.0
    %2203 = vmatprep.subr.mxu0 0.0
    %2204 = vmatpush2.msra.mxu0 0.0
    %2205 = vmatprep.subr.mxu0 0.0
    %2206 = vmatpush2.msra.mxu0 0.0
    %2207 = vmatprep.subr.mxu0 0.0
    %2208 = vmatpush2.msra.mxu0 0.0
    %2209 = vmatprep.subr.mxu0 0.0
    %2210 = vmatpush2.msra.mxu0 0.0
    %2211 = vmatprep.subr.mxu0 0.0
    %2212 = vmatpush2.msra.mxu0 0.0
    %2213 = vmatprep.subr.mxu0 0.0
    %2214 = vmatpush2.msra.mxu0 0.0
    %2215 = vmatprep.subr.mxu0 0.0
    %2216 = vmatpush2.msra.mxu0 0.0
    %2217 = vmatprep.subr.mxu0 0.0
    %2218 = vmatpush2.msra.mxu0 0.0
    %2219 = vmatprep.subr.mxu0 0.0
    %2220 = vmatpush2.msra.mxu0 0.0
    %2221 = vmatprep.subr.mxu0 0.0
    %2222 = vmatpush2.msra.mxu0 0.0
    %2223 = vmatprep.subr.mxu0 0.0
    %2224 = vmatpush2.msra.mxu0 0.0
    %2225 = vmatprep.subr.mxu0 0.0
    %2226 = vmatpush2.msra.mxu0 0.0
    %2227 = vmatprep.mubr.f32.mxu0 0.0
    %2228 = vmatmul.mubr.f32.gmra.mxu0 %v2158
    %v2229 = vpop.f32.mrf.mxu0
    %v2230 = vadd.f32 0.0, %v2229
    %v2231 = vpop.f32.mrf.mxu0
    %2232 = vmatprep.mubr.f32.mxu0 0.0
    %2233 = vmatmul.mubr.f32.gmra.mxu0 %v2161
    %v2234 = vpop.f32.mrf.mxu0
    %v2235 = vadd.f32 0.0, %v2234
    %v2236 = vpop.f32.mrf.mxu0
    %2237 = vdwg.mxu0
    %2238 = vrot.lane.b32.xlu0 %v1538, 64
    %v2239 = vpop.permute.xlu0 %2238
    %2240 = vrot.lane.b32.xlu0 %v1540, 64
    %v2241 = vpop.permute.xlu0 %2240
    %v2245 = vsel %vm597, %v1975, 0
    %v2248 = vsel %vm597, %v1976, 0
    %2250 = vmatprep.subr.mxu0 0.0
    %2251 = vmatpush1.msra.mxu0 0.0
    %2252 = vmatprep.subr.mxu0 0.0
    %2253 = vmatpush1.msra.mxu0 0.0
    %2254 = vmatprep.subr.mxu0 0.0
    %2255 = vmatpush1.msra.mxu0 0.0
    %2256 = vmatprep.subr.mxu0 0.0
    %2257 = vmatpush1.msra.mxu0 0.0
    %2258 = vmatprep.subr.mxu0 0.0
    %2259 = vmatpush1.msra.mxu0 0.0
    %2260 = vmatprep.subr.mxu0 0.0
    %2261 = vmatpush1.msra.mxu0 0.0
    %2262 = vmatprep.subr.mxu0 0.0
    %2263 = vmatpush1.msra.mxu0 0.0
    %2264 = vmatprep.subr.mxu0 0.0
    %2265 = vmatpush1.msra.mxu0 0.0
    %2266 = vmatprep.subr.mxu0 0.0
    %2267 = vmatpush1.msra.mxu0 0.0
    %2268 = vmatprep.subr.mxu0 0.0
    %2269 = vmatpush1.msra.mxu0 0.0
    %2270 = vmatprep.subr.mxu0 0.0
    %2271 = vmatpush1.msra.mxu0 0.0
    %2272 = vmatprep.subr.mxu0 0.0
    %2273 = vmatpush1.msra.mxu0 0.0
    %2274 = vmatprep.subr.mxu0 0.0
    %2275 = vmatpush1.msra.mxu0 0.0
    %2276 = vmatprep.subr.mxu0 0.0
    %2277 = vmatpush1.msra.mxu0 0.0
    %2278 = vmatprep.subr.mxu0 0.0
    %2279 = vmatpush1.msra.mxu0 %v2241
    %2280 = vmatprep.subr.mxu0 0.0
    %2281 = vmatpush1.msra.mxu0 %v2239
    %2282 = vmatprep.subr.mxu0 0.0
    %2283 = vmatpush2.msra.mxu0 0.0
    %2284 = vmatprep.subr.mxu0 0.0
    %2285 = vmatpush2.msra.mxu0 0.0
    %2286 = vmatprep.subr.mxu0 0.0
    %2287 = vmatpush2.msra.mxu0 0.0
    %2288 = vmatprep.subr.mxu0 0.0
    %2289 = vmatpush2.msra.mxu0 0.0
    %2290 = vmatprep.subr.mxu0 0.0
    %2291 = vmatpush2.msra.mxu0 0.0
    %2292 = vmatprep.subr.mxu0 0.0
    %2293 = vmatpush2.msra.mxu0 0.0
    %2294 = vmatprep.subr.mxu0 0.0
    %2295 = vmatpush2.msra.mxu0 0.0
    %2296 = vmatprep.subr.mxu0 0.0
    %2297 = vmatpush2.msra.mxu0 0.0
    %2298 = vmatprep.subr.mxu0 0.0
    %2299 = vmatpush2.msra.mxu0 0.0
    %2300 = vmatprep.subr.mxu0 0.0
    %2301 = vmatpush2.msra.mxu0 0.0
    %2302 = vmatprep.subr.mxu0 0.0
    %2303 = vmatpush2.msra.mxu0 0.0
    %2304 = vmatprep.subr.mxu0 0.0
    %2305 = vmatpush2.msra.mxu0 0.0
    %2306 = vmatprep.subr.mxu0 0.0
    %2307 = vmatpush2.msra.mxu0 0.0
    %2308 = vmatprep.subr.mxu0 0.0
    %2309 = vmatpush2.msra.mxu0 0.0
    %2310 = vmatprep.subr.mxu0 0.0
    %2311 = vmatpush2.msra.mxu0 0.0
    %2312 = vmatprep.subr.mxu0 0.0
    %2313 = vmatpush2.msra.mxu0 0.0
    %2314 = vmatprep.mubr.f32.mxu0 0.0
    %2315 = vmatmul.mubr.f32.gmra.mxu0 %v2245
    %v2316 = vpop.f32.mrf.mxu0
    %v2317 = vadd.f32 0.0, %v2316
    %v2318 = vpop.f32.mrf.mxu0
    %2319 = vmatprep.mubr.f32.mxu0 0.0
    %2320 = vmatmul.mubr.f32.gmra.mxu0 %v2248
    %v2321 = vpop.f32.mrf.mxu0
    %v2322 = vadd.f32 0.0, %v2321
    %v2323 = vpop.f32.mrf.mxu0
    %2324 = vdwg.mxu0
    %2327 = vrot.lane.b32.xlu0 %v2143, 8
    %v2328 = vpop.permute.xlu0 %2327
    %2329 = vrot.lane.b32.xlu0 %v2148, 8
    %v2330 = vpop.permute.xlu0 %2329
    %2335 = vrot.lane.b32.xlu0 %v2230, 16
    %v2336 = vpop.permute.xlu0 %2335
    %2337 = vrot.lane.b32.xlu0 %v2235, 16
    %v2338 = vpop.permute.xlu0 %2337
    %2343 = vrot.lane.b32.xlu0 %v2317, 24
    %v2344 = vpop.permute.xlu0 %2343
    %2345 = vrot.lane.b32.xlu0 %v2322, 24
    %v2346 = vpop.permute.xlu0 %2345
    %v2349 = vsel %vm252, %v2056, %v2328
    %v2350 = vsel %vm252, %v2061, %v2330
    %v2351 = vsel %vm597, %v2349, %v2336
    %v2352 = vsel %vm597, %v2350, %v2338
    %v2353 = vsel %vm1062, %v2351, %v2344
    %v2354 = vsel %vm1062, %v2352, %v2346
    %v2355 = vlaneseq
    %v2356 = vshrl.u32 %v2355, 7
    %v2357 = vsub.s32 0, %v2356
    %v2358 = vrot.slane %v1434, %v2357
    %v2360 = vsel %vm152, %v2353, 0
    %v2363 = vsel %vm152, %v2354, 0
    %2365 = vmatprep.subr.mxu0 0.0
    %2366 = vmatpush1.msra.mxu0 0.0
    %2367 = vmatprep.subr.mxu0 0.0
    %2368 = vmatpush1.msra.mxu0 0.0
    %2369 = vmatprep.subr.mxu0 0.0
    %2370 = vmatpush1.msra.mxu0 0.0
    %2371 = vmatprep.subr.mxu0 0.0
    %2372 = vmatpush1.msra.mxu0 0.0
    %2373 = vmatprep.subr.mxu0 0.0
    %2374 = vmatpush1.msra.mxu0 0.0
    %2375 = vmatprep.subr.mxu0 0.0
    %2376 = vmatpush1.msra.mxu0 0.0
    %2377 = vmatprep.subr.mxu0 0.0
    %2378 = vmatpush1.msra.mxu0 0.0
    %2379 = vmatprep.subr.mxu0 0.0
    %2380 = vmatpush1.msra.mxu0 0.0
    %2381 = vmatprep.subr.mxu0 0.0
    %2382 = vmatpush1.msra.mxu0 0.0
    %2383 = vmatprep.subr.mxu0 0.0
    %2384 = vmatpush1.msra.mxu0 0.0
    %2385 = vmatprep.subr.mxu0 0.0
    %2386 = vmatpush1.msra.mxu0 0.0
    %2387 = vmatprep.subr.mxu0 0.0
    %2388 = vmatpush1.msra.mxu0 0.0
    %2389 = vmatprep.subr.mxu0 0.0
    %2390 = vmatpush1.msra.mxu0 %v1417
    %2391 = vmatprep.subr.mxu0 0.0
    %2392 = vmatpush1.msra.mxu0 %v1416
    %2393 = vmatprep.subr.mxu0 0.0
    %2394 = vmatpush1.msra.mxu0 %v1415
    %2395 = vmatprep.subr.mxu0 0.0
    %2396 = vmatpush1.msra.mxu0 %v1414
    %2397 = vmatprep.subr.mxu0 0.0
    %2398 = vmatpush2.msra.mxu0 0.0
    %2399 = vmatprep.subr.mxu0 0.0
    %2400 = vmatpush2.msra.mxu0 0.0
    %2401 = vmatprep.subr.mxu0 0.0
    %2402 = vmatpush2.msra.mxu0 0.0
    %2403 = vmatprep.subr.mxu0 0.0
    %2404 = vmatpush2.msra.mxu0 0.0
    %2405 = vmatprep.subr.mxu0 0.0
    %2406 = vmatpush2.msra.mxu0 0.0
    %2407 = vmatprep.subr.mxu0 0.0
    %2408 = vmatpush2.msra.mxu0 0.0
    %2409 = vmatprep.subr.mxu0 0.0
    %2410 = vmatpush2.msra.mxu0 0.0
    %2411 = vmatprep.subr.mxu0 0.0
    %2412 = vmatpush2.msra.mxu0 0.0
    %2413 = vmatprep.subr.mxu0 0.0
    %2414 = vmatpush2.msra.mxu0 0.0
    %2415 = vmatprep.subr.mxu0 0.0
    %2416 = vmatpush2.msra.mxu0 0.0
    %2417 = vmatprep.subr.mxu0 0.0
    %2418 = vmatpush2.msra.mxu0 0.0
    %2419 = vmatprep.subr.mxu0 0.0
    %2420 = vmatpush2.msra.mxu0 0.0
    %2421 = vmatprep.subr.mxu0 0.0
    %2422 = vmatpush2.msra.mxu0 0.0
    %2423 = vmatprep.subr.mxu0 0.0
    %2424 = vmatpush2.msra.mxu0 0.0
    %2425 = vmatprep.subr.mxu0 0.0
    %2426 = vmatpush2.msra.mxu0 0.0
    %2427 = vmatprep.subr.mxu0 0.0
    %2428 = vmatpush2.msra.mxu0 0.0
    %2429 = vmatprep.mubr.f32.mxu0 0.0
    %2430 = vmatmul.mubr.f32.gmra.mxu0 %v2360
    %v2431 = vpop.f32.mrf.mxu0
    %v2432 = vadd.f32 %v2358, %v2431
    %v2433 = vpop.f32.mrf.mxu0
    %2434 = vmatprep.mubr.f32.mxu0 0.0
    %2435 = vmatmul.mubr.f32.gmra.mxu0 %v2363
    %v2436 = vpop.f32.mrf.mxu0
    %v2437 = vadd.f32 %v2358, %v2436
    %v2438 = vpop.f32.mrf.mxu0
    %2439 = vdwg.mxu0
    %v2440 = vadd.f32 %v1404, %v2432
    %v2441 = vadd.f32 %v1405, %v2437
    %v2442 = vsel %vm152, %v2440, 0.0
    %2443 = vadd.xlane.f32.xlu0 %v2442
    %v2444 = vpop.xlane.xlu0 %2443
    %v2445 = vsel %vm152, %v2441, 0.0
    %2446 = vadd.xlane.f32.xlu0 %v2445
    %v2447 = vpop.xlane.xlu0 %2446
    %v2448 = vmul.f32 %v2444, %v1158
    %v2449 = vmul.f32 %v2447, %v1158
    %v2450 = vsub.f32 %v2440, %v2448
    %v2451 = vsub.f32 %v2441, %v2449
    %v2452 = vmul.f32 %v2450, %v2450
    %v2453 = vmul.f32 %v2451, %v2451
    %v2454 = vsel %vm152, %v2452, 0.0
    %2455 = vadd.xlane.f32.xlu0 %v2454
    %v2456 = vpop.xlane.xlu0 %2455
    %v2457 = vsel %vm152, %v2453, 0.0
    %2458 = vadd.xlane.f32.xlu0 %v2457
    %v2459 = vpop.xlane.xlu0 %2458
    %v2460 = vmul.f32 %v2456, %v1158
    %v2461 = vmul.f32 %v2459, %v1158
    %v2462 = vadd.f32 %v2460, 1e-05
    %v2463 = vadd.f32 %v2461, 1e-05
    %v2464 = vrsqrt.pop %v2462
    %v2465 = vrsqrt.pop %v2463
    %v2466 = vmul.f32 %v2450, %v2464
    %v2467 = vmul.f32 %v2451, %v2465
    %v2468 = vlaneseq
    %v2469 = vshrl.u32 %v2468, 7
    %v2470 = vsub.s32 0, %v2469
    %v2471 = vrot.slane %v1436, %v2470
    %v2472 = vmul.f32 %v2466, %v2471
    %v2473 = vmul.f32 %v2467, %v2471
    %v2474 = vlaneseq
    %v2475 = vshrl.u32 %v2474, 7
    %v2476 = vsub.s32 0, %v2475
    %v2477 = vrot.slane %v1437, %v2476
    %v2478 = vadd.f32 %v2472, %v2477
    %v2479 = vadd.f32 %v2473, %v2477
    %v2481 = vlaneseq
    %v2482 = vshrl.u32 %v2481, 7
    %v2483 = vsub.s32 0, %v2482
    %v2484 = vrot.slane %v1424, %v2483
    %v2487 = vsel %vm152, %v2478, 0
    %v2490 = vsel %vm152, %v2479, 0
    %2492 = vmatprep.subr.mxu0 0.0
    %2493 = vmatpush1.msra.mxu0 0.0
    %2494 = vmatprep.subr.mxu0 0.0
    %2495 = vmatpush1.msra.mxu0 0.0
    %2496 = vmatprep.subr.mxu0 0.0
    %2497 = vmatpush1.msra.mxu0 0.0
    %2498 = vmatprep.subr.mxu0 0.0
    %2499 = vmatpush1.msra.mxu0 0.0
    %2500 = vmatprep.subr.mxu0 0.0
    %2501 = vmatpush1.msra.mxu0 0.0
    %2502 = vmatprep.subr.mxu0 0.0
    %2503 = vmatpush1.msra.mxu0 0.0
    %2504 = vmatprep.subr.mxu0 0.0
    %2505 = vmatpush1.msra.mxu0 0.0
    %2506 = vmatprep.subr.mxu0 0.0
    %2507 = vmatpush1.msra.mxu0 0.0
    %2508 = vmatprep.subr.mxu0 0.0
    %2509 = vmatpush1.msra.mxu0 0.0
    %2510 = vmatprep.subr.mxu0 0.0
    %2511 = vmatpush1.msra.mxu0 0.0
    %2512 = vmatprep.subr.mxu0 0.0
    %2513 = vmatpush1.msra.mxu0 0.0
    %2514 = vmatprep.subr.mxu0 0.0
    %2515 = vmatpush1.msra.mxu0 0.0
    %2516 = vmatprep.subr.mxu0 0.0
    %2517 = vmatpush1.msra.mxu0 %v1422
    %2518 = vmatprep.subr.mxu0 0.0
    %2519 = vmatpush1.msra.mxu0 %v1421
    %2520 = vmatprep.subr.mxu0 0.0
    %2521 = vmatpush1.msra.mxu0 %v1420
    %2522 = vmatprep.subr.mxu0 0.0
    %2523 = vmatpush1.msra.mxu0 %v1419
    %2524 = vmatprep.subr.mxu0 0.0
    %2525 = vmatpush2.msra.mxu0 0.0
    %2526 = vmatprep.subr.mxu0 0.0
    %2527 = vmatpush2.msra.mxu0 0.0
    %2528 = vmatprep.subr.mxu0 0.0
    %2529 = vmatpush2.msra.mxu0 0.0
    %2530 = vmatprep.subr.mxu0 0.0
    %2531 = vmatpush2.msra.mxu0 0.0
    %2532 = vmatprep.subr.mxu0 0.0
    %2533 = vmatpush2.msra.mxu0 0.0
    %2534 = vmatprep.subr.mxu0 0.0
    %2535 = vmatpush2.msra.mxu0 0.0
    %2536 = vmatprep.subr.mxu0 0.0
    %2537 = vmatpush2.msra.mxu0 0.0
    %2538 = vmatprep.subr.mxu0 0.0
    %2539 = vmatpush2.msra.mxu0 0.0
    %2540 = vmatprep.subr.mxu0 0.0
    %2541 = vmatpush2.msra.mxu0 0.0
    %2542 = vmatprep.subr.mxu0 0.0
    %2543 = vmatpush2.msra.mxu0 0.0
    %2544 = vmatprep.subr.mxu0 0.0
    %2545 = vmatpush2.msra.mxu0 0.0
    %2546 = vmatprep.subr.mxu0 0.0
    %2547 = vmatpush2.msra.mxu0 0.0
    %2548 = vmatprep.subr.mxu0 0.0
    %2549 = vmatpush2.msra.mxu0 0.0
    %2550 = vmatprep.subr.mxu0 0.0
    %2551 = vmatpush2.msra.mxu0 0.0
    %2552 = vmatprep.subr.mxu0 0.0
    %2553 = vmatpush2.msra.mxu0 0.0
    %2554 = vmatprep.subr.mxu0 0.0
    %2555 = vmatpush2.msra.mxu0 0.0
    %2556 = vmatprep.mubr.f32.mxu0 0.0
    %2557 = vmatmul.mubr.f32.gmra.mxu0 %v2487
    %v2558 = vpop.f32.mrf.mxu0
    %v2559 = vadd.f32 %v2484, %v2558
    %v2560 = vpop.f32.mrf.mxu0
    %2561 = vmatprep.mubr.f32.mxu0 0.0
    %2562 = vmatmul.mubr.f32.gmra.mxu0 %v2490
    %v2563 = vpop.f32.mrf.mxu0
    %v2564 = vadd.f32 %v2484, %v2563
    %v2565 = vpop.f32.mrf.mxu0
    %2566 = vdwg.mxu0
    %v2567 = vmax.f32 %v2559, 0.0
    %v2568 = vmax.f32 %v2564, 0.0
    %v2569 = vlaneseq
    %v2570 = vshrl.u32 %v2569, 7
    %v2571 = vsub.s32 0, %v2570
    %v2572 = vrot.slane %v1435, %v2571
    %v2574 = vsel %vm1284, %v2567, 0
    %v2577 = vsel %vm1284, %v2568, 0
    %2579 = vmatprep.subr.mxu0 0.0
    %2580 = vmatpush1.msra.mxu0 0.0
    %2581 = vmatprep.subr.mxu0 0.0
    %2582 = vmatpush1.msra.mxu0 0.0
    %2583 = vmatprep.subr.mxu0 0.0
    %2584 = vmatpush1.msra.mxu0 0.0
    %2585 = vmatprep.subr.mxu0 0.0
    %2586 = vmatpush1.msra.mxu0 0.0
    %2587 = vmatprep.subr.mxu0 0.0
    %2588 = vmatpush1.msra.mxu0 0.0
    %2589 = vmatprep.subr.mxu0 0.0
    %2590 = vmatpush1.msra.mxu0 0.0
    %2591 = vmatprep.subr.mxu0 0.0
    %2592 = vmatpush1.msra.mxu0 0.0
    %2593 = vmatprep.subr.mxu0 0.0
    %2594 = vmatpush1.msra.mxu0 0.0
    %2595 = vmatprep.subr.mxu0 0.0
    %2596 = vmatpush1.msra.mxu0 %v1433
    %2597 = vmatprep.subr.mxu0 0.0
    %2598 = vmatpush1.msra.mxu0 %v1432
    %2599 = vmatprep.subr.mxu0 0.0
    %2600 = vmatpush1.msra.mxu0 %v1431
    %2601 = vmatprep.subr.mxu0 0.0
    %2602 = vmatpush1.msra.mxu0 %v1430
    %2603 = vmatprep.subr.mxu0 0.0
    %2604 = vmatpush1.msra.mxu0 %v1429
    %2605 = vmatprep.subr.mxu0 0.0
    %2606 = vmatpush1.msra.mxu0 %v1428
    %2607 = vmatprep.subr.mxu0 0.0
    %2608 = vmatpush1.msra.mxu0 %v1427
    %2609 = vmatprep.subr.mxu0 0.0
    %2610 = vmatpush1.msra.mxu0 %v1426
    %2611 = vmatprep.subr.mxu0 0.0
    %2612 = vmatpush2.msra.mxu0 0.0
    %2613 = vmatprep.subr.mxu0 0.0
    %2614 = vmatpush2.msra.mxu0 0.0
    %2615 = vmatprep.subr.mxu0 0.0
    %2616 = vmatpush2.msra.mxu0 0.0
    %2617 = vmatprep.subr.mxu0 0.0
    %2618 = vmatpush2.msra.mxu0 0.0
    %2619 = vmatprep.subr.mxu0 0.0
    %2620 = vmatpush2.msra.mxu0 0.0
    %2621 = vmatprep.subr.mxu0 0.0
    %2622 = vmatpush2.msra.mxu0 0.0
    %2623 = vmatprep.subr.mxu0 0.0
    %2624 = vmatpush2.msra.mxu0 0.0
    %2625 = vmatprep.subr.mxu0 0.0
    %2626 = vmatpush2.msra.mxu0 0.0
    %2627 = vmatprep.subr.mxu0 0.0
    %2628 = vmatpush2.msra.mxu0 0.0
    %2629 = vmatprep.subr.mxu0 0.0
    %2630 = vmatpush2.msra.mxu0 0.0
    %2631 = vmatprep.subr.mxu0 0.0
    %2632 = vmatpush2.msra.mxu0 0.0
    %2633 = vmatprep.subr.mxu0 0.0
    %2634 = vmatpush2.msra.mxu0 0.0
    %2635 = vmatprep.subr.mxu0 0.0
    %2636 = vmatpush2.msra.mxu0 0.0
    %2637 = vmatprep.subr.mxu0 0.0
    %2638 = vmatpush2.msra.mxu0 0.0
    %2639 = vmatprep.subr.mxu0 0.0
    %2640 = vmatpush2.msra.mxu0 0.0
    %2641 = vmatprep.subr.mxu0 0.0
    %2642 = vmatpush2.msra.mxu0 0.0
    %2643 = vmatprep.mubr.f32.mxu0 0.0
    %2644 = vmatmul.mubr.f32.gmra.mxu0 %v2574
    %v2645 = vpop.f32.mrf.mxu0
    %v2646 = vadd.f32 %v2572, %v2645
    %v2647 = vpop.f32.mrf.mxu0
    %2648 = vmatprep.mubr.f32.mxu0 0.0
    %2649 = vmatmul.mubr.f32.gmra.mxu0 %v2577
    %v2650 = vpop.f32.mrf.mxu0
    %v2651 = vadd.f32 %v2572, %v2650
    %v2652 = vpop.f32.mrf.mxu0
    %2653 = vdwg.mxu0
    %v2654 = vadd.f32 %v2478, %v2646
    %v2655 = vadd.f32 %v2479, %v2651
    %v2656 = vsel %vm152, %v2654, 0.0
    %2657 = vadd.xlane.f32.xlu0 %v2656
    %v2658 = vpop.xlane.xlu0 %2657
    %v2659 = vsel %vm152, %v2655, 0.0
    %2660 = vadd.xlane.f32.xlu0 %v2659
    %v2661 = vpop.xlane.xlu0 %2660
    %v2662 = vmul.f32 %v2658, %v1158
    %v2663 = vmul.f32 %v2661, %v1158
    %v2664 = vsub.f32 %v2654, %v2662
    %v2665 = vsub.f32 %v2655, %v2663
    %v2666 = vmul.f32 %v2664, %v2664
    %v2667 = vmul.f32 %v2665, %v2665
    %v2668 = vsel %vm152, %v2666, 0.0
    %2669 = vadd.xlane.f32.xlu0 %v2668
    %v2670 = vpop.xlane.xlu0 %2669
    %v2671 = vsel %vm152, %v2667, 0.0
    %2672 = vadd.xlane.f32.xlu0 %v2671
    %v2673 = vpop.xlane.xlu0 %2672
    %v2674 = vmul.f32 %v2670, %v1158
    %v2675 = vmul.f32 %v2673, %v1158
    %v2676 = vadd.f32 %v2674, 1e-05
    %v2677 = vadd.f32 %v2675, 1e-05
    %v2678 = vrsqrt.pop %v2676
    %v2679 = vrsqrt.pop %v2677
    %v2680 = vmul.f32 %v2664, %v2678
    %v2681 = vmul.f32 %v2665, %v2679
    %v2682 = vlaneseq
    %v2683 = vshrl.u32 %v2682, 7
    %v2684 = vsub.s32 0, %v2683
    %v2685 = vrot.slane %v1438, %v2684
    %v2686 = vmul.f32 %v2680, %v2685
    %v2687 = vmul.f32 %v2681, %v2685
    %v2688 = vlaneseq
    %v2689 = vshrl.u32 %v2688, 7
    %v2690 = vsub.s32 0, %v2689
    %v2691 = vrot.slane %v1439, %v2690
    %v2692 = vadd.f32 %v2686, %v2691
    %v2693 = vadd.f32 %v2687, %v2691
    %v2694 = vld [vmem:[#allocation7 + $0xc] sm:$0x1]
    %v2695 = vld [vmem:[#allocation7 + $0xd] sm:$0x1]
    %v2696 = vsel %vm152, %v2692, 0.0
    %2697 = vadd.xlane.f32.xlu0 %v2696
    %v2698 = vpop.xlane.xlu0 %2697
    %v2699 = vsel %vm152, %v2693, 0.0
    %2700 = vadd.xlane.f32.xlu0 %v2699
    %v2701 = vpop.xlane.xlu0 %2700
    %v2702 = vmul.f32 %v2698, %v1158
    %v2703 = vmul.f32 %v2701, %v1158
    %v2704 = vsub.f32 %v2692, %v2702
    %v2705 = vsub.f32 %v2693, %v2703
    %v2706 = vmul.f32 %v2704, %v2704
    %v2707 = vmul.f32 %v2705, %v2705
    %v2708 = vsel %vm152, %v2706, 0.0
    %2709 = vadd.xlane.f32.xlu0 %v2708
    %v2710 = vpop.xlane.xlu0 %2709
    %v2711 = vsel %vm152, %v2707, 0.0
    %2712 = vadd.xlane.f32.xlu0 %v2711
    %v2713 = vpop.xlane.xlu0 %2712
    %v2714 = vmul.f32 %v2710, %v1158
    %v2715 = vmul.f32 %v2713, %v1158
    %v2716 = vadd.f32 %v2714, 1e-05
    %v2717 = vadd.f32 %v2715, 1e-05
    %v2718 = vrsqrt.pop %v2716
    %v2719 = vrsqrt.pop %v2717
    %v2720 = vmul.f32 %v2704, %v2718
    %v2721 = vmul.f32 %v2705, %v2719
    %v2722 = vlaneseq
    %v2723 = vshrl.u32 %v2722, 7
    %v2724 = vsub.s32 0, %v2723
    %v2725 = vrot.slane %v2694, %v2724
    %v2726 = vmul.f32 %v2720, %v2725
    %v2727 = vmul.f32 %v2721, %v2725
    %v2728 = vlaneseq
    %v2729 = vshrl.u32 %v2728, 7
    %v2730 = vsub.s32 0, %v2729
    %v2731 = vrot.slane %v2695, %v2730
    %v2732 = vadd.f32 %v2726, %v2731
    %v2733 = vadd.f32 %v2727, %v2731
    %2734 = vst.msk [vmem:[#allocation8] sm:$0xff] %vm152, %v2732
    %2735 = vst.msk [vmem:[#allocation8 + $0x8] sm:$0xff] %vm152, %v2733
    // Predicated region
    $region46: #{transformer_encoder.1} parent=1 // pred_check
      _
    $region47: #{transformer_encoder.1} parent=1 // pred_check_branch
      %2737 = sbr.rel (0) target = $region49
    $region48: #{transformer_encoder.1} parent=1 // pred_region
      %s2739 = ssub.s32 256, 256
      %2740 = vsyncadd [#allocation4], %s2739
      %s2741 = sshll.u32 [#allocation8], 4
      %s2742 = int_to_ptr.vmem [resolvable:$true] %s2741
      %2747 = dma.vmem_to_hbm [thread:$0]  %s2742, 256, %s8, [#allocation4], 128, 128, 8
    $region49: #{transformer_encoder.1} parent=1 // pred_fallthru
      _
    // Predicated region
    $region50: #{transformer_encoder.1} parent=1 // pred_check
      _
    $region51: #{transformer_encoder.1} parent=1 // pred_check_branch
      %2749 = sbr.rel (0) target = $region53
    $region52: #{transformer_encoder.1} parent=1 // pred_region
      %2750 = dma.done [#allocation4], 256
    $region53: #{transformer_encoder.1} parent=1 // pred_fallthru
      _
    %2751 = vsyncpa [#allocation3], 1
    %2752 = vsyncpa [#allocation6], 1
    %2753 = vsyncpa [#allocation4], 1

</llo_original>
